<compile_context>
chip_gen: v7x
topology: tpu7x:2x2x1
jax: 0.10.0
libtpu: 0.0.40
codegen_flags: <defaults>
</compile_context>

<pallas_src>
import jax
import jax.numpy as jnp
from jax.experimental import pallas as pl
from jax.experimental.pallas import tpu as pltpu

C_OUT = 16
H = W = 28
HIDDEN = 256
N_CLASSES = 10

PADW = W + 2               # 30 (1 col pad each side)
WIDE = H * PADW            # 840 flat conv positions per channel (cols 28/29 are garbage)
PADROWS = 32               # pad H to 32 rows so every shifted view stays in bounds
FLAT = PADROWS * PADW      # 960
OFFSETS = tuple(PADW * dy + dx for dy in range(3) for dx in range(3))  # 3x3 stencil offsets

CH_PER_STEP = 4            # conv channels (K tile = 4*840) per reduction step
N_SPLIT = 2                # HIDDEN column halves -> "parallel" grid axis (v7x megacore)
N_TILE = HIDDEN // N_SPLIT # 128


def fused_kernel(xf_ref, wc_ref, bc_ref, w1_ref, b1_ref, w2_ref, out_ref, h_acc):
    # grid: (j = HIDDEN half [parallel], k = channel group [arbitrary / reduction])
    k = pl.program_id(1)

    @pl.when(k == 0)
    def _():
        h_acc[...] = jnp.zeros_like(h_acc)

    xf = xf_ref[...]                                   # (B, 960) f32, resident across the grid
    B = xf.shape[0]

    # Hoisted: 9 shifted flat views, computed once and reused by all channels in this group.
    shifts = [xf[:, off:off + WIDE] for off in OFFSETS]  # 9 x (B, 840)

    for ch in range(CH_PER_STEP):
        c = k * CH_PER_STEP + ch
        acc = jnp.full((B, WIDE), bc_ref[0, c], dtype=jnp.float32)
        for i in range(9):                              # 3x3 conv as 9 VPU multiply-adds
            acc = acc + shifts[i] * wc_ref[c, i]
        a = jnp.maximum(acc, 0.0).astype(jnp.bfloat16)  # lane-dense (B, 840) activation
        # first Linear: accumulate this channel's contribution on the MXU (f32 accumulator)
        h_acc[...] += jnp.dot(a, w1_ref[ch], preferred_element_type=jnp.float32)

    @pl.when(k == pl.num_programs(1) - 1)
    def _():
        h = jnp.maximum(h_acc[...] + b1_ref[...], 0.0)          # bias + ReLU (this HIDDEN half)
        out_ref[...] = jnp.dot(h, w2_ref[...],                  # partial logits for this half
                               preferred_element_type=jnp.float32)


def neural_network_v2(x, wc, bc, w1, b1, w2, b2):
    """x: (B, 1, 28, 28) float32 (NCHW, like PyTorch).  w1: (12544, 256), w2: (256, 10)
    stored (K, N), i.e. transposed relative to nn.Linear's (N, K).  Returns (B, 10) logits."""
    B = x.shape[0]

    # ---- glue: input padding / flatten + one-time weight re-layout (pure JAX, outside kernel)
    xpad = jnp.pad(x[:, 0], ((0, 0), (1, PADROWS - H - 1), (1, 1)))   # (B, 32, 30)
    xf = xpad.reshape(B, FLAT).astype(jnp.float32)                    # (B, 960)

    wc9 = wc.reshape(C_OUT, 9).astype(jnp.float32)                    # 3x3 weights, scalar reads
    bc2 = bc.reshape(1, C_OUT).astype(jnp.float32)

    # W1 rows re-indexed from PyTorch-flatten order (c*784 + r*28 + s) to the kernel's wide
    # order (c*840 + r*30 + s); the 2 extra columns per row get zero weights.  Cast to bf16.
    w1_wide = jnp.pad(w1.reshape(C_OUT, H, W, HIDDEN),
                      ((0, 0), (0, 0), (0, PADW - W), (0, 0)))        # (16, 28, 30, 256)
    w1_wide = w1_wide.reshape(C_OUT, WIDE, HIDDEN).astype(jnp.bfloat16)

    b1r = b1.reshape(1, HIDDEN).astype(jnp.float32)
    w2f = w2.astype(jnp.float32)

    n_k = C_OUT // CH_PER_STEP                                        # 4 reduction steps

    partials = pl.pallas_call(
        fused_kernel,
        out_shape=jax.ShapeDtypeStruct((N_SPLIT, B, N_CLASSES), jnp.float32),
        grid=(N_SPLIT, n_k),
        in_specs=[
            pl.BlockSpec((B, FLAT), lambda j, k: (0, 0)),                      # padded input
            pl.BlockSpec((C_OUT, 9), lambda j, k: (0, 0),
                         memory_space=pltpu.MemorySpace.SMEM),                 # conv weights
            pl.BlockSpec((1, C_OUT), lambda j, k: (0, 0),
                         memory_space=pltpu.MemorySpace.SMEM),                 # conv bias
            pl.BlockSpec((CH_PER_STEP, WIDE, N_TILE), lambda j, k: (k, 0, j)), # W1 tile (bf16)
            pl.BlockSpec((1, N_TILE), lambda j, k: (0, j)),                    # b1 half
            pl.BlockSpec((N_TILE, N_CLASSES), lambda j, k: (j, 0)),            # W2 half
        ],
        out_specs=pl.BlockSpec((None, B, N_CLASSES), lambda j, k: (j, 0, 0)),  # partial logits
        scratch_shapes=[pltpu.VMEM((B, N_TILE), jnp.float32)],                 # h accumulator
        compiler_params=pltpu.CompilerParams(
            dimension_semantics=("parallel", "arbitrary")),
    )(xf, wc9, bc2, w1_wide, b1r, w2f)

    # combine the two HIDDEN halves' partial logits and add the final bias (tiny glue op)
    return partials[0] + partials[1] + b2.reshape(1, N_CLASSES)


if __name__ == "__main__":
    key = jax.random.PRNGKey(0)
    ks = jax.random.split(key, 7)
    B = 2
    x = jax.random.normal(ks[0], (B, 1, 28, 28), jnp.float32)
    wc = jax.random.normal(ks[1], (C_OUT, 1, 3, 3), jnp.float32) * 0.1
    bc = jax.random.normal(ks[2], (C_OUT,), jnp.float32) * 0.1
    w1 = jax.random.normal(ks[3], (C_OUT * H * W, HIDDEN), jnp.float32) * 0.02
    b1 = jax.random.normal(ks[4], (HIDDEN,), jnp.float32) * 0.02
    w2 = jax.random.normal(ks[5], (HIDDEN, N_CLASSES), jnp.float32) * 0.05
    b2 = jax.random.normal(ks[6], (N_CLASSES,), jnp.float32) * 0.05

    logits = jax.block_until_ready(neural_network_v2(x, wc, bc, w1, b1, w2, b2))

    # pure-JAX f32 reference (same semantics as the PyTorch module)
    ref_c = jax.lax.conv_general_dilated(
        x, wc, window_strides=(1, 1), padding="SAME",
        dimension_numbers=("NCHW", "OIHW", "NCHW")) + bc.reshape(1, C_OUT, 1, 1)
    ref_c = jnp.maximum(ref_c, 0.0)
    ref_h = jnp.maximum(ref_c.reshape(B, -1) @ w1 + b1, 0.0)
    ref = ref_h @ w2 + b2

    assert logits.shape == (B, N_CLASSES)
    # tolerance sized for the bf16 W1 stream (f32 accumulation); real layout bugs would be O(0.1+)
    assert jnp.allclose(logits, ref, atol=2e-2, rtol=2e-2), float(jnp.abs(logits - ref).max())
    print("KERNEL_OK")
</pallas_src>

<mosaic_0001>
module attributes {stable_mosaic.version = 11 : i64} {
  func.func @fused_kernel(%arg0: i32, %arg1: i32, %arg2: memref<2x960xf32, #tpu.memory_space<vmem>>, %arg3: memref<16x9xf32, #tpu.memory_space<smem>>, %arg4: memref<1x16xf32, #tpu.memory_space<smem>>, %arg5: memref<4x840x128xbf16, #tpu.memory_space<vmem>>, %arg6: memref<1x128xf32, #tpu.memory_space<vmem>>, %arg7: memref<128x10xf32, #tpu.memory_space<vmem>>, %arg8: memref<1x2x10xf32, #tpu.memory_space<vmem>>, %arg9: memref<2x128xf32, #tpu.memory_space<vmem>>) attributes {dimension_semantics = [#tpu.dimension_semantics<parallel>, #tpu.dimension_semantics<arbitrary>], iteration_bounds = array<i64: 2, 4>, scalar_prefetch = 0 : i64, scratch_operands = 1 : i64, tpu.core_type = #tpu.core_type<tc>, window_params = [{pipeline_mode = #tpu.pipeline_mode<synchronous>, transform_indices = @transform_0, window_bounds = array<i64: 2, 960>}, {transform_indices = @transform_1, window_bounds = array<i64: 16, 9>}, {transform_indices = @transform_2, window_bounds = array<i64: 1, 16>}, {transform_indices = @transform_3, window_bounds = array<i64: 4, 840, 128>}, {transform_indices = @transform_4, window_bounds = array<i64: 1, 128>}, {transform_indices = @transform_5, window_bounds = array<i64: 128, 10>}, {transform_indices = @transform_6, window_bounds = array<i64: 1, 2, 10>}]} {
    %c0_i32 = arith.constant 0 : i32
    %0 = arith.cmpi eq, %arg1, %c0_i32 : i32
    %1 = arith.extui %0 : i1 to i32
    %c0_i32_0 = arith.constant 0 : i32
    %2 = arith.cmpi ne, %1, %c0_i32_0 : i32
    scf.if %2 {
      %cst_75 = arith.constant 0.000000e+00 : f32
      %252 = vector.broadcast %cst_75 : f32 to vector<2x128xf32>
      %c0_76 = arith.constant 0 : index
      %c0_77 = arith.constant 0 : index
      %253 = vector.load %arg9[%c0_76, %c0_77] : memref<2x128xf32, #tpu.memory_space<vmem>>, vector<2x128xf32>
      tpu.vector_store %arg9[%c0_76, %c0_77], %252 {strides = array<i32>} : memref<2x128xf32, #tpu.memory_space<vmem>>, vector<2x128xf32>,
    } else {
    }
    %c0 = arith.constant 0 : index
    %c0_1 = arith.constant 0 : index
    %3 = vector.load %arg2[%c0, %c0_1] : memref<2x960xf32, #tpu.memory_space<vmem>>, vector<2x960xf32>
    %4 = vector.extract_strided_slice %3 {offsets = [0, 0], sizes = [2, 840], strides = [1, 1]} : vector<2x960xf32> to vector<2x840xf32>
    %5 = vector.extract_strided_slice %3 {offsets = [0, 1], sizes = [2, 840], strides = [1, 1]} : vector<2x960xf32> to vector<2x840xf32>
    %6 = vector.extract_strided_slice %3 {offsets = [0, 2], sizes = [2, 840], strides = [1, 1]} : vector<2x960xf32> to vector<2x840xf32>
    %7 = vector.extract_strided_slice %3 {offsets = [0, 30], sizes = [2, 840], strides = [1, 1]} : vector<2x960xf32> to vector<2x840xf32>
    %8 = vector.extract_strided_slice %3 {offsets = [0, 31], sizes = [2, 840], strides = [1, 1]} : vector<2x960xf32> to vector<2x840xf32>
    %9 = vector.extract_strided_slice %3 {offsets = [0, 32], sizes = [2, 840], strides = [1, 1]} : vector<2x960xf32> to vector<2x840xf32>
    %10 = vector.extract_strided_slice %3 {offsets = [0, 60], sizes = [2, 840], strides = [1, 1]} : vector<2x960xf32> to vector<2x840xf32>
    %11 = vector.extract_strided_slice %3 {offsets = [0, 61], sizes = [2, 840], strides = [1, 1]} : vector<2x960xf32> to vector<2x840xf32>
    %12 = vector.extract_strided_slice %3 {offsets = [0, 62], sizes = [2, 840], strides = [1, 1]} : vector<2x960xf32> to vector<2x840xf32>
    %c4_i32 = arith.constant 4 : i32
    %13 = arith.muli %arg1, %c4_i32 : i32
    %c0_i32_2 = arith.constant 0 : i32
    %14 = arith.addi %13, %c0_i32_2 : i32
    %c0_3 = arith.constant 0 : index
    %15 = arith.index_cast %14 : i32 to index
    %16 = memref.load %arg4[%c0_3, %15] : memref<1x16xf32, #tpu.memory_space<smem>>
    %17 = vector.broadcast %16 : f32 to vector<2x840xf32>
    %18 = arith.index_cast %14 : i32 to index
    %c0_4 = arith.constant 0 : index
    %19 = memref.load %arg3[%18, %c0_4] : memref<16x9xf32, #tpu.memory_space<smem>>
    %20 = vector.broadcast %19 : f32 to vector<2x840xf32>
    %21 = arith.mulf %4, %20 : vector<2x840xf32>
    %22 = arith.addf %17, %21 : vector<2x840xf32>
    %23 = arith.index_cast %14 : i32 to index
    %c1 = arith.constant 1 : index
    %24 = memref.load %arg3[%23, %c1] : memref<16x9xf32, #tpu.memory_space<smem>>
    %25 = vector.broadcast %24 : f32 to vector<2x840xf32>
    %26 = arith.mulf %5, %25 : vector<2x840xf32>
    %27 = arith.addf %22, %26 : vector<2x840xf32>
    %28 = arith.index_cast %14 : i32 to index
    %c2 = arith.constant 2 : index
    %29 = memref.load %arg3[%28, %c2] : memref<16x9xf32, #tpu.memory_space<smem>>
    %30 = vector.broadcast %29 : f32 to vector<2x840xf32>
    %31 = arith.mulf %6, %30 : vector<2x840xf32>
    %32 = arith.addf %27, %31 : vector<2x840xf32>
    %33 = arith.index_cast %14 : i32 to index
    %c3 = arith.constant 3 : index
    %34 = memref.load %arg3[%33, %c3] : memref<16x9xf32, #tpu.memory_space<smem>>
    %35 = vector.broadcast %34 : f32 to vector<2x840xf32>
    %36 = arith.mulf %7, %35 : vector<2x840xf32>
    %37 = arith.addf %32, %36 : vector<2x840xf32>
    %38 = arith.index_cast %14 : i32 to index
    %c4 = arith.constant 4 : index
    %39 = memref.load %arg3[%38, %c4] : memref<16x9xf32, #tpu.memory_space<smem>>
    %40 = vector.broadcast %39 : f32 to vector<2x840xf32>
    %41 = arith.mulf %8, %40 : vector<2x840xf32>
    %42 = arith.addf %37, %41 : vector<2x840xf32>
    %43 = arith.index_cast %14 : i32 to index
    %c5 = arith.constant 5 : index
    %44 = memref.load %arg3[%43, %c5] : memref<16x9xf32, #tpu.memory_space<smem>>
    %45 = vector.broadcast %44 : f32 to vector<2x840xf32>
    %46 = arith.mulf %9, %45 : vector<2x840xf32>
    %47 = arith.addf %42, %46 : vector<2x840xf32>
    %48 = arith.index_cast %14 : i32 to index
    %c6 = arith.constant 6 : index
    %49 = memref.load %arg3[%48, %c6] : memref<16x9xf32, #tpu.memory_space<smem>>
    %50 = vector.broadcast %49 : f32 to vector<2x840xf32>
    %51 = arith.mulf %10, %50 : vector<2x840xf32>
    %52 = arith.addf %47, %51 : vector<2x840xf32>
    %53 = arith.index_cast %14 : i32 to index
    %c7 = arith.constant 7 : index
    %54 = memref.load %arg3[%53, %c7] : memref<16x9xf32, #tpu.memory_space<smem>>
    %55 = vector.broadcast %54 : f32 to vector<2x840xf32>
    %56 = arith.mulf %11, %55 : vector<2x840xf32>
    %57 = arith.addf %52, %56 : vector<2x840xf32>
    %58 = arith.index_cast %14 : i32 to index
    %c8 = arith.constant 8 : index
    %59 = memref.load %arg3[%58, %c8] : memref<16x9xf32, #tpu.memory_space<smem>>
    %60 = vector.broadcast %59 : f32 to vector<2x840xf32>
    %61 = arith.mulf %12, %60 : vector<2x840xf32>
    %62 = arith.addf %57, %61 : vector<2x840xf32>
    %cst = arith.constant 0.000000e+00 : f32
    %63 = vector.broadcast %cst : f32 to vector<2x840xf32>
    %64 = arith.maximumf %62, %63 : vector<2x840xf32>
    %65 = arith.truncf %64 : vector<2x840xf32> to vector<2x840xbf16>
    %c0_5 = arith.constant 0 : index
    %c0_6 = arith.constant 0 : index
    %66 = vector.load %arg9[%c0_5, %c0_6] : memref<2x128xf32, #tpu.memory_space<vmem>>, vector<2x128xf32>
    %c0_7 = arith.constant 0 : index
    %c0_8 = arith.constant 0 : index
    %c0_9 = arith.constant 0 : index
    %67 = vector.load %arg5[%c0_7, %c0_8, %c0_9] : memref<4x840x128xbf16, #tpu.memory_space<vmem>>, vector<1x840x128xbf16>
    %68 = vector.shape_cast %67 : vector<1x840x128xbf16> to vector<840x128xbf16>
    %cst_10 = arith.constant dense<0.000000e+00> : vector<2x128xf32>
    %69 = tpu.matmul %65, %68, %cst_10 {dimension_numbers = #tpu.dot_dimension_numbers<[1], [0], [0], [1], [0, 0, 1, 1], [], []>} : vector<2x840xbf16>, vector<840x128xbf16>, vector<2x128xf32> -> vector<2x128xf32>
    %70 = arith.addf %66, %69 : vector<2x128xf32>
    %c0_11 = arith.constant 0 : index
    %c0_12 = arith.constant 0 : index
    %71 = vector.load %arg9[%c0_11, %c0_12] : memref<2x128xf32, #tpu.memory_space<vmem>>, vector<2x128xf32>
    tpu.vector_store %arg9[%c0_11, %c0_12], %70 {strides = array<i32>} : memref<2x128xf32, #tpu.memory_space<vmem>>, vector<2x128xf32>,
    %c4_i32_13 = arith.constant 4 : i32
    %72 = arith.muli %arg1, %c4_i32_13 : i32
    %c1_i32 = arith.constant 1 : i32
    %73 = arith.addi %72, %c1_i32 : i32
    %c0_14 = arith.constant 0 : index
    %74 = arith.index_cast %73 : i32 to index
    %75 = memref.load %arg4[%c0_14, %74] : memref<1x16xf32, #tpu.memory_space<smem>>
    %76 = vector.broadcast %75 : f32 to vector<2x840xf32>
    %77 = arith.index_cast %73 : i32 to index
    %c0_15 = arith.constant 0 : index
    %78 = memref.load %arg3[%77, %c0_15] : memref<16x9xf32, #tpu.memory_space<smem>>
    %79 = vector.broadcast %78 : f32 to vector<2x840xf32>
    %80 = arith.mulf %4, %79 : vector<2x840xf32>
    %81 = arith.addf %76, %80 : vector<2x840xf32>
    %82 = arith.index_cast %73 : i32 to index
    %c1_16 = arith.constant 1 : index
    %83 = memref.load %arg3[%82, %c1_16] : memref<16x9xf32, #tpu.memory_space<smem>>
    %84 = vector.broadcast %83 : f32 to vector<2x840xf32>
    %85 = arith.mulf %5, %84 : vector<2x840xf32>
    %86 = arith.addf %81, %85 : vector<2x840xf32>
    %87 = arith.index_cast %73 : i32 to index
    %c2_17 = arith.constant 2 : index
    %88 = memref.load %arg3[%87, %c2_17] : memref<16x9xf32, #tpu.memory_space<smem>>
    %89 = vector.broadcast %88 : f32 to vector<2x840xf32>
    %90 = arith.mulf %6, %89 : vector<2x840xf32>
    %91 = arith.addf %86, %90 : vector<2x840xf32>
    %92 = arith.index_cast %73 : i32 to index
    %c3_18 = arith.constant 3 : index
    %93 = memref.load %arg3[%92, %c3_18] : memref<16x9xf32, #tpu.memory_space<smem>>
    %94 = vector.broadcast %93 : f32 to vector<2x840xf32>
    %95 = arith.mulf %7, %94 : vector<2x840xf32>
    %96 = arith.addf %91, %95 : vector<2x840xf32>
    %97 = arith.index_cast %73 : i32 to index
    %c4_19 = arith.constant 4 : index
    %98 = memref.load %arg3[%97, %c4_19] : memref<16x9xf32, #tpu.memory_space<smem>>
    %99 = vector.broadcast %98 : f32 to vector<2x840xf32>
    %100 = arith.mulf %8, %99 : vector<2x840xf32>
    %101 = arith.addf %96, %100 : vector<2x840xf32>
    %102 = arith.index_cast %73 : i32 to index
    %c5_20 = arith.constant 5 : index
    %103 = memref.load %arg3[%102, %c5_20] : memref<16x9xf32, #tpu.memory_space<smem>>
    %104 = vector.broadcast %103 : f32 to vector<2x840xf32>
    %105 = arith.mulf %9, %104 : vector<2x840xf32>
    %106 = arith.addf %101, %105 : vector<2x840xf32>
    %107 = arith.index_cast %73 : i32 to index
    %c6_21 = arith.constant 6 : index
    %108 = memref.load %arg3[%107, %c6_21] : memref<16x9xf32, #tpu.memory_space<smem>>
    %109 = vector.broadcast %108 : f32 to vector<2x840xf32>
    %110 = arith.mulf %10, %109 : vector<2x840xf32>
    %111 = arith.addf %106, %110 : vector<2x840xf32>
    %112 = arith.index_cast %73 : i32 to index
    %c7_22 = arith.constant 7 : index
    %113 = memref.load %arg3[%112, %c7_22] : memref<16x9xf32, #tpu.memory_space<smem>>
    %114 = vector.broadcast %113 : f32 to vector<2x840xf32>
    %115 = arith.mulf %11, %114 : vector<2x840xf32>
    %116 = arith.addf %111, %115 : vector<2x840xf32>
    %117 = arith.index_cast %73 : i32 to index
    %c8_23 = arith.constant 8 : index
    %118 = memref.load %arg3[%117, %c8_23] : memref<16x9xf32, #tpu.memory_space<smem>>
    %119 = vector.broadcast %118 : f32 to vector<2x840xf32>
    %120 = arith.mulf %12, %119 : vector<2x840xf32>
    %121 = arith.addf %116, %120 : vector<2x840xf32>
    %cst_24 = arith.constant 0.000000e+00 : f32
    %122 = vector.broadcast %cst_24 : f32 to vector<2x840xf32>
    %123 = arith.maximumf %121, %122 : vector<2x840xf32>
    %124 = arith.truncf %123 : vector<2x840xf32> to vector<2x840xbf16>
    %c0_25 = arith.constant 0 : index
    %c0_26 = arith.constant 0 : index
    %125 = vector.load %arg9[%c0_25, %c0_26] : memref<2x128xf32, #tpu.memory_space<vmem>>, vector<2x128xf32>
    %c1_27 = arith.constant 1 : index
    %c0_28 = arith.constant 0 : index
    %c0_29 = arith.constant 0 : index
    %126 = vector.load %arg5[%c1_27, %c0_28, %c0_29] : memref<4x840x128xbf16, #tpu.memory_space<vmem>>, vector<1x840x128xbf16>
    %127 = vector.shape_cast %126 : vector<1x840x128xbf16> to vector<840x128xbf16>
    %cst_30 = arith.constant dense<0.000000e+00> : vector<2x128xf32>
    %128 = tpu.matmul %124, %127, %cst_30 {dimension_numbers = #tpu.dot_dimension_numbers<[1], [0], [0], [1], [0, 0, 1, 1], [], []>} : vector<2x840xbf16>, vector<840x128xbf16>, vector<2x128xf32> -> vector<2x128xf32>
    %129 = arith.addf %125, %128 : vector<2x128xf32>
    %c0_31 = arith.constant 0 : index
    %c0_32 = arith.constant 0 : index
    %130 = vector.load %arg9[%c0_31, %c0_32] : memref<2x128xf32, #tpu.memory_space<vmem>>, vector<2x128xf32>
    tpu.vector_store %arg9[%c0_31, %c0_32], %129 {strides = array<i32>} : memref<2x128xf32, #tpu.memory_space<vmem>>, vector<2x128xf32>,
    %c4_i32_33 = arith.constant 4 : i32
    %131 = arith.muli %arg1, %c4_i32_33 : i32
    %c2_i32 = arith.constant 2 : i32
    %132 = arith.addi %131, %c2_i32 : i32
    %c0_34 = arith.constant 0 : index
    %133 = arith.index_cast %132 : i32 to index
    %134 = memref.load %arg4[%c0_34, %133] : memref<1x16xf32, #tpu.memory_space<smem>>
    %135 = vector.broadcast %134 : f32 to vector<2x840xf32>
    %136 = arith.index_cast %132 : i32 to index
    %c0_35 = arith.constant 0 : index
    %137 = memref.load %arg3[%136, %c0_35] : memref<16x9xf32, #tpu.memory_space<smem>>
    %138 = vector.broadcast %137 : f32 to vector<2x840xf32>
    %139 = arith.mulf %4, %138 : vector<2x840xf32>
    %140 = arith.addf %135, %139 : vector<2x840xf32>
    %141 = arith.index_cast %132 : i32 to index
    %c1_36 = arith.constant 1 : index
    %142 = memref.load %arg3[%141, %c1_36] : memref<16x9xf32, #tpu.memory_space<smem>>
    %143 = vector.broadcast %142 : f32 to vector<2x840xf32>
    %144 = arith.mulf %5, %143 : vector<2x840xf32>
    %145 = arith.addf %140, %144 : vector<2x840xf32>
    %146 = arith.index_cast %132 : i32 to index
    %c2_37 = arith.constant 2 : index
    %147 = memref.load %arg3[%146, %c2_37] : memref<16x9xf32, #tpu.memory_space<smem>>
    %148 = vector.broadcast %147 : f32 to vector<2x840xf32>
    %149 = arith.mulf %6, %148 : vector<2x840xf32>
    %150 = arith.addf %145, %149 : vector<2x840xf32>
    %151 = arith.index_cast %132 : i32 to index
    %c3_38 = arith.constant 3 : index
    %152 = memref.load %arg3[%151, %c3_38] : memref<16x9xf32, #tpu.memory_space<smem>>
    %153 = vector.broadcast %152 : f32 to vector<2x840xf32>
    %154 = arith.mulf %7, %153 : vector<2x840xf32>
    %155 = arith.addf %150, %154 : vector<2x840xf32>
    %156 = arith.index_cast %132 : i32 to index
    %c4_39 = arith.constant 4 : index
    %157 = memref.load %arg3[%156, %c4_39] : memref<16x9xf32, #tpu.memory_space<smem>>
    %158 = vector.broadcast %157 : f32 to vector<2x840xf32>
    %159 = arith.mulf %8, %158 : vector<2x840xf32>
    %160 = arith.addf %155, %159 : vector<2x840xf32>
    %161 = arith.index_cast %132 : i32 to index
    %c5_40 = arith.constant 5 : index
    %162 = memref.load %arg3[%161, %c5_40] : memref<16x9xf32, #tpu.memory_space<smem>>
    %163 = vector.broadcast %162 : f32 to vector<2x840xf32>
    %164 = arith.mulf %9, %163 : vector<2x840xf32>
    %165 = arith.addf %160, %164 : vector<2x840xf32>
    %166 = arith.index_cast %132 : i32 to index
    %c6_41 = arith.constant 6 : index
    %167 = memref.load %arg3[%166, %c6_41] : memref<16x9xf32, #tpu.memory_space<smem>>
    %168 = vector.broadcast %167 : f32 to vector<2x840xf32>
    %169 = arith.mulf %10, %168 : vector<2x840xf32>
    %170 = arith.addf %165, %169 : vector<2x840xf32>
    %171 = arith.index_cast %132 : i32 to index
    %c7_42 = arith.constant 7 : index
    %172 = memref.load %arg3[%171, %c7_42] : memref<16x9xf32, #tpu.memory_space<smem>>
    %173 = vector.broadcast %172 : f32 to vector<2x840xf32>
    %174 = arith.mulf %11, %173 : vector<2x840xf32>
    %175 = arith.addf %170, %174 : vector<2x840xf32>
    %176 = arith.index_cast %132 : i32 to index
    %c8_43 = arith.constant 8 : index
    %177 = memref.load %arg3[%176, %c8_43] : memref<16x9xf32, #tpu.memory_space<smem>>
    %178 = vector.broadcast %177 : f32 to vector<2x840xf32>
    %179 = arith.mulf %12, %178 : vector<2x840xf32>
    %180 = arith.addf %175, %179 : vector<2x840xf32>
    %cst_44 = arith.constant 0.000000e+00 : f32
    %181 = vector.broadcast %cst_44 : f32 to vector<2x840xf32>
    %182 = arith.maximumf %180, %181 : vector<2x840xf32>
    %183 = arith.truncf %182 : vector<2x840xf32> to vector<2x840xbf16>
    %c0_45 = arith.constant 0 : index
    %c0_46 = arith.constant 0 : index
    %184 = vector.load %arg9[%c0_45, %c0_46] : memref<2x128xf32, #tpu.memory_space<vmem>>, vector<2x128xf32>
    %c2_47 = arith.constant 2 : index
    %c0_48 = arith.constant 0 : index
    %c0_49 = arith.constant 0 : index
    %185 = vector.load %arg5[%c2_47, %c0_48, %c0_49] : memref<4x840x128xbf16, #tpu.memory_space<vmem>>, vector<1x840x128xbf16>
    %186 = vector.shape_cast %185 : vector<1x840x128xbf16> to vector<840x128xbf16>
    %cst_50 = arith.constant dense<0.000000e+00> : vector<2x128xf32>
    %187 = tpu.matmul %183, %186, %cst_50 {dimension_numbers = #tpu.dot_dimension_numbers<[1], [0], [0], [1], [0, 0, 1, 1], [], []>} : vector<2x840xbf16>, vector<840x128xbf16>, vector<2x128xf32> -> vector<2x128xf32>
    %188 = arith.addf %184, %187 : vector<2x128xf32>
    %c0_51 = arith.constant 0 : index
    %c0_52 = arith.constant 0 : index
    %189 = vector.load %arg9[%c0_51, %c0_52] : memref<2x128xf32, #tpu.memory_space<vmem>>, vector<2x128xf32>
    tpu.vector_store %arg9[%c0_51, %c0_52], %188 {strides = array<i32>} : memref<2x128xf32, #tpu.memory_space<vmem>>, vector<2x128xf32>,
    %c4_i32_53 = arith.constant 4 : i32
    %190 = arith.muli %arg1, %c4_i32_53 : i32
    %c3_i32 = arith.constant 3 : i32
    %191 = arith.addi %190, %c3_i32 : i32
    %c0_54 = arith.constant 0 : index
    %192 = arith.index_cast %191 : i32 to index
    %193 = memref.load %arg4[%c0_54, %192] : memref<1x16xf32, #tpu.memory_space<smem>>
    %194 = vector.broadcast %193 : f32 to vector<2x840xf32>
    %195 = arith.index_cast %191 : i32 to index
    %c0_55 = arith.constant 0 : index
    %196 = memref.load %arg3[%195, %c0_55] : memref<16x9xf32, #tpu.memory_space<smem>>
    %197 = vector.broadcast %196 : f32 to vector<2x840xf32>
    %198 = arith.mulf %4, %197 : vector<2x840xf32>
    %199 = arith.addf %194, %198 : vector<2x840xf32>
    %200 = arith.index_cast %191 : i32 to index
    %c1_56 = arith.constant 1 : index
    %201 = memref.load %arg3[%200, %c1_56] : memref<16x9xf32, #tpu.memory_space<smem>>
    %202 = vector.broadcast %201 : f32 to vector<2x840xf32>
    %203 = arith.mulf %5, %202 : vector<2x840xf32>
    %204 = arith.addf %199, %203 : vector<2x840xf32>
    %205 = arith.index_cast %191 : i32 to index
    %c2_57 = arith.constant 2 : index
    %206 = memref.load %arg3[%205, %c2_57] : memref<16x9xf32, #tpu.memory_space<smem>>
    %207 = vector.broadcast %206 : f32 to vector<2x840xf32>
    %208 = arith.mulf %6, %207 : vector<2x840xf32>
    %209 = arith.addf %204, %208 : vector<2x840xf32>
    %210 = arith.index_cast %191 : i32 to index
    %c3_58 = arith.constant 3 : index
    %211 = memref.load %arg3[%210, %c3_58] : memref<16x9xf32, #tpu.memory_space<smem>>
    %212 = vector.broadcast %211 : f32 to vector<2x840xf32>
    %213 = arith.mulf %7, %212 : vector<2x840xf32>
    %214 = arith.addf %209, %213 : vector<2x840xf32>
    %215 = arith.index_cast %191 : i32 to index
    %c4_59 = arith.constant 4 : index
    %216 = memref.load %arg3[%215, %c4_59] : memref<16x9xf32, #tpu.memory_space<smem>>
    %217 = vector.broadcast %216 : f32 to vector<2x840xf32>
    %218 = arith.mulf %8, %217 : vector<2x840xf32>
    %219 = arith.addf %214, %218 : vector<2x840xf32>
    %220 = arith.index_cast %191 : i32 to index
    %c5_60 = arith.constant 5 : index
    %221 = memref.load %arg3[%220, %c5_60] : memref<16x9xf32, #tpu.memory_space<smem>>
    %222 = vector.broadcast %221 : f32 to vector<2x840xf32>
    %223 = arith.mulf %9, %222 : vector<2x840xf32>
    %224 = arith.addf %219, %223 : vector<2x840xf32>
    %225 = arith.index_cast %191 : i32 to index
    %c6_61 = arith.constant 6 : index
    %226 = memref.load %arg3[%225, %c6_61] : memref<16x9xf32, #tpu.memory_space<smem>>
    %227 = vector.broadcast %226 : f32 to vector<2x840xf32>
    %228 = arith.mulf %10, %227 : vector<2x840xf32>
    %229 = arith.addf %224, %228 : vector<2x840xf32>
    %230 = arith.index_cast %191 : i32 to index
    %c7_62 = arith.constant 7 : index
    %231 = memref.load %arg3[%230, %c7_62] : memref<16x9xf32, #tpu.memory_space<smem>>
    %232 = vector.broadcast %231 : f32 to vector<2x840xf32>
    %233 = arith.mulf %11, %232 : vector<2x840xf32>
    %234 = arith.addf %229, %233 : vector<2x840xf32>
    %235 = arith.index_cast %191 : i32 to index
    %c8_63 = arith.constant 8 : index
    %236 = memref.load %arg3[%235, %c8_63] : memref<16x9xf32, #tpu.memory_space<smem>>
    %237 = vector.broadcast %236 : f32 to vector<2x840xf32>
    %238 = arith.mulf %12, %237 : vector<2x840xf32>
    %239 = arith.addf %234, %238 : vector<2x840xf32>
    %cst_64 = arith.constant 0.000000e+00 : f32
    %240 = vector.broadcast %cst_64 : f32 to vector<2x840xf32>
    %241 = arith.maximumf %239, %240 : vector<2x840xf32>
    %242 = arith.truncf %241 : vector<2x840xf32> to vector<2x840xbf16>
    %c0_65 = arith.constant 0 : index
    %c0_66 = arith.constant 0 : index
    %243 = vector.load %arg9[%c0_65, %c0_66] : memref<2x128xf32, #tpu.memory_space<vmem>>, vector<2x128xf32>
    %c3_67 = arith.constant 3 : index
    %c0_68 = arith.constant 0 : index
    %c0_69 = arith.constant 0 : index
    %244 = vector.load %arg5[%c3_67, %c0_68, %c0_69] : memref<4x840x128xbf16, #tpu.memory_space<vmem>>, vector<1x840x128xbf16>
    %245 = vector.shape_cast %244 : vector<1x840x128xbf16> to vector<840x128xbf16>
    %cst_70 = arith.constant dense<0.000000e+00> : vector<2x128xf32>
    %246 = tpu.matmul %242, %245, %cst_70 {dimension_numbers = #tpu.dot_dimension_numbers<[1], [0], [0], [1], [0, 0, 1, 1], [], []>} : vector<2x840xbf16>, vector<840x128xbf16>, vector<2x128xf32> -> vector<2x128xf32>
    %247 = arith.addf %243, %246 : vector<2x128xf32>
    %c0_71 = arith.constant 0 : index
    %c0_72 = arith.constant 0 : index
    %248 = vector.load %arg9[%c0_71, %c0_72] : memref<2x128xf32, #tpu.memory_space<vmem>>, vector<2x128xf32>
    tpu.vector_store %arg9[%c0_71, %c0_72], %247 {strides = array<i32>} : memref<2x128xf32, #tpu.memory_space<vmem>>, vector<2x128xf32>,
    %c3_i32_73 = arith.constant 3 : i32
    %249 = arith.cmpi eq, %arg1, %c3_i32_73 : i32
    %250 = arith.extui %249 : i1 to i32
    %c0_i32_74 = arith.constant 0 : i32
    %251 = arith.cmpi ne, %250, %c0_i32_74 : i32
    scf.if %251 {
      %c0_75 = arith.constant 0 : index
      %c0_76 = arith.constant 0 : index
      %252 = vector.load %arg9[%c0_75, %c0_76] : memref<2x128xf32, #tpu.memory_space<vmem>>, vector<2x128xf32>
      %c0_77 = arith.constant 0 : index
      %c0_78 = arith.constant 0 : index
      %253 = vector.load %arg6[%c0_77, %c0_78] : memref<1x128xf32, #tpu.memory_space<vmem>>, vector<1x128xf32>
      %254 = vector.broadcast %253 : vector<1x128xf32> to vector<2x128xf32>
      %255 = arith.addf %252, %254 : vector<2x128xf32>
      %cst_79 = arith.constant 0.000000e+00 : f32
      %256 = vector.broadcast %cst_79 : f32 to vector<2x128xf32>
      %257 = arith.maximumf %255, %256 : vector<2x128xf32>
      %c0_80 = arith.constant 0 : index
      %c0_81 = arith.constant 0 : index
      %258 = vector.load %arg7[%c0_80, %c0_81] : memref<128x10xf32, #tpu.memory_space<vmem>>, vector<128x10xf32>
      %cst_82 = arith.constant dense<0.000000e+00> : vector<2x10xf32>
      %259 = tpu.matmul %257, %258, %cst_82 {dimension_numbers = #tpu.dot_dimension_numbers<[1], [0], [0], [1], [0, 0, 1, 1], [], []>} : vector<2x128xf32>, vector<128x10xf32>, vector<2x10xf32> -> vector<2x10xf32>
      %c0_83 = arith.constant 0 : index
      %c0_84 = arith.constant 0 : index
      %c0_85 = arith.constant 0 : index
      %260 = vector.load %arg8[%c0_83, %c0_84, %c0_85] : memref<1x2x10xf32, #tpu.memory_space<vmem>>, vector<1x2x10xf32>
      %261 = vector.shape_cast %260 : vector<1x2x10xf32> to vector<2x10xf32>
      %262 = vector.shape_cast %259 : vector<2x10xf32> to vector<1x2x10xf32>
      tpu.vector_store %arg8[%c0_83, %c0_84, %c0_85], %262 {strides = array<i32>} : memref<1x2x10xf32, #tpu.memory_space<vmem>>, vector<1x2x10xf32>,
    } else {
    }
    return
  }
  func.func @transform_0(%arg0: i32, %arg1: i32) -> (i32, i32) {
    %c0_i32 = arith.constant 0 : i32
    %c0_i32_0 = arith.constant 0 : i32
    %c0_i32_1 = arith.constant 0 : i32
    return %c0_i32, %c0_i32_0 : i32, i32
  }
  func.func @transform_1(%arg0: i32, %arg1: i32) -> (i32, i32) {
    %c0_i32 = arith.constant 0 : i32
    %c0_i32_0 = arith.constant 0 : i32
    %c0_i32_1 = arith.constant 0 : i32
    return %c0_i32, %c0_i32_0 : i32, i32
  }
  func.func @transform_2(%arg0: i32, %arg1: i32) -> (i32, i32) {
    %c0_i32 = arith.constant 0 : i32
    %c0_i32_0 = arith.constant 0 : i32
    %c0_i32_1 = arith.constant 0 : i32
    return %c0_i32, %c0_i32_0 : i32, i32
  }
  func.func @transform_3(%arg0: i32, %arg1: i32) -> (i32, i32, i32) {
    %c0_i32 = arith.constant 0 : i32
    %c0_i32_0 = arith.constant 0 : i32
    return %arg1, %c0_i32, %arg0 : i32, i32, i32
  }
  func.func @transform_4(%arg0: i32, %arg1: i32) -> (i32, i32) {
    %c0_i32 = arith.constant 0 : i32
    %c0_i32_0 = arith.constant 0 : i32
    return %c0_i32, %arg0 : i32, i32
  }
  func.func @transform_5(%arg0: i32, %arg1: i32) -> (i32, i32) {
    %c0_i32 = arith.constant 0 : i32
    %c0_i32_0 = arith.constant 0 : i32
    return %arg0, %c0_i32 : i32, i32
  }
  func.func @transform_6(%arg0: i32, %arg1: i32) -> (i32, i32, i32) {
    %c0_i32 = arith.constant 0 : i32
    %c0_i32_0 = arith.constant 0 : i32
    %c0_i32_1 = arith.constant 0 : i32
    return %arg0, %c0_i32, %c0_i32_0 : i32, i32, i32
  }
}

</mosaic_0001>

<llo_original>
// kernel: tpu_custom_call.1
$region0: #{tpu_custom_call.1}
  #allocation0 [shape = 'u32[]', space=smem, size = 0x4, offset = 0x4, fixed_abs, tag = 'smem constant byte address 0x4 - core index']
  #allocation1 [shape = 'u32[144,128]{1,0:T(1,128)}', space=vmem, size = 0x12000, scoped, tag = 'internal scratch']
  #allocation2 [shape = 'f32[2,128]{1,0:T(2,128)}', space=vmem, size = 0x400, scoped, tag = 'scratch operand']
  %s0 = inlined_call_operand.hbm [shape: f32[2,960], index: 0, kind: input, shape index: {}]
  %s1 = inlined_call_operand.hbm [shape: f32[16,9], index: 1, kind: input, shape index: {}]
  %s2 = inlined_call_operand.hbm [shape: f32[1,16], index: 2, kind: input, shape index: {}]
  %s3 = inlined_call_operand.hbm [shape: bf16[16,840,256], index: 3, kind: input, shape index: {}]
  %s4 = inlined_call_operand.hbm [shape: f32[1,256], index: 4, kind: input, shape index: {}]
  %s5 = inlined_call_operand.vmem [shape: f32[256,10], index: 5, kind: input, shape index: {}]
  %s6 = inlined_call_operand.hbm [shape: f32[2,2,10], index: 6, kind: output, shape index: {}]
  %s7 = sld [smem:[#allocation0]]
  $region85: #{tpu_custom_call.1} parent=0
    _
  %s9 = ssub.s32 1, %s7
  %s10 = scalar_select 0, %s9, %s7
  $region1: #{tpu_custom_call.1} parent=0
    #allocation3 [shape = 'u8[8192]{0}', space=vmem, size = 0x2000, scoped, tag = 'input window, operand 0, single buffered']
    #allocation4 [shape = 's32[2]{0}', space=sflag, size = 0x8, scoped, tag = 'scoped memory for tpu_custom_call.1']
    #allocation5 [shape = 's32[2]{0}', space=sflag, size = 0x8, scoped, tag = 'scoped memory for tpu_custom_call.1']
    #allocation6 [shape = 's32[2]{0}', space=sflag, size = 0x8, scoped, tag = 'scoped memory for tpu_custom_call.1']
    #allocation7 [shape = 'u8[8192]{0}', space=smem, size = 0x2000, scoped, tag = 'input window, operand 1, single buffered']
    #allocation8 [shape = 'u8[512]{0}', space=smem, size = 0x200, scoped, tag = 'input window, operand 2, single buffered']
    #allocation9 [shape = 's32[1]{0}', space=sflag, size = 0x4, scoped, tag = 'scoped memory for tpu_custom_call.1']
    #allocation10 [shape = 'u8[1720320]{0}', space=vmem, size = 0x1a4000, scoped, tag = 'input window, operand 3']
    #allocation11 [shape = 's32[2]{0}', space=sflag, size = 0x8, scoped, tag = 'scoped memory for tpu_custom_call.1']
    #allocation12 [shape = 'u8[1024]{0}', space=vmem, size = 0x400, scoped, tag = 'input window, operand 4']
    #allocation13 [shape = 'u8[2048]{0}', space=vmem, size = 0x800, scoped, tag = 'output window, operand 0']
    %11 = vsyncpa [#allocation4], 0
    %12 = vsyncpa [#allocation6], 0
    %13 = vsyncpa [#allocation9], 0
    %14 = vsyncpa [#allocation11], 0
    %s15 = scalar_lea.sflag [#allocation11], 1
    %16 = vsyncpa %s15, 0
    %17 = vsyncpa [#allocation5], 0
    %s18 = scalar_lea.sflag [#allocation5], 1
    %19 = vsyncpa %s18, 0
    loop: start=0, step=1, limit=10
    $region2: #{tpu_custom_call.1} parent=1 // loop_pre_header
      _
    $region3: #{tpu_custom_call.1} parent=1 // loop_header
      %s21 = sphi 0, %s25
      %p22 = scmp.ge.s32.totalorder %s21, 10
      %s28 = sphi 0, %s40
      %s29 = sphi 0, %s36
      %s30 = sphi 0, %s28
      %s31 = sphi 0, %s29
      %s32 = sphi 0, %s30
      %s33 = sphi 0, %s31
      %s41 = sphi 0, %s41
      %s43 = sphi 0, %s41
      %s44 = sphi 0, %s43
      %s58 = sphi 0, %s44
      %s62 = sphi 0, %s62
      %s64 = sphi 0, %s62
      %s65 = sphi 0, %s64
      %s79 = sphi 0, %s65
      %s83 = sphi 0, %s83
      %s85 = sphi 0, %s83
      %s86 = sphi 0, %s85
      %s100 = sphi 0, %s86
      %s108 = sphi 0, %s110
      %s111 = sphi 0, %s108
      %s112 = sphi 0, %s111
      %s128 = sphi 0, %s112
      %s134 = sphi 0, %s136
      %s137 = sphi 0, %s134
      %s138 = sphi 0, %s137
      %s154 = sphi 0, %s138
      %s160 = sphi 0, %s162
      %s163 = sphi 0, %s160
      %s164 = sphi 0, %s163
      %s180 = sphi 0, %s164
      %s186 = sphi 0, %s188
      %s189 = sphi 0, %s186
      %s190 = sphi 0, %s189
      %s206 = sphi 0, %s190
    $region4: #{tpu_custom_call.1} parent=1 // loop_header_branch
      %24 = sbr.rel (%p22) target = $region8
    $region5: #{tpu_custom_call.1} parent=1 // loop_body
      %s26 = ssub.s32 %s21, 1
      %s27 = ssub.s32 %s21, 2
      %s34 = sadd.s32 1, %s29
      %p35 = scmp.ge.s32.totalorder %s34, 4
      %s36 = scalar_select %p35, 0, %s34
      %s37 = sadd.s32 1, %s28
      %s38 = scalar_select %p35, %s37, %s28
      %p39 = scmp.ge.s32.totalorder %s38, 2
      %s40 = scalar_select %p39, 0, %s38
      %s42 = sadd.s32 %s41, 1
      %p45 = scmp.eq.s32.totalorder %s21, 7
      %p46 = scmp.ne.s32.totalorder %s41, %s43
      %p47 = scmp.eq.s32.totalorder %s21, 0
      %p48 = por %p46, %p47
      %p49 = scmp.ne.s32.totalorder %s41, %s43
      %p50 = scmp.eq.s32.totalorder %s26, 7
      %p51 = por %p49, %p50
      %p52 = scmp.ne.s32.totalorder %s43, %s44
      %p53 = scmp.eq.s32.totalorder %s26, 0
      %p54 = por %p52, %p53
      %p55 = scmp.ne.s32.totalorder %s43, %s44
      %p56 = scmp.eq.s32.totalorder %s27, 7
      %p57 = por %p55, %p56
      %p59 = scmp.ne.s32.totalorder %s44, %s58
      %p60 = scmp.eq.s32.totalorder %s27, 0
      %p61 = por %p59, %p60
      %s63 = sadd.s32 %s62, 1
      %p66 = scmp.eq.s32.totalorder %s21, 7
      %p67 = scmp.ne.s32.totalorder %s62, %s64
      %p68 = scmp.eq.s32.totalorder %s21, 0
      %p69 = por %p67, %p68
      %p70 = scmp.ne.s32.totalorder %s62, %s64
      %p71 = scmp.eq.s32.totalorder %s26, 7
      %p72 = por %p70, %p71
      %p73 = scmp.ne.s32.totalorder %s64, %s65
      %p74 = scmp.eq.s32.totalorder %s26, 0
      %p75 = por %p73, %p74
      %p76 = scmp.ne.s32.totalorder %s64, %s65
      %p77 = scmp.eq.s32.totalorder %s27, 7
      %p78 = por %p76, %p77
      %p80 = scmp.ne.s32.totalorder %s65, %s79
      %p81 = scmp.eq.s32.totalorder %s27, 0
      %p82 = por %p80, %p81
      %s84 = sadd.s32 %s83, 1
      %p87 = scmp.eq.s32.totalorder %s21, 7
      %p88 = scmp.ne.s32.totalorder %s83, %s85
      %p89 = scmp.eq.s32.totalorder %s21, 0
      %p90 = por %p88, %p89
      %p91 = scmp.ne.s32.totalorder %s83, %s85
      %p92 = scmp.eq.s32.totalorder %s26, 7
      %p93 = por %p91, %p92
      %p94 = scmp.ne.s32.totalorder %s85, %s86
      %p95 = scmp.eq.s32.totalorder %s26, 0
      %p96 = por %p94, %p95
      %p97 = scmp.ne.s32.totalorder %s85, %s86
      %p98 = scmp.eq.s32.totalorder %s27, 7
      %p99 = por %p97, %p98
      %p101 = scmp.ne.s32.totalorder %s86, %s100
      %p102 = scmp.eq.s32.totalorder %s27, 0
      %p103 = por %p101, %p102
      %s104 = ssub.s32 %s29, %s36
      %s105 = ssub.s32 %s28, %s40
      %s106 = sor.u32 %s104, %s105
      %p107 = scmp.eq.s32.totalorder %s106, 0
      %s109 = sadd.s32 %s108, 1
      %s110 = scalar_select %p107, %s108, %s109
      %p113 = pneg %p107
      %p114 = scmp.eq.s32.totalorder %s21, 7
      %p115 = por %p113, %p114
      %p116 = scmp.ne.s32.totalorder %s108, %s111
      %p117 = scmp.eq.s32.totalorder %s21, 0
      %p118 = por %p116, %p117
      %p119 = scmp.ne.s32.totalorder %s108, %s111
      %p120 = scmp.eq.s32.totalorder %s26, 7
      %p121 = por %p119, %p120
      %p122 = scmp.ne.s32.totalorder %s111, %s112
      %p123 = scmp.eq.s32.totalorder %s26, 0
      %p124 = por %p122, %p123
      %p125 = scmp.ne.s32.totalorder %s111, %s112
      %p126 = scmp.eq.s32.totalorder %s27, 7
      %p127 = por %p125, %p126
      %p129 = scmp.ne.s32.totalorder %s112, %s128
      %p130 = scmp.eq.s32.totalorder %s27, 0
      %p131 = por %p129, %p130
      %s132 = ssub.s32 %s28, %s40
      %p133 = scmp.eq.s32.totalorder %s132, 0
      %s135 = sadd.s32 %s134, 1
      %s136 = scalar_select %p133, %s134, %s135
      %p139 = pneg %p133
      %p140 = scmp.eq.s32.totalorder %s21, 7
      %p141 = por %p139, %p140
      %p142 = scmp.ne.s32.totalorder %s134, %s137
      %p143 = scmp.eq.s32.totalorder %s21, 0
      %p144 = por %p142, %p143
      %p145 = scmp.ne.s32.totalorder %s134, %s137
      %p146 = scmp.eq.s32.totalorder %s26, 7
      %p147 = por %p145, %p146
      %p148 = scmp.ne.s32.totalorder %s137, %s138
      %p149 = scmp.eq.s32.totalorder %s26, 0
      %p150 = por %p148, %p149
      %p151 = scmp.ne.s32.totalorder %s137, %s138
      %p152 = scmp.eq.s32.totalorder %s27, 7
      %p153 = por %p151, %p152
      %p155 = scmp.ne.s32.totalorder %s138, %s154
      %p156 = scmp.eq.s32.totalorder %s27, 0
      %p157 = por %p155, %p156
      %s158 = ssub.s32 %s28, %s40
      %p159 = scmp.eq.s32.totalorder %s158, 0
      %s161 = sadd.s32 %s160, 1
      %s162 = scalar_select %p159, %s160, %s161
      %p165 = pneg %p159
      %p166 = scmp.eq.s32.totalorder %s21, 7
      %p167 = por %p165, %p166
      %p168 = scmp.ne.s32.totalorder %s160, %s163
      %p169 = scmp.eq.s32.totalorder %s21, 0
      %p170 = por %p168, %p169
      %p171 = scmp.ne.s32.totalorder %s160, %s163
      %p172 = scmp.eq.s32.totalorder %s26, 7
      %p173 = por %p171, %p172
      %p174 = scmp.ne.s32.totalorder %s163, %s164
      %p175 = scmp.eq.s32.totalorder %s26, 0
      %p176 = por %p174, %p175
      %p177 = scmp.ne.s32.totalorder %s163, %s164
      %p178 = scmp.eq.s32.totalorder %s27, 7
      %p179 = por %p177, %p178
      %p181 = scmp.ne.s32.totalorder %s164, %s180
      %p182 = scmp.eq.s32.totalorder %s27, 0
      %p183 = por %p181, %p182
      %s184 = ssub.s32 %s28, %s40
      %p185 = scmp.eq.s32.totalorder %s184, 0
      %s187 = sadd.s32 %s186, 1
      %s188 = scalar_select %p185, %s186, %s187
      %p191 = pneg %p185
      %p192 = scmp.eq.s32.totalorder %s21, 7
      %p193 = por %p191, %p192
      %p194 = scmp.ne.s32.totalorder %s186, %s189
      %p195 = scmp.eq.s32.totalorder %s21, 0
      %p196 = por %p194, %p195
      %p197 = scmp.ne.s32.totalorder %s186, %s189
      %p198 = scmp.eq.s32.totalorder %s26, 7
      %p199 = por %p197, %p198
      %p200 = scmp.ne.s32.totalorder %s189, %s190
      %p201 = scmp.eq.s32.totalorder %s26, 0
      %p202 = por %p200, %p201
      %p203 = scmp.ne.s32.totalorder %s189, %s190
      %p204 = scmp.eq.s32.totalorder %s27, 7
      %p205 = por %p203, %p204
      %p207 = scmp.ne.s32.totalorder %s190, %s206
      %p208 = scmp.eq.s32.totalorder %s27, 0
      %p209 = por %p207, %p208
      %p210 = scmp.le.s32.totalorder 1, %s21
      %p211 = scmp.lt.s32.totalorder %s21, 9
      %p212 = pnand %p210, %p211
      %p213 = pneg %p212
      // Predicated region
      $region9: #{tpu_custom_call.1} parent=5 // pred_check
        _
      $region10: #{tpu_custom_call.1} parent=5 // pred_check_branch
        %215 = sbr.rel (%p212) target = $region12
      $region11: #{tpu_custom_call.1} parent=5 // pred_region
        %s216 = ssub.s32 %s21, 1
        // Predicated region
        $region13: #{tpu_custom_call.1} parent=11 // pred_check
          %p217 = pneg %p54
        $region14: #{tpu_custom_call.1} parent=11 // pred_check_branch
          %219 = sbr.rel (%p217) target = $region16
        $region15: #{tpu_custom_call.1} parent=11 // pred_region
          %s221 = ssub.s32 256, 256
          %222 = vsyncadd [#allocation4], %s221
          %s224 = sshll.u32 [#allocation3], 4
          %s225 = int_to_ptr.vmem [resolvable:$true] %s224
          %227 = dma.hbm_to_vmem [thread:$0]  %s0, 256, %s225, [#allocation4]
        $region16: #{tpu_custom_call.1} parent=11 // pred_fallthru
          _
        // Predicated region
        $region17: #{tpu_custom_call.1} parent=11 // pred_check
          %p228 = pneg %p75
        $region18: #{tpu_custom_call.1} parent=11 // pred_check_branch
          %230 = sbr.rel (%p228) target = $region20
        $region19: #{tpu_custom_call.1} parent=11 // pred_region
          %s232 = ssub.s32 256, 256
          %233 = vsyncadd [#allocation6], %s232
          %238 = dma.hbm_to_smem %s1, 256, [#allocation7], [#allocation6], 128, 128, 8
        $region20: #{tpu_custom_call.1} parent=11 // pred_fallthru
          _
        // Predicated region
        $region21: #{tpu_custom_call.1} parent=11 // pred_check
          %p239 = pneg %p96
        $region22: #{tpu_custom_call.1} parent=11 // pred_check_branch
          %241 = sbr.rel (%p239) target = $region24
        $region23: #{tpu_custom_call.1} parent=11 // pred_region
          %s243 = ssub.s32 16, 16
          %244 = vsyncadd [#allocation9], %s243
          %247 = dma.hbm_to_smem %s2, 16, [#allocation8], [#allocation9]
        $region24: #{tpu_custom_call.1} parent=11 // pred_fallthru
          _
      $region12: #{tpu_custom_call.1} parent=5 // pred_fallthru
        _
      %p248 = scmp.lt.s32.totalorder %s21, 8
      // Predicated region
      $region25: #{tpu_custom_call.1} parent=5 // pred_check
        %p249 = pneg %p248
      $region26: #{tpu_custom_call.1} parent=5 // pred_check_branch
        %251 = sbr.rel (%p249) target = $region28
      $region27: #{tpu_custom_call.1} parent=5 // pred_region
        // Predicated region
        $region29: #{tpu_custom_call.1} parent=27 // pred_check
          %p252 = pneg %p118
        $region30: #{tpu_custom_call.1} parent=27 // pred_check_branch
          %254 = sbr.rel (%p252) target = $region32
        $region31: #{tpu_custom_call.1} parent=27 // pred_region
          %s255 = sand.u32 %s21, 1
          %s256 = scalar_lea.sflag [#allocation11], %s255
          %s257 = sand.u32 %s108, 1
          %s258 = smul.addr %s257, 1680
          %s259 = scalar_lea.vmem [#allocation10], %s258
          %s260 = smul.u32 4, %s29
          %s262 = ssub.s32 26880, 26880
          %263 = vsyncadd %s256, %s262
          %s264 = smul.addr %s260, 210
          %s265 = sadd.s32 %s28, %s264
          %s266 = smul.addr %s265, 64
          %s267 = scalar_lea.hbm %s3, %s266
          %s268 = sshll.u32 %s259, 4
          %s269 = int_to_ptr.vmem [resolvable:$true] %s268
          %274 = dma.hbm_to_vmem [thread:$0]  %s267, 26880, %s269, %s256, 128, 64, 4
        $region32: #{tpu_custom_call.1} parent=27 // pred_fallthru
          _
        // Predicated region
        $region33: #{tpu_custom_call.1} parent=27 // pred_check
          %p275 = pneg %p144
        $region34: #{tpu_custom_call.1} parent=27 // pred_check_branch
          %277 = sbr.rel (%p275) target = $region36
        $region35: #{tpu_custom_call.1} parent=27 // pred_region
          %s278 = sand.u32 %s21, 1
          %s279 = scalar_lea.sflag [#allocation11], %s278
          %s280 = sand.u32 %s134, 1
          %s281 = scalar_lea.vmem [#allocation12], %s280
          %s283 = ssub.s32 16, 16
          %284 = vsyncadd %s279, %s283
          %s285 = smul.addr %s28, 16
          %s286 = scalar_lea.hbm %s4, %s285
          %s288 = sshll.u32 %s281, 4
          %s289 = int_to_ptr.vmem [resolvable:$true] %s288
          %291 = dma.hbm_to_vmem [thread:$0]  %s286, 16, %s289, %s279
        $region36: #{tpu_custom_call.1} parent=27 // pred_fallthru
          _
        // Predicated region
        $region37: #{tpu_custom_call.1} parent=27 // pred_check
          %p292 = pneg %p170
        $region38: #{tpu_custom_call.1} parent=27 // pred_check_branch
          %294 = sbr.rel (%p292) target = $region40
        $region39: #{tpu_custom_call.1} parent=27 // pred_region
          %s295 = smul.u32 16, %s28
          %p296 = scmp.lt.s32.totalorder %s295, 31
          %s297 = scalar_select %p296, %s295, 31
          %s298 = smul.addr %s297, 8
          %s299 = scalar_lea.vmem %s5, %s298
          %s300 = smul.u32 16, %s28
        $region40: #{tpu_custom_call.1} parent=27 // pred_fallthru
          _
      $region28: #{tpu_custom_call.1} parent=5 // pred_fallthru
        _
      %p301 = scmp.le.s32.totalorder 1, %s21
      %p302 = scmp.lt.s32.totalorder %s21, 9
      %p303 = pnand %p301, %p302
      %p304 = pneg %p303
      // Predicated region
      $region41: #{tpu_custom_call.1} parent=5 // pred_check
        _
      $region42: #{tpu_custom_call.1} parent=5 // pred_check_branch
        %306 = sbr.rel (%p303) target = $region44
      $region43: #{tpu_custom_call.1} parent=5 // pred_region
        %s307 = ssub.s32 %s21, 1
        // Predicated region
        $region45: #{tpu_custom_call.1} parent=43 // pred_check
          %p308 = pneg %p54
        $region46: #{tpu_custom_call.1} parent=43 // pred_check_branch
          %310 = sbr.rel (%p308) target = $region48
        $region47: #{tpu_custom_call.1} parent=43 // pred_region
          %311 = dma.done [#allocation4], 256
        $region48: #{tpu_custom_call.1} parent=43 // pred_fallthru
          _
        // Predicated region
        $region49: #{tpu_custom_call.1} parent=43 // pred_check
          %p312 = pneg %p75
        $region50: #{tpu_custom_call.1} parent=43 // pred_check_branch
          %314 = sbr.rel (%p312) target = $region52
        $region51: #{tpu_custom_call.1} parent=43 // pred_region
          %315 = dma.done [#allocation6], 256
        $region52: #{tpu_custom_call.1} parent=43 // pred_fallthru
          _
        // Predicated region
        $region53: #{tpu_custom_call.1} parent=43 // pred_check
          %p316 = pneg %p96
        $region54: #{tpu_custom_call.1} parent=43 // pred_check_branch
          %318 = sbr.rel (%p316) target = $region56
        $region55: #{tpu_custom_call.1} parent=43 // pred_region
          %319 = dma.done [#allocation9], 16
        $region56: #{tpu_custom_call.1} parent=43 // pred_fallthru
          _
        %s320 = sand.u32 %s26, 1
        %s321 = scalar_lea.sflag [#allocation11], %s320
        %s322 = sand.u32 %s111, 1
        %s323 = smul.addr %s322, 1680
        %s324 = scalar_lea.vmem [#allocation10], %s323
        // Predicated region
        $region57: #{tpu_custom_call.1} parent=43 // pred_check
          %p325 = pneg %p124
        $region58: #{tpu_custom_call.1} parent=43 // pred_check_branch
          %327 = sbr.rel (%p325) target = $region60
        $region59: #{tpu_custom_call.1} parent=43 // pred_region
          %328 = dma.done %s321, 26880
        $region60: #{tpu_custom_call.1} parent=43 // pred_fallthru
          _
        %s329 = sand.u32 %s26, 1
        %s330 = scalar_lea.sflag [#allocation11], %s329
        %s331 = sand.u32 %s137, 1
        %s332 = scalar_lea.vmem [#allocation12], %s331
        // Predicated region
        $region61: #{tpu_custom_call.1} parent=43 // pred_check
          %p333 = pneg %p150
        $region62: #{tpu_custom_call.1} parent=43 // pred_check_branch
          %335 = sbr.rel (%p333) target = $region64
        $region63: #{tpu_custom_call.1} parent=43 // pred_region
          %336 = dma.done %s330, 16
        $region64: #{tpu_custom_call.1} parent=43 // pred_fallthru
          _
        %337 = sfence
        %p338 = pneg %p54
        %p339 = pneg %p51
        %p340 = pneg %p75
        %p341 = pneg %p72
        %p342 = pneg %p96
        %p343 = pneg %p93
        %s344 = sand.u32 %s26, 1
        %s345 = scalar_lea.sflag [#allocation11], %s344
        %s346 = sand.u32 %s111, 1
        %s347 = smul.addr %s346, 1680
        %s348 = scalar_lea.vmem [#allocation10], %s347
        %p349 = pneg %p124
        %p350 = pneg %p121
        %s351 = sand.u32 %s26, 1
        %s352 = scalar_lea.sflag [#allocation11], %s351
        %s353 = sand.u32 %s137, 1
        %s354 = scalar_lea.vmem [#allocation12], %s353
        %p355 = pneg %p150
        %p356 = pneg %p147
        %s357 = smul.u32 16, %s30
        %p358 = scmp.lt.s32.totalorder %s357, 31
        %s359 = scalar_select %p358, %s357, 31
        %s360 = smul.addr %s359, 8
        %s361 = scalar_lea.vmem %s5, %s360
        %p362 = pneg %p176
        %p363 = pneg %p173
        %p364 = pneg %p202
        %p365 = pneg %p199
        %s366 = sand.u32 %s189, 1
        %s367 = scalar_lea.sflag [#allocation5], %s366
        %s368 = sand.u32 %s189, 1
        %s369 = smul.addr %s368, 2
        %s370 = scalar_lea.vmem [#allocation13], %s369
        %s371 = smul.u32 4, %s31
        %s372 = smul.u32 16, %s30
        %p373 = scmp.lt.s32.totalorder %s372, 31
        %s374 = scalar_select %p373, %s372, 31
        %s375 = smul.addr %s374, 8
        %s376 = scalar_lea.vmem %s5, %s375
        %s377 = smul.u32 16, %s30
        %p379 = scmp.eq.s32.totalorder %s31, 0
        // Predicated region
        $region65: #{tpu_custom_call.1} parent=43 // pred_check
          %p380 = pneg %p379
        $region66: #{tpu_custom_call.1} parent=43 // pred_check_branch
          %382 = sbr.rel (%p380) target = $region68
        $region67: #{tpu_custom_call.1} parent=43 // pred_region
          %383 = vst [vmem:[#allocation2] sm:$0x3] 0.0
        $region68: #{tpu_custom_call.1} parent=43 // pred_fallthru
          _
        %v384 = vld [vmem:[#allocation3] sm:$0xff]
        %v385 = vld [vmem:[#allocation3 + $0x8] sm:$0xff]
        %s386 = smul.u32 %s31, 4
        %s387 = sld [smem:[#allocation8 + %s386]]
        %v388 = vstv %s387
        %s389 = smul.u32 %s386, 128
        %s390 = sld [smem:[#allocation7 + %s389]]
        %v391 = vstv %s390
        %v392 = vmul.f32 %v384, %v391
        %v393 = vmul.f32 %v385, %v391
        %v394 = vadd.f32 %v388, %v392
        %v395 = vadd.f32 %v388, %v393
        %s396 = sadd.s32 %s389, 1
        %s397 = sld [smem:[#allocation7 + %s396]]
        %v398 = vstv %s397
        %v399 = vmul.f32 %v384, %v398
        %v400 = vmul.f32 %v385, %v398
        %403 = vrot.lane.b32.xlu0 %v399, 127
        %v404 = vpop.permute.xlu0 %403
        %405 = vrot.lane.b32.xlu0 %v400, 127
        %v406 = vpop.permute.xlu0 %405
        %v407 = vrot.slane %v404, 2
        %v408 = vrot.slane %v406, 2
        %vm409 = vcmask 1045504
        %v410 = vsel %vm409, %v407, %v408
        %vm411 = vcmask 1039360
        %v412 = vsel %vm411, %v404, %v410
        %v413 = vsel %vm411, %v406, %v408
        %v416 = vadd.f32 %v394, %v412
        %v417 = vadd.f32 %v395, %v413
        %s418 = sadd.s32 %s389, 2
        %s419 = sld [smem:[#allocation7 + %s418]]
        %v420 = vstv %s419
        %v421 = vmul.f32 %v384, %v420
        %v422 = vmul.f32 %v385, %v420
        %425 = vrot.lane.b32.xlu0 %v421, 126
        %v426 = vpop.permute.xlu0 %425
        %427 = vrot.lane.b32.xlu0 %v422, 126
        %v428 = vpop.permute.xlu0 %427
        %v429 = vrot.slane %v426, 2
        %v430 = vrot.slane %v428, 2
        %v431 = vsel %vm409, %v429, %v430
        %vm432 = vcmask 1031168
        %v433 = vsel %vm432, %v426, %v431
        %v434 = vsel %vm432, %v428, %v430
        %v437 = vadd.f32 %v416, %v433
        %v438 = vadd.f32 %v417, %v434
        %s439 = sadd.s32 %s389, 3
        %s440 = sld [smem:[#allocation7 + %s439]]
        %v441 = vstv %s440
        %v442 = vmul.f32 %v384, %v441
        %v443 = vmul.f32 %v385, %v441
        %446 = vrot.lane.b32.xlu0 %v442, 98
        %v447 = vpop.permute.xlu0 %446
        %448 = vrot.lane.b32.xlu0 %v443, 98
        %v449 = vpop.permute.xlu0 %448
        %v450 = vrot.slane %v447, 2
        %v451 = vrot.slane %v449, 2
        %v452 = vsel %vm409, %v450, %v451
        %vm453 = vcmask 801792
        %v454 = vsel %vm453, %v447, %v452
        %v455 = vsel %vm453, %v449, %v451
        %v458 = vadd.f32 %v437, %v454
        %v459 = vadd.f32 %v438, %v455
        %s460 = sadd.s32 %s389, 4
        %s461 = sld [smem:[#allocation7 + %s460]]
        %v462 = vstv %s461
        %v463 = vmul.f32 %v384, %v462
        %v464 = vmul.f32 %v385, %v462
        %467 = vrot.lane.b32.xlu0 %v463, 97
        %v468 = vpop.permute.xlu0 %467
        %469 = vrot.lane.b32.xlu0 %v464, 97
        %v470 = vpop.permute.xlu0 %469
        %v471 = vrot.slane %v468, 2
        %v472 = vrot.slane %v470, 2
        %v473 = vsel %vm409, %v471, %v472
        %vm474 = vcmask 793600
        %v475 = vsel %vm474, %v468, %v473
        %v476 = vsel %vm474, %v470, %v472
        %v479 = vadd.f32 %v458, %v475
        %v480 = vadd.f32 %v459, %v476
        %s481 = sadd.s32 %s389, 5
        %s482 = sld [smem:[#allocation7 + %s481]]
        %v483 = vstv %s482
        %v484 = vmul.f32 %v384, %v483
        %v485 = vmul.f32 %v385, %v483
        %488 = vrot.lane.b32.xlu0 %v484, 96
        %v489 = vpop.permute.xlu0 %488
        %490 = vrot.lane.b32.xlu0 %v485, 96
        %v491 = vpop.permute.xlu0 %490
        %v492 = vrot.slane %v489, 2
        %v493 = vrot.slane %v491, 2
        %v494 = vsel %vm409, %v492, %v493
        %vm495 = vcmask 785408
        %v496 = vsel %vm495, %v489, %v494
        %v497 = vsel %vm495, %v491, %v493
        %v500 = vadd.f32 %v479, %v496
        %v501 = vadd.f32 %v480, %v497
        %s502 = sadd.s32 %s389, 6
        %s503 = sld [smem:[#allocation7 + %s502]]
        %v504 = vstv %s503
        %v505 = vmul.f32 %v384, %v504
        %v506 = vmul.f32 %v385, %v504
        %509 = vrot.lane.b32.xlu0 %v505, 68
        %v510 = vpop.permute.xlu0 %509
        %511 = vrot.lane.b32.xlu0 %v506, 68
        %v512 = vpop.permute.xlu0 %511
        %v513 = vrot.slane %v510, 2
        %v514 = vrot.slane %v512, 2
        %v515 = vsel %vm409, %v513, %v514
        %vm516 = vcmask 556032
        %v517 = vsel %vm516, %v510, %v515
        %v518 = vsel %vm516, %v512, %v514
        %v521 = vadd.f32 %v500, %v517
        %v522 = vadd.f32 %v501, %v518
        %s523 = sadd.s32 %s389, 7
        %s524 = sld [smem:[#allocation7 + %s523]]
        %v525 = vstv %s524
        %v526 = vmul.f32 %v384, %v525
        %v527 = vmul.f32 %v385, %v525
        %530 = vrot.lane.b32.xlu0 %v526, 67
        %v531 = vpop.permute.xlu0 %530
        %532 = vrot.lane.b32.xlu0 %v527, 67
        %v533 = vpop.permute.xlu0 %532
        %v534 = vrot.slane %v531, 2
        %v535 = vrot.slane %v533, 2
        %v536 = vsel %vm409, %v534, %v535
        %vm537 = vcmask 547840
        %v538 = vsel %vm537, %v531, %v536
        %v539 = vsel %vm537, %v533, %v535
        %v542 = vadd.f32 %v521, %v538
        %v543 = vadd.f32 %v522, %v539
        %s544 = sadd.s32 %s389, 8
        %s545 = sld [smem:[#allocation7 + %s544]]
        %v546 = vstv %s545
        %v547 = vmul.f32 %v384, %v546
        %v548 = vmul.f32 %v385, %v546
        %551 = vrot.lane.b32.xlu0 %v547, 66
        %v552 = vpop.permute.xlu0 %551
        %553 = vrot.lane.b32.xlu0 %v548, 66
        %v554 = vpop.permute.xlu0 %553
        %v555 = vrot.slane %v552, 2
        %v556 = vrot.slane %v554, 2
        %v557 = vsel %vm409, %v555, %v556
        %vm558 = vcmask 539648
        %v559 = vsel %vm558, %v552, %v557
        %v560 = vsel %vm558, %v554, %v556
        %v563 = vadd.f32 %v542, %v559
        %v564 = vadd.f32 %v543, %v560
        %v565 = vmax.f32 %v563, 0.0
        %v566 = vmax.f32 %v564, 0.0
        %v569 = vcombine.high %v565, %v565
        %v571 = vunpack.c.l.s4 1983009808
        %v572 = vunpack.c.0.s8 %v571
        %v573 = vlaneseq
        %v574 = vshrl.u32 %v573, 7
        %v575 = vsub.s32 %v572, %v574
        %v576 = vrot.slane %v565, %v575
        %v578 = vunpack.c.l.s4 1983009808
        %v579 = vunpack.c.0.s8 %v578
        %v580 = vlaneseq
        %v581 = vshrl.u32 %v580, 7
        %v582 = vsub.s32 %v579, %v581
        %v583 = vrot.slane %v569, %v582
        %v584 = vcombine.high %v576, %v576
        %v585 = vcombine.high %v583, %v583
        %v586 = vcombine.high %v566, %v566
        %v588 = vunpack.c.l.s4 1983009808
        %v589 = vunpack.c.0.s8 %v588
        %v590 = vlaneseq
        %v591 = vshrl.u32 %v590, 7
        %v592 = vsub.s32 %v589, %v591
        %v593 = vrot.slane %v566, %v592
        %v595 = vunpack.c.l.s4 1983009808
        %v596 = vunpack.c.0.s8 %v595
        %v597 = vlaneseq
        %v598 = vshrl.u32 %v597, 7
        %v599 = vsub.s32 %v596, %v598
        %v600 = vrot.slane %v586, %v599
        %v601 = vcombine.high %v593, %v593
        %v609 = vpack.c.bf16 %v576, %v576
        %v610 = vpack.c.bf16 %v584, %v584
        %v611 = vpack.c.bf16 %v583, %v583
        %v612 = vpack.c.bf16 %v585, %v585
        %v613 = vpack.c.bf16 %v593, %v593
        %v614 = vpack.c.bf16 %v601, %v601
        %v615 = vpack.c.bf16 %v600, %v600
        %v616 = vld [vmem:[#allocation2] sm:$0x3]
        %v617 = vld [vmem:[%s324] sm:$0xf]
        %v618 = vld [vmem:[%s324 + $0x4] sm:$0xf]
        %v619 = vld [vmem:[%s324 + $0x8] sm:$0xf]
        %v620 = vld [vmem:[%s324 + $0xc] sm:$0xf]
        %v621 = vld [vmem:[%s324 + $0x10] sm:$0xf]
        %v622 = vld [vmem:[%s324 + $0x14] sm:$0xf]
        %v623 = vld [vmem:[%s324 + $0x18] sm:$0xf]
        %v624 = vld [vmem:[%s324 + $0x1c] sm:$0xf]
        %v625 = vld [vmem:[%s324 + $0x20] sm:$0xf]
        %v626 = vld [vmem:[%s324 + $0x24] sm:$0xf]
        %v627 = vld [vmem:[%s324 + $0x28] sm:$0xf]
        %v628 = vld [vmem:[%s324 + $0x2c] sm:$0xf]
        %v629 = vld [vmem:[%s324 + $0x30] sm:$0xf]
        %v630 = vld [vmem:[%s324 + $0x34] sm:$0xf]
        %v631 = vld [vmem:[%s324 + $0x38] sm:$0xf]
        %v632 = vld [vmem:[%s324 + $0x3c] sm:$0xf]
        %v633 = vld [vmem:[%s324 + $0x40] sm:$0xf]
        %v634 = vld [vmem:[%s324 + $0x44] sm:$0xf]
        %v635 = vld [vmem:[%s324 + $0x48] sm:$0xf]
        %v636 = vld [vmem:[%s324 + $0x4c] sm:$0xf]
        %v637 = vld [vmem:[%s324 + $0x50] sm:$0xf]
        %v638 = vld [vmem:[%s324 + $0x54] sm:$0xf]
        %v639 = vld [vmem:[%s324 + $0x58] sm:$0xf]
        %v640 = vld [vmem:[%s324 + $0x5c] sm:$0xf]
        %v641 = vld [vmem:[%s324 + $0x60] sm:$0xf]
        %v642 = vld [vmem:[%s324 + $0x64] sm:$0xf]
        %v643 = vld [vmem:[%s324 + $0x68] sm:$0xf]
        %v644 = vld [vmem:[%s324 + $0x6c] sm:$0xf]
        %v645 = vld [vmem:[%s324 + $0x70] sm:$0xf]
        %v646 = vld [vmem:[%s324 + $0x74] sm:$0xf]
        %v647 = vld [vmem:[%s324 + $0x78] sm:$0xf]
        %v648 = vld [vmem:[%s324 + $0x7c] sm:$0xf]
        %v649 = vld [vmem:[%s324 + $0x80] sm:$0xf]
        %v650 = vld [vmem:[%s324 + $0x84] sm:$0xf]
        %v651 = vld [vmem:[%s324 + $0x88] sm:$0xf]
        %v652 = vld [vmem:[%s324 + $0x8c] sm:$0xf]
        %v653 = vld [vmem:[%s324 + $0x90] sm:$0xf]
        %v654 = vld [vmem:[%s324 + $0x94] sm:$0xf]
        %v655 = vld [vmem:[%s324 + $0x98] sm:$0xf]
        %v656 = vld [vmem:[%s324 + $0x9c] sm:$0xf]
        %v657 = vld [vmem:[%s324 + $0xa0] sm:$0xf]
        %v658 = vld [vmem:[%s324 + $0xa4] sm:$0xf]
        %v659 = vld [vmem:[%s324 + $0xa8] sm:$0xf]
        %v660 = vld [vmem:[%s324 + $0xac] sm:$0xf]
        %v661 = vld [vmem:[%s324 + $0xb0] sm:$0xf]
        %v662 = vld [vmem:[%s324 + $0xb4] sm:$0xf]
        %v663 = vld [vmem:[%s324 + $0xb8] sm:$0xf]
        %v664 = vld [vmem:[%s324 + $0xbc] sm:$0xf]
        %v665 = vld [vmem:[%s324 + $0xc0] sm:$0xf]
        %v666 = vld [vmem:[%s324 + $0xc4] sm:$0xf]
        %v667 = vld [vmem:[%s324 + $0xc8] sm:$0xf]
        %v668 = vld [vmem:[%s324 + $0xcc] sm:$0xf]
        %v669 = vld [vmem:[%s324 + $0xd0] sm:$0xf]
        %v670 = vld [vmem:[%s324 + $0xd4] sm:$0xf]
        %v671 = vld [vmem:[%s324 + $0xd8] sm:$0xf]
        %v672 = vld [vmem:[%s324 + $0xdc] sm:$0xf]
        %v673 = vld [vmem:[%s324 + $0xe0] sm:$0xf]
        %v674 = vld [vmem:[%s324 + $0xe4] sm:$0xf]
        %v675 = vld [vmem:[%s324 + $0xe8] sm:$0xf]
        %v676 = vld [vmem:[%s324 + $0xec] sm:$0xf]
        %v677 = vld [vmem:[%s324 + $0xf0] sm:$0xf]
        %v678 = vld [vmem:[%s324 + $0xf4] sm:$0xf]
        %v679 = vld [vmem:[%s324 + $0xf8] sm:$0xf]
        %v680 = vld [vmem:[%s324 + $0xfc] sm:$0xf]
        %v681 = vld [vmem:[%s324 + $0x100] sm:$0xf]
        %v682 = vld [vmem:[%s324 + $0x104] sm:$0xf]
        %v683 = vld [vmem:[%s324 + $0x108] sm:$0xf]
        %v684 = vld [vmem:[%s324 + $0x10c] sm:$0xf]
        %v685 = vld [vmem:[%s324 + $0x110] sm:$0xf]
        %v686 = vld [vmem:[%s324 + $0x114] sm:$0xf]
        %v687 = vld [vmem:[%s324 + $0x118] sm:$0xf]
        %v688 = vld [vmem:[%s324 + $0x11c] sm:$0xf]
        %v689 = vld [vmem:[%s324 + $0x120] sm:$0xf]
        %v690 = vld [vmem:[%s324 + $0x124] sm:$0xf]
        %v691 = vld [vmem:[%s324 + $0x128] sm:$0xf]
        %v692 = vld [vmem:[%s324 + $0x12c] sm:$0xf]
        %v693 = vld [vmem:[%s324 + $0x130] sm:$0xf]
        %v694 = vld [vmem:[%s324 + $0x134] sm:$0xf]
        %v695 = vld [vmem:[%s324 + $0x138] sm:$0xf]
        %v696 = vld [vmem:[%s324 + $0x13c] sm:$0xf]
        %v697 = vld [vmem:[%s324 + $0x140] sm:$0xf]
        %v698 = vld [vmem:[%s324 + $0x144] sm:$0xf]
        %v699 = vld [vmem:[%s324 + $0x148] sm:$0xf]
        %v700 = vld [vmem:[%s324 + $0x14c] sm:$0xf]
        %v701 = vld [vmem:[%s324 + $0x150] sm:$0xf]
        %v702 = vld [vmem:[%s324 + $0x154] sm:$0xf]
        %v703 = vld [vmem:[%s324 + $0x158] sm:$0xf]
        %v704 = vld [vmem:[%s324 + $0x15c] sm:$0xf]
        %v705 = vld [vmem:[%s324 + $0x160] sm:$0xf]
        %v706 = vld [vmem:[%s324 + $0x164] sm:$0xf]
        %v707 = vld [vmem:[%s324 + $0x168] sm:$0xf]
        %v708 = vld [vmem:[%s324 + $0x16c] sm:$0xf]
        %v709 = vld [vmem:[%s324 + $0x170] sm:$0xf]
        %v710 = vld [vmem:[%s324 + $0x174] sm:$0xf]
        %v711 = vld [vmem:[%s324 + $0x178] sm:$0xf]
        %v712 = vld [vmem:[%s324 + $0x17c] sm:$0xf]
        %v713 = vld [vmem:[%s324 + $0x180] sm:$0xf]
        %v714 = vld [vmem:[%s324 + $0x184] sm:$0xf]
        %v715 = vld [vmem:[%s324 + $0x188] sm:$0xf]
        %v716 = vld [vmem:[%s324 + $0x18c] sm:$0xf]
        %v717 = vld [vmem:[%s324 + $0x190] sm:$0xf]
        %v718 = vld [vmem:[%s324 + $0x194] sm:$0xf]
        %v719 = vld [vmem:[%s324 + $0x198] sm:$0xf]
        %v720 = vld [vmem:[%s324 + $0x19c] sm:$0xf]
        %v721 = vld [vmem:[%s324 + $0x1a0] sm:$0xf]
        %v827 = vunpack.c.l.b16 %v617
        %v828 = vunpack.c.l.b16 %v618
        %v829 = vunpack.c.l.b16 %v619
        %v830 = vunpack.c.l.b16 %v620
        %v831 = vunpack.c.l.b16 %v621
        %v832 = vunpack.c.l.b16 %v622
        %v833 = vunpack.c.l.b16 %v623
        %v834 = vunpack.c.l.b16 %v624
        %v835 = vunpack.c.l.b16 %v625
        %v836 = vunpack.c.l.b16 %v626
        %v837 = vunpack.c.l.b16 %v627
        %v838 = vunpack.c.l.b16 %v628
        %v839 = vunpack.c.l.b16 %v629
        %v840 = vunpack.c.l.b16 %v630
        %v841 = vunpack.c.l.b16 %v631
        %v842 = vunpack.c.l.b16 %v632
        %v843 = vunpack.c.l.b16 %v633
        %v844 = vunpack.c.l.b16 %v634
        %v845 = vunpack.c.l.b16 %v635
        %v846 = vunpack.c.l.b16 %v636
        %v847 = vunpack.c.l.b16 %v637
        %v848 = vunpack.c.l.b16 %v638
        %v849 = vunpack.c.l.b16 %v639
        %v850 = vunpack.c.l.b16 %v640
        %v851 = vunpack.c.l.b16 %v641
        %v852 = vunpack.c.l.b16 %v642
        %v853 = vunpack.c.l.b16 %v643
        %v854 = vunpack.c.l.b16 %v644
        %v855 = vunpack.c.l.b16 %v645
        %v856 = vunpack.c.l.b16 %v646
        %v857 = vunpack.c.l.b16 %v647
        %v858 = vunpack.c.l.b16 %v648
        %v859 = vunpack.c.l.b16 %v649
        %v860 = vunpack.c.l.b16 %v650
        %v861 = vunpack.c.l.b16 %v651
        %v862 = vunpack.c.l.b16 %v652
        %v863 = vunpack.c.l.b16 %v653
        %v864 = vunpack.c.l.b16 %v654
        %v865 = vunpack.c.l.b16 %v655
        %v866 = vunpack.c.l.b16 %v656
        %v867 = vunpack.c.l.b16 %v657
        %v868 = vunpack.c.l.b16 %v658
        %v869 = vunpack.c.l.b16 %v659
        %v870 = vunpack.c.l.b16 %v660
        %v871 = vunpack.c.l.b16 %v661
        %v872 = vunpack.c.l.b16 %v662
        %v873 = vunpack.c.l.b16 %v663
        %v874 = vunpack.c.l.b16 %v664
        %v875 = vunpack.c.l.b16 %v665
        %v876 = vunpack.c.l.b16 %v666
        %v877 = vunpack.c.l.b16 %v667
        %v878 = vunpack.c.l.b16 %v668
        %v879 = vunpack.c.l.b16 %v669
        %v880 = vunpack.c.l.b16 %v670
        %v881 = vunpack.c.l.b16 %v671
        %v882 = vunpack.c.l.b16 %v672
        %v883 = vunpack.c.l.b16 %v673
        %v884 = vunpack.c.l.b16 %v674
        %v885 = vunpack.c.l.b16 %v675
        %v886 = vunpack.c.l.b16 %v676
        %v887 = vunpack.c.l.b16 %v677
        %v888 = vunpack.c.l.b16 %v678
        %v889 = vunpack.c.l.b16 %v679
        %v890 = vunpack.c.l.b16 %v680
        %v891 = vunpack.c.l.b16 %v681
        %v892 = vunpack.c.l.b16 %v682
        %v893 = vunpack.c.l.b16 %v683
        %v894 = vunpack.c.l.b16 %v684
        %v895 = vunpack.c.l.b16 %v685
        %v896 = vunpack.c.l.b16 %v686
        %v897 = vunpack.c.l.b16 %v687
        %v898 = vunpack.c.l.b16 %v688
        %v899 = vunpack.c.l.b16 %v689
        %v900 = vunpack.c.l.b16 %v690
        %v901 = vunpack.c.l.b16 %v691
        %v902 = vunpack.c.l.b16 %v692
        %v903 = vunpack.c.l.b16 %v693
        %v904 = vunpack.c.l.b16 %v694
        %v905 = vunpack.c.l.b16 %v695
        %v906 = vunpack.c.l.b16 %v696
        %v907 = vunpack.c.l.b16 %v697
        %v908 = vunpack.c.l.b16 %v698
        %v909 = vunpack.c.l.b16 %v699
        %v910 = vunpack.c.l.b16 %v700
        %v911 = vunpack.c.l.b16 %v701
        %v912 = vunpack.c.l.b16 %v702
        %v913 = vunpack.c.l.b16 %v703
        %v914 = vunpack.c.l.b16 %v704
        %v915 = vunpack.c.l.b16 %v705
        %v916 = vunpack.c.l.b16 %v706
        %v917 = vunpack.c.l.b16 %v707
        %v918 = vunpack.c.l.b16 %v708
        %v919 = vunpack.c.l.b16 %v709
        %v920 = vunpack.c.l.b16 %v710
        %v921 = vunpack.c.l.b16 %v711
        %v922 = vunpack.c.l.b16 %v712
        %v923 = vunpack.c.l.b16 %v713
        %v924 = vunpack.c.l.b16 %v714
        %v925 = vunpack.c.l.b16 %v715
        %v926 = vunpack.c.l.b16 %v716
        %v927 = vunpack.c.l.b16 %v717
        %v928 = vunpack.c.l.b16 %v718
        %v929 = vunpack.c.l.b16 %v719
        %v930 = vunpack.c.l.b16 %v720
        %v931 = vunpack.c.l.b16 %v721
        %v932 = vpack.c.b16 %v828, %v827
        %v933 = vpack.c.b16 %v830, %v829
        %v934 = vpack.c.b16 %v832, %v831
        %v935 = vpack.c.b16 %v834, %v833
        %v936 = vpack.c.b16 %v836, %v835
        %v937 = vpack.c.b16 %v838, %v837
        %v938 = vpack.c.b16 %v840, %v839
        %v939 = vpack.c.b16 %v842, %v841
        %v940 = vpack.c.b16 %v844, %v843
        %v941 = vpack.c.b16 %v846, %v845
        %v942 = vpack.c.b16 %v848, %v847
        %v943 = vpack.c.b16 %v850, %v849
        %v944 = vpack.c.b16 %v852, %v851
        %v945 = vpack.c.b16 %v854, %v853
        %v946 = vpack.c.b16 %v856, %v855
        %v947 = vpack.c.b16 %v858, %v857
        %v948 = vpack.c.b16 %v860, %v859
        %v949 = vpack.c.b16 %v862, %v861
        %v950 = vpack.c.b16 %v864, %v863
        %v951 = vpack.c.b16 %v866, %v865
        %v952 = vpack.c.b16 %v868, %v867
        %v953 = vpack.c.b16 %v870, %v869
        %v954 = vpack.c.b16 %v872, %v871
        %v955 = vpack.c.b16 %v874, %v873
        %v956 = vpack.c.b16 %v876, %v875
        %v957 = vpack.c.b16 %v878, %v877
        %v958 = vpack.c.b16 %v880, %v879
        %v959 = vpack.c.b16 %v882, %v881
        %v960 = vpack.c.b16 %v884, %v883
        %v961 = vpack.c.b16 %v886, %v885
        %v962 = vpack.c.b16 %v888, %v887
        %v963 = vpack.c.b16 %v890, %v889
        %v964 = vpack.c.b16 %v892, %v891
        %v965 = vpack.c.b16 %v894, %v893
        %v966 = vpack.c.b16 %v896, %v895
        %v967 = vpack.c.b16 %v898, %v897
        %v968 = vpack.c.b16 %v900, %v899
        %v969 = vpack.c.b16 %v902, %v901
        %v970 = vpack.c.b16 %v904, %v903
        %v971 = vpack.c.b16 %v906, %v905
        %v972 = vpack.c.b16 %v908, %v907
        %v973 = vpack.c.b16 %v910, %v909
        %v974 = vpack.c.b16 %v912, %v911
        %v975 = vpack.c.b16 %v914, %v913
        %v976 = vpack.c.b16 %v916, %v915
        %v977 = vpack.c.b16 %v918, %v917
        %v978 = vpack.c.b16 %v920, %v919
        %v979 = vpack.c.b16 %v922, %v921
        %v980 = vpack.c.b16 %v924, %v923
        %v981 = vpack.c.b16 %v926, %v925
        %v982 = vpack.c.b16 %v928, %v927
        %v983 = vpack.c.b16 %v930, %v929
        %v984 = vpack.c.b16 %v931, %v931
        %vm1037 = vcmask 588800
        %v1039 = vsel %vm1037, %v615, 0
        %vm1041 = vcmask 1043456
        %v1043 = vsel %vm1041, %v984, 0
        %1045 = vmatprep.subr.bf16.mxu0 0
        %1046 = vmatpush1.bf16.msra.mxu0 %v932
        %1047 = vmatprep.subr.bf16.mxu0 0
        %1048 = vmatpush1.bf16.msra.mxu0 %v933
        %1049 = vmatprep.subr.bf16.mxu0 0
        %1050 = vmatpush1.bf16.msra.mxu0 %v934
        %1051 = vmatprep.subr.bf16.mxu0 0
        %1052 = vmatpush1.bf16.msra.mxu0 %v935
        %1053 = vmatprep.subr.bf16.mxu0 0
        %1054 = vmatpush1.bf16.msra.mxu0 %v936
        %1055 = vmatprep.subr.bf16.mxu0 0
        %1056 = vmatpush1.bf16.msra.mxu0 %v937
        %1057 = vmatprep.subr.bf16.mxu0 0
        %1058 = vmatpush1.bf16.msra.mxu0 %v938
        %1059 = vmatprep.subr.bf16.mxu0 0
        %1060 = vmatpush1.bf16.msra.mxu0 %v939
        %1061 = vmatprep.subr.bf16.mxu0 0
        %1062 = vmatpush1.bf16.msra.mxu0 %v940
        %1063 = vmatprep.subr.bf16.mxu0 0
        %1064 = vmatpush1.bf16.msra.mxu0 %v941
        %1065 = vmatprep.subr.bf16.mxu0 0
        %1066 = vmatpush1.bf16.msra.mxu0 %v942
        %1067 = vmatprep.subr.bf16.mxu0 0
        %1068 = vmatpush1.bf16.msra.mxu0 %v943
        %1069 = vmatprep.subr.bf16.mxu0 0
        %1070 = vmatpush1.bf16.msra.mxu0 %v944
        %1071 = vmatprep.subr.bf16.mxu0 0
        %1072 = vmatpush1.bf16.msra.mxu0 %v945
        %1073 = vmatprep.subr.bf16.mxu0 0
        %1074 = vmatpush1.bf16.msra.mxu0 %v946
        %1075 = vmatprep.subr.bf16.mxu0 0
        %1076 = vmatpush1.bf16.msra.mxu0 %v947
        %1077 = vmatprep.mubr.bf16.mxu0 %v610
        %1078 = vmatmul.mubr.bf16.gmra.mrb[0].mxu0 %v609
        %v1079 = vpop.f32.mrb[0].mxu0
        %v1080 = vadd.f32 0.0, %v1079
        %v1081 = vpop.f32.mrb[0].mxu0
        %v1082 = vpop.f32.mrb[0].mxu0
        %v1083 = vpop.f32.mrb[0].mxu0
        %1084 = vdwg.mxu0
        %1085 = vmatprep.subr.bf16.mxu0 0
        %1086 = vmatpush1.bf16.msra.mxu0 %v948
        %1087 = vmatprep.subr.bf16.mxu0 0
        %1088 = vmatpush1.bf16.msra.mxu0 %v949
        %1089 = vmatprep.subr.bf16.mxu0 0
        %1090 = vmatpush1.bf16.msra.mxu0 %v950
        %1091 = vmatprep.subr.bf16.mxu0 0
        %1092 = vmatpush1.bf16.msra.mxu0 %v951
        %1093 = vmatprep.subr.bf16.mxu0 0
        %1094 = vmatpush1.bf16.msra.mxu0 %v952
        %1095 = vmatprep.subr.bf16.mxu0 0
        %1096 = vmatpush1.bf16.msra.mxu0 %v953
        %1097 = vmatprep.subr.bf16.mxu0 0
        %1098 = vmatpush1.bf16.msra.mxu0 %v954
        %1099 = vmatprep.subr.bf16.mxu0 0
        %1100 = vmatpush1.bf16.msra.mxu0 %v955
        %1101 = vmatprep.subr.bf16.mxu0 0
        %1102 = vmatpush1.bf16.msra.mxu0 %v956
        %1103 = vmatprep.subr.bf16.mxu0 0
        %1104 = vmatpush1.bf16.msra.mxu0 %v957
        %1105 = vmatprep.subr.bf16.mxu0 0
        %1106 = vmatpush1.bf16.msra.mxu0 %v958
        %1107 = vmatprep.subr.bf16.mxu0 0
        %1108 = vmatpush1.bf16.msra.mxu0 %v959
        %1109 = vmatprep.subr.bf16.mxu0 0
        %1110 = vmatpush1.bf16.msra.mxu0 %v960
        %1111 = vmatprep.subr.bf16.mxu0 0
        %1112 = vmatpush1.bf16.msra.mxu0 %v961
        %1113 = vmatprep.subr.bf16.mxu0 0
        %1114 = vmatpush1.bf16.msra.mxu0 %v962
        %1115 = vmatprep.subr.bf16.mxu0 0
        %1116 = vmatpush1.bf16.msra.mxu0 %v963
        %1117 = vmatprep.mubr.bf16.mxu0 %v612
        %1118 = vmatmul.mubr.bf16.gmra.mrb[0].mxu0 %v611
        %v1119 = vpop.f32.mrb[0].mxu0
        %v1120 = vadd.f32 %v1080, %v1119
        %v1121 = vpop.f32.mrb[0].mxu0
        %v1122 = vpop.f32.mrb[0].mxu0
        %v1123 = vpop.f32.mrb[0].mxu0
        %1124 = vdwg.mxu0
        %1125 = vmatprep.subr.bf16.mxu0 0
        %1126 = vmatpush1.bf16.msra.mxu0 %v964
        %1127 = vmatprep.subr.bf16.mxu0 0
        %1128 = vmatpush1.bf16.msra.mxu0 %v965
        %1129 = vmatprep.subr.bf16.mxu0 0
        %1130 = vmatpush1.bf16.msra.mxu0 %v966
        %1131 = vmatprep.subr.bf16.mxu0 0
        %1132 = vmatpush1.bf16.msra.mxu0 %v967
        %1133 = vmatprep.subr.bf16.mxu0 0
        %1134 = vmatpush1.bf16.msra.mxu0 %v968
        %1135 = vmatprep.subr.bf16.mxu0 0
        %1136 = vmatpush1.bf16.msra.mxu0 %v969
        %1137 = vmatprep.subr.bf16.mxu0 0
        %1138 = vmatpush1.bf16.msra.mxu0 %v970
        %1139 = vmatprep.subr.bf16.mxu0 0
        %1140 = vmatpush1.bf16.msra.mxu0 %v971
        %1141 = vmatprep.subr.bf16.mxu0 0
        %1142 = vmatpush1.bf16.msra.mxu0 %v972
        %1143 = vmatprep.subr.bf16.mxu0 0
        %1144 = vmatpush1.bf16.msra.mxu0 %v973
        %1145 = vmatprep.subr.bf16.mxu0 0
        %1146 = vmatpush1.bf16.msra.mxu0 %v974
        %1147 = vmatprep.subr.bf16.mxu0 0
        %1148 = vmatpush1.bf16.msra.mxu0 %v975
        %1149 = vmatprep.subr.bf16.mxu0 0
        %1150 = vmatpush1.bf16.msra.mxu0 %v976
        %1151 = vmatprep.subr.bf16.mxu0 0
        %1152 = vmatpush1.bf16.msra.mxu0 %v977
        %1153 = vmatprep.subr.bf16.mxu0 0
        %1154 = vmatpush1.bf16.msra.mxu0 %v978
        %1155 = vmatprep.subr.bf16.mxu0 0
        %1156 = vmatpush1.bf16.msra.mxu0 %v979
        %1157 = vmatprep.mubr.bf16.mxu0 %v614
        %1158 = vmatmul.mubr.bf16.gmra.mrb[0].mxu0 %v613
        %v1159 = vpop.f32.mrb[0].mxu0
        %v1160 = vadd.f32 %v1120, %v1159
        %v1161 = vpop.f32.mrb[0].mxu0
        %v1162 = vpop.f32.mrb[0].mxu0
        %v1163 = vpop.f32.mrb[0].mxu0
        %1164 = vdwg.mxu0
        %1165 = vmatprep.subr.bf16.mxu0 0
        %1166 = vmatpush1.bf16.msra.mxu0 %v980
        %1167 = vmatprep.subr.bf16.mxu0 0
        %1168 = vmatpush1.bf16.msra.mxu0 %v981
        %1169 = vmatprep.subr.bf16.mxu0 0
        %1170 = vmatpush1.bf16.msra.mxu0 %v982
        %1171 = vmatprep.subr.bf16.mxu0 0
        %1172 = vmatpush1.bf16.msra.mxu0 %v983
        %1173 = vmatprep.subr.bf16.mxu0 0
        %1174 = vmatpush1.bf16.msra.mxu0 %v1043
        %1175 = vmatprep.subr.bf16.mxu0 0
        %1176 = vmatpush1.bf16.msra.mxu0 0
        %1177 = vmatprep.subr.bf16.mxu0 0
        %1178 = vmatpush1.bf16.msra.mxu0 0
        %1179 = vmatprep.subr.bf16.mxu0 0
        %1180 = vmatpush1.bf16.msra.mxu0 0
        %1181 = vmatprep.subr.bf16.mxu0 0
        %1182 = vmatpush1.bf16.msra.mxu0 0
        %1183 = vmatprep.subr.bf16.mxu0 0
        %1184 = vmatpush1.bf16.msra.mxu0 0
        %1185 = vmatprep.subr.bf16.mxu0 0
        %1186 = vmatpush1.bf16.msra.mxu0 0
        %1187 = vmatprep.subr.bf16.mxu0 0
        %1188 = vmatpush1.bf16.msra.mxu0 0
        %1189 = vmatprep.subr.bf16.mxu0 0
        %1190 = vmatpush1.bf16.msra.mxu0 0
        %1191 = vmatprep.subr.bf16.mxu0 0
        %1192 = vmatpush1.bf16.msra.mxu0 0
        %1193 = vmatprep.subr.bf16.mxu0 0
        %1194 = vmatpush1.bf16.msra.mxu0 0
        %1195 = vmatprep.subr.bf16.mxu0 0
        %1196 = vmatpush1.bf16.msra.mxu0 0
        %1197 = vmatprep.mubr.bf16.mxu0 0
        %1198 = vmatmul.mubr.bf16.gmra.mrb[0].mxu0 %v1039
        %v1199 = vpop.f32.mrb[0].mxu0
        %v1200 = vadd.f32 %v1160, %v1199
        %v1201 = vpop.f32.mrb[0].mxu0
        %v1202 = vpop.f32.mrb[0].mxu0
        %v1203 = vpop.f32.mrb[0].mxu0
        %1204 = vdwg.mxu0
        %v1205 = vadd.f32 %v616, %v1200
        %1206 = vst [vmem:[#allocation2] sm:$0x3] %v1205
        %s1207 = sadd.s32 %s386, 1
        %s1208 = sld [smem:[#allocation8 + %s1207]]
        %v1209 = vstv %s1208
        %s1210 = smul.u32 %s1207, 128
        %s1211 = sld [smem:[#allocation7 + %s1210]]
        %v1212 = vstv %s1211
        %v1213 = vmul.f32 %v384, %v1212
        %v1214 = vmul.f32 %v385, %v1212
        %v1215 = vadd.f32 %v1209, %v1213
        %v1216 = vadd.f32 %v1209, %v1214
        %s1217 = sadd.s32 %s1210, 1
        %s1218 = sld [smem:[#allocation7 + %s1217]]
        %v1219 = vstv %s1218
        %v1220 = vmul.f32 %v384, %v1219
        %v1221 = vmul.f32 %v385, %v1219
        %1224 = vrot.lane.b32.xlu0 %v1220, 127
        %v1225 = vpop.permute.xlu0 %1224
        %1226 = vrot.lane.b32.xlu0 %v1221, 127
        %v1227 = vpop.permute.xlu0 %1226
        %v1228 = vrot.slane %v1225, 2
        %v1229 = vrot.slane %v1227, 2
        %v1230 = vsel %vm409, %v1228, %v1229
        %v1231 = vsel %vm411, %v1225, %v1230
        %v1232 = vsel %vm411, %v1227, %v1229
        %v1235 = vadd.f32 %v1215, %v1231
        %v1236 = vadd.f32 %v1216, %v1232
        %s1237 = sadd.s32 %s1210, 2
        %s1238 = sld [smem:[#allocation7 + %s1237]]
        %v1239 = vstv %s1238
        %v1240 = vmul.f32 %v384, %v1239
        %v1241 = vmul.f32 %v385, %v1239
        %1244 = vrot.lane.b32.xlu0 %v1240, 126
        %v1245 = vpop.permute.xlu0 %1244
        %1246 = vrot.lane.b32.xlu0 %v1241, 126
        %v1247 = vpop.permute.xlu0 %1246
        %v1248 = vrot.slane %v1245, 2
        %v1249 = vrot.slane %v1247, 2
        %v1250 = vsel %vm409, %v1248, %v1249
        %v1251 = vsel %vm432, %v1245, %v1250
        %v1252 = vsel %vm432, %v1247, %v1249
        %v1255 = vadd.f32 %v1235, %v1251
        %v1256 = vadd.f32 %v1236, %v1252
        %s1257 = sadd.s32 %s1210, 3
        %s1258 = sld [smem:[#allocation7 + %s1257]]
        %v1259 = vstv %s1258
        %v1260 = vmul.f32 %v384, %v1259
        %v1261 = vmul.f32 %v385, %v1259
        %1264 = vrot.lane.b32.xlu0 %v1260, 98
        %v1265 = vpop.permute.xlu0 %1264
        %1266 = vrot.lane.b32.xlu0 %v1261, 98
        %v1267 = vpop.permute.xlu0 %1266
        %v1268 = vrot.slane %v1265, 2
        %v1269 = vrot.slane %v1267, 2
        %v1270 = vsel %vm409, %v1268, %v1269
        %v1271 = vsel %vm453, %v1265, %v1270
        %v1272 = vsel %vm453, %v1267, %v1269
        %v1275 = vadd.f32 %v1255, %v1271
        %v1276 = vadd.f32 %v1256, %v1272
        %s1277 = sadd.s32 %s1210, 4
        %s1278 = sld [smem:[#allocation7 + %s1277]]
        %v1279 = vstv %s1278
        %v1280 = vmul.f32 %v384, %v1279
        %v1281 = vmul.f32 %v385, %v1279
        %1284 = vrot.lane.b32.xlu0 %v1280, 97
        %v1285 = vpop.permute.xlu0 %1284
        %1286 = vrot.lane.b32.xlu0 %v1281, 97
        %v1287 = vpop.permute.xlu0 %1286
        %v1288 = vrot.slane %v1285, 2
        %v1289 = vrot.slane %v1287, 2
        %v1290 = vsel %vm409, %v1288, %v1289
        %v1291 = vsel %vm474, %v1285, %v1290
        %v1292 = vsel %vm474, %v1287, %v1289
        %v1295 = vadd.f32 %v1275, %v1291
        %v1296 = vadd.f32 %v1276, %v1292
        %s1297 = sadd.s32 %s1210, 5
        %s1298 = sld [smem:[#allocation7 + %s1297]]
        %v1299 = vstv %s1298
        %v1300 = vmul.f32 %v384, %v1299
        %v1301 = vmul.f32 %v385, %v1299
        %1304 = vrot.lane.b32.xlu0 %v1300, 96
        %v1305 = vpop.permute.xlu0 %1304
        %1306 = vrot.lane.b32.xlu0 %v1301, 96
        %v1307 = vpop.permute.xlu0 %1306
        %v1308 = vrot.slane %v1305, 2
        %v1309 = vrot.slane %v1307, 2
        %v1310 = vsel %vm409, %v1308, %v1309
        %v1311 = vsel %vm495, %v1305, %v1310
        %v1312 = vsel %vm495, %v1307, %v1309
        %v1315 = vadd.f32 %v1295, %v1311
        %v1316 = vadd.f32 %v1296, %v1312
        %s1317 = sadd.s32 %s1210, 6
        %s1318 = sld [smem:[#allocation7 + %s1317]]
        %v1319 = vstv %s1318
        %v1320 = vmul.f32 %v384, %v1319
        %v1321 = vmul.f32 %v385, %v1319
        %1324 = vrot.lane.b32.xlu0 %v1320, 68
        %v1325 = vpop.permute.xlu0 %1324
        %1326 = vrot.lane.b32.xlu0 %v1321, 68
        %v1327 = vpop.permute.xlu0 %1326
        %v1328 = vrot.slane %v1325, 2
        %v1329 = vrot.slane %v1327, 2
        %v1330 = vsel %vm409, %v1328, %v1329
        %v1331 = vsel %vm516, %v1325, %v1330
        %v1332 = vsel %vm516, %v1327, %v1329
        %v1335 = vadd.f32 %v1315, %v1331
        %v1336 = vadd.f32 %v1316, %v1332
        %s1337 = sadd.s32 %s1210, 7
        %s1338 = sld [smem:[#allocation7 + %s1337]]
        %v1339 = vstv %s1338
        %v1340 = vmul.f32 %v384, %v1339
        %v1341 = vmul.f32 %v385, %v1339
        %1344 = vrot.lane.b32.xlu0 %v1340, 67
        %v1345 = vpop.permute.xlu0 %1344
        %1346 = vrot.lane.b32.xlu0 %v1341, 67
        %v1347 = vpop.permute.xlu0 %1346
        %v1348 = vrot.slane %v1345, 2
        %v1349 = vrot.slane %v1347, 2
        %v1350 = vsel %vm409, %v1348, %v1349
        %v1351 = vsel %vm537, %v1345, %v1350
        %v1352 = vsel %vm537, %v1347, %v1349
        %v1355 = vadd.f32 %v1335, %v1351
        %v1356 = vadd.f32 %v1336, %v1352
        %s1357 = sadd.s32 %s1210, 8
        %s1358 = sld [smem:[#allocation7 + %s1357]]
        %v1359 = vstv %s1358
        %v1360 = vmul.f32 %v384, %v1359
        %v1361 = vmul.f32 %v385, %v1359
        %1364 = vrot.lane.b32.xlu0 %v1360, 66
        %v1365 = vpop.permute.xlu0 %1364
        %1366 = vrot.lane.b32.xlu0 %v1361, 66
        %v1367 = vpop.permute.xlu0 %1366
        %v1368 = vrot.slane %v1365, 2
        %v1369 = vrot.slane %v1367, 2
        %v1370 = vsel %vm409, %v1368, %v1369
        %v1371 = vsel %vm558, %v1365, %v1370
        %v1372 = vsel %vm558, %v1367, %v1369
        %v1375 = vadd.f32 %v1355, %v1371
        %v1376 = vadd.f32 %v1356, %v1372
        %v1377 = vmax.f32 %v1375, 0.0
        %v1378 = vmax.f32 %v1376, 0.0
        %v1381 = vcombine.high %v1377, %v1377
        %v1383 = vunpack.c.l.s4 1983009808
        %v1384 = vunpack.c.0.s8 %v1383
        %v1385 = vlaneseq
        %v1386 = vshrl.u32 %v1385, 7
        %v1387 = vsub.s32 %v1384, %v1386
        %v1388 = vrot.slane %v1377, %v1387
        %v1390 = vunpack.c.l.s4 1983009808
        %v1391 = vunpack.c.0.s8 %v1390
        %v1392 = vlaneseq
        %v1393 = vshrl.u32 %v1392, 7
        %v1394 = vsub.s32 %v1391, %v1393
        %v1395 = vrot.slane %v1381, %v1394
        %v1396 = vcombine.high %v1388, %v1388
        %v1397 = vcombine.high %v1395, %v1395
        %v1398 = vcombine.high %v1378, %v1378
        %v1400 = vunpack.c.l.s4 1983009808
        %v1401 = vunpack.c.0.s8 %v1400
        %v1402 = vlaneseq
        %v1403 = vshrl.u32 %v1402, 7
        %v1404 = vsub.s32 %v1401, %v1403
        %v1405 = vrot.slane %v1378, %v1404
        %v1407 = vunpack.c.l.s4 1983009808
        %v1408 = vunpack.c.0.s8 %v1407
        %v1409 = vlaneseq
        %v1410 = vshrl.u32 %v1409, 7
        %v1411 = vsub.s32 %v1408, %v1410
        %v1412 = vrot.slane %v1398, %v1411
        %v1413 = vcombine.high %v1405, %v1405
        %v1421 = vpack.c.bf16 %v1388, %v1388
        %v1422 = vpack.c.bf16 %v1396, %v1396
        %v1423 = vpack.c.bf16 %v1395, %v1395
        %v1424 = vpack.c.bf16 %v1397, %v1397
        %v1425 = vpack.c.bf16 %v1405, %v1405
        %v1426 = vpack.c.bf16 %v1413, %v1413
        %v1427 = vpack.c.bf16 %v1412, %v1412
        %v1428 = vld [vmem:[#allocation2] sm:$0x3]
        %s1429 = scalar_lea.vmem %s324, 420 [#allocation10]
        %v1430 = vld [vmem:[%s1429] sm:$0xf]
        %v1431 = vld [vmem:[%s1429 + $0x4] sm:$0xf]
        %v1432 = vld [vmem:[%s1429 + $0x8] sm:$0xf]
        %v1433 = vld [vmem:[%s1429 + $0xc] sm:$0xf]
        %v1434 = vld [vmem:[%s1429 + $0x10] sm:$0xf]
        %v1435 = vld [vmem:[%s1429 + $0x14] sm:$0xf]
        %v1436 = vld [vmem:[%s1429 + $0x18] sm:$0xf]
        %v1437 = vld [vmem:[%s1429 + $0x1c] sm:$0xf]
        %v1438 = vld [vmem:[%s1429 + $0x20] sm:$0xf]
        %v1439 = vld [vmem:[%s1429 + $0x24] sm:$0xf]
        %v1440 = vld [vmem:[%s1429 + $0x28] sm:$0xf]
        %v1441 = vld [vmem:[%s1429 + $0x2c] sm:$0xf]
        %v1442 = vld [vmem:[%s1429 + $0x30] sm:$0xf]
        %v1443 = vld [vmem:[%s1429 + $0x34] sm:$0xf]
        %v1444 = vld [vmem:[%s1429 + $0x38] sm:$0xf]
        %v1445 = vld [vmem:[%s1429 + $0x3c] sm:$0xf]
        %v1446 = vld [vmem:[%s1429 + $0x40] sm:$0xf]
        %v1447 = vld [vmem:[%s1429 + $0x44] sm:$0xf]
        %v1448 = vld [vmem:[%s1429 + $0x48] sm:$0xf]
        %v1449 = vld [vmem:[%s1429 + $0x4c] sm:$0xf]
        %v1450 = vld [vmem:[%s1429 + $0x50] sm:$0xf]
        %v1451 = vld [vmem:[%s1429 + $0x54] sm:$0xf]
        %v1452 = vld [vmem:[%s1429 + $0x58] sm:$0xf]
        %v1453 = vld [vmem:[%s1429 + $0x5c] sm:$0xf]
        %v1454 = vld [vmem:[%s1429 + $0x60] sm:$0xf]
        %v1455 = vld [vmem:[%s1429 + $0x64] sm:$0xf]
        %v1456 = vld [vmem:[%s1429 + $0x68] sm:$0xf]
        %v1457 = vld [vmem:[%s1429 + $0x6c] sm:$0xf]
        %v1458 = vld [vmem:[%s1429 + $0x70] sm:$0xf]
        %v1459 = vld [vmem:[%s1429 + $0x74] sm:$0xf]
        %v1460 = vld [vmem:[%s1429 + $0x78] sm:$0xf]
        %v1461 = vld [vmem:[%s1429 + $0x7c] sm:$0xf]
        %v1462 = vld [vmem:[%s1429 + $0x80] sm:$0xf]
        %v1463 = vld [vmem:[%s1429 + $0x84] sm:$0xf]
        %v1464 = vld [vmem:[%s1429 + $0x88] sm:$0xf]
        %v1465 = vld [vmem:[%s1429 + $0x8c] sm:$0xf]
        %v1466 = vld [vmem:[%s1429 + $0x90] sm:$0xf]
        %v1467 = vld [vmem:[%s1429 + $0x94] sm:$0xf]
        %v1468 = vld [vmem:[%s1429 + $0x98] sm:$0xf]
        %v1469 = vld [vmem:[%s1429 + $0x9c] sm:$0xf]
        %v1470 = vld [vmem:[%s1429 + $0xa0] sm:$0xf]
        %v1471 = vld [vmem:[%s1429 + $0xa4] sm:$0xf]
        %v1472 = vld [vmem:[%s1429 + $0xa8] sm:$0xf]
        %v1473 = vld [vmem:[%s1429 + $0xac] sm:$0xf]
        %v1474 = vld [vmem:[%s1429 + $0xb0] sm:$0xf]
        %v1475 = vld [vmem:[%s1429 + $0xb4] sm:$0xf]
        %v1476 = vld [vmem:[%s1429 + $0xb8] sm:$0xf]
        %v1477 = vld [vmem:[%s1429 + $0xbc] sm:$0xf]
        %v1478 = vld [vmem:[%s1429 + $0xc0] sm:$0xf]
        %v1479 = vld [vmem:[%s1429 + $0xc4] sm:$0xf]
        %v1480 = vld [vmem:[%s1429 + $0xc8] sm:$0xf]
        %v1481 = vld [vmem:[%s1429 + $0xcc] sm:$0xf]
        %v1482 = vld [vmem:[%s1429 + $0xd0] sm:$0xf]
        %v1483 = vld [vmem:[%s1429 + $0xd4] sm:$0xf]
        %v1484 = vld [vmem:[%s1429 + $0xd8] sm:$0xf]
        %v1485 = vld [vmem:[%s1429 + $0xdc] sm:$0xf]
        %v1486 = vld [vmem:[%s1429 + $0xe0] sm:$0xf]
        %v1487 = vld [vmem:[%s1429 + $0xe4] sm:$0xf]
        %v1488 = vld [vmem:[%s1429 + $0xe8] sm:$0xf]
        %v1489 = vld [vmem:[%s1429 + $0xec] sm:$0xf]
        %v1490 = vld [vmem:[%s1429 + $0xf0] sm:$0xf]
        %v1491 = vld [vmem:[%s1429 + $0xf4] sm:$0xf]
        %v1492 = vld [vmem:[%s1429 + $0xf8] sm:$0xf]
        %v1493 = vld [vmem:[%s1429 + $0xfc] sm:$0xf]
        %v1494 = vld [vmem:[%s1429 + $0x100] sm:$0xf]
        %v1495 = vld [vmem:[%s1429 + $0x104] sm:$0xf]
        %v1496 = vld [vmem:[%s1429 + $0x108] sm:$0xf]
        %v1497 = vld [vmem:[%s1429 + $0x10c] sm:$0xf]
        %v1498 = vld [vmem:[%s1429 + $0x110] sm:$0xf]
        %v1499 = vld [vmem:[%s1429 + $0x114] sm:$0xf]
        %v1500 = vld [vmem:[%s1429 + $0x118] sm:$0xf]
        %v1501 = vld [vmem:[%s1429 + $0x11c] sm:$0xf]
        %v1502 = vld [vmem:[%s1429 + $0x120] sm:$0xf]
        %v1503 = vld [vmem:[%s1429 + $0x124] sm:$0xf]
        %v1504 = vld [vmem:[%s1429 + $0x128] sm:$0xf]
        %v1505 = vld [vmem:[%s1429 + $0x12c] sm:$0xf]
        %v1506 = vld [vmem:[%s1429 + $0x130] sm:$0xf]
        %v1507 = vld [vmem:[%s1429 + $0x134] sm:$0xf]
        %v1508 = vld [vmem:[%s1429 + $0x138] sm:$0xf]
        %v1509 = vld [vmem:[%s1429 + $0x13c] sm:$0xf]
        %v1510 = vld [vmem:[%s1429 + $0x140] sm:$0xf]
        %v1511 = vld [vmem:[%s1429 + $0x144] sm:$0xf]
        %v1512 = vld [vmem:[%s1429 + $0x148] sm:$0xf]
        %v1513 = vld [vmem:[%s1429 + $0x14c] sm:$0xf]
        %v1514 = vld [vmem:[%s1429 + $0x150] sm:$0xf]
        %v1515 = vld [vmem:[%s1429 + $0x154] sm:$0xf]
        %v1516 = vld [vmem:[%s1429 + $0x158] sm:$0xf]
        %v1517 = vld [vmem:[%s1429 + $0x15c] sm:$0xf]
        %v1518 = vld [vmem:[%s1429 + $0x160] sm:$0xf]
        %v1519 = vld [vmem:[%s1429 + $0x164] sm:$0xf]
        %v1520 = vld [vmem:[%s1429 + $0x168] sm:$0xf]
        %v1521 = vld [vmem:[%s1429 + $0x16c] sm:$0xf]
        %v1522 = vld [vmem:[%s1429 + $0x170] sm:$0xf]
        %v1523 = vld [vmem:[%s1429 + $0x174] sm:$0xf]
        %v1524 = vld [vmem:[%s1429 + $0x178] sm:$0xf]
        %v1525 = vld [vmem:[%s1429 + $0x17c] sm:$0xf]
        %v1526 = vld [vmem:[%s1429 + $0x180] sm:$0xf]
        %v1527 = vld [vmem:[%s1429 + $0x184] sm:$0xf]
        %v1528 = vld [vmem:[%s1429 + $0x188] sm:$0xf]
        %v1529 = vld [vmem:[%s1429 + $0x18c] sm:$0xf]
        %v1530 = vld [vmem:[%s1429 + $0x190] sm:$0xf]
        %v1531 = vld [vmem:[%s1429 + $0x194] sm:$0xf]
        %v1532 = vld [vmem:[%s1429 + $0x198] sm:$0xf]
        %v1533 = vld [vmem:[%s1429 + $0x19c] sm:$0xf]
        %v1534 = vld [vmem:[%s1429 + $0x1a0] sm:$0xf]
        %v1640 = vunpack.c.l.b16 %v1430
        %v1641 = vunpack.c.l.b16 %v1431
        %v1642 = vunpack.c.l.b16 %v1432
        %v1643 = vunpack.c.l.b16 %v1433
        %v1644 = vunpack.c.l.b16 %v1434
        %v1645 = vunpack.c.l.b16 %v1435
        %v1646 = vunpack.c.l.b16 %v1436
        %v1647 = vunpack.c.l.b16 %v1437
        %v1648 = vunpack.c.l.b16 %v1438
        %v1649 = vunpack.c.l.b16 %v1439
        %v1650 = vunpack.c.l.b16 %v1440
        %v1651 = vunpack.c.l.b16 %v1441
        %v1652 = vunpack.c.l.b16 %v1442
        %v1653 = vunpack.c.l.b16 %v1443
        %v1654 = vunpack.c.l.b16 %v1444
        %v1655 = vunpack.c.l.b16 %v1445
        %v1656 = vunpack.c.l.b16 %v1446
        %v1657 = vunpack.c.l.b16 %v1447
        %v1658 = vunpack.c.l.b16 %v1448
        %v1659 = vunpack.c.l.b16 %v1449
        %v1660 = vunpack.c.l.b16 %v1450
        %v1661 = vunpack.c.l.b16 %v1451
        %v1662 = vunpack.c.l.b16 %v1452
        %v1663 = vunpack.c.l.b16 %v1453
        %v1664 = vunpack.c.l.b16 %v1454
        %v1665 = vunpack.c.l.b16 %v1455
        %v1666 = vunpack.c.l.b16 %v1456
        %v1667 = vunpack.c.l.b16 %v1457
        %v1668 = vunpack.c.l.b16 %v1458
        %v1669 = vunpack.c.l.b16 %v1459
        %v1670 = vunpack.c.l.b16 %v1460
        %v1671 = vunpack.c.l.b16 %v1461
        %v1672 = vunpack.c.l.b16 %v1462
        %v1673 = vunpack.c.l.b16 %v1463
        %v1674 = vunpack.c.l.b16 %v1464
        %v1675 = vunpack.c.l.b16 %v1465
        %v1676 = vunpack.c.l.b16 %v1466
        %v1677 = vunpack.c.l.b16 %v1467
        %v1678 = vunpack.c.l.b16 %v1468
        %v1679 = vunpack.c.l.b16 %v1469
        %v1680 = vunpack.c.l.b16 %v1470
        %v1681 = vunpack.c.l.b16 %v1471
        %v1682 = vunpack.c.l.b16 %v1472
        %v1683 = vunpack.c.l.b16 %v1473
        %v1684 = vunpack.c.l.b16 %v1474
        %v1685 = vunpack.c.l.b16 %v1475
        %v1686 = vunpack.c.l.b16 %v1476
        %v1687 = vunpack.c.l.b16 %v1477
        %v1688 = vunpack.c.l.b16 %v1478
        %v1689 = vunpack.c.l.b16 %v1479
        %v1690 = vunpack.c.l.b16 %v1480
        %v1691 = vunpack.c.l.b16 %v1481
        %v1692 = vunpack.c.l.b16 %v1482
        %v1693 = vunpack.c.l.b16 %v1483
        %v1694 = vunpack.c.l.b16 %v1484
        %v1695 = vunpack.c.l.b16 %v1485
        %v1696 = vunpack.c.l.b16 %v1486
        %v1697 = vunpack.c.l.b16 %v1487
        %v1698 = vunpack.c.l.b16 %v1488
        %v1699 = vunpack.c.l.b16 %v1489
        %v1700 = vunpack.c.l.b16 %v1490
        %v1701 = vunpack.c.l.b16 %v1491
        %v1702 = vunpack.c.l.b16 %v1492
        %v1703 = vunpack.c.l.b16 %v1493
        %v1704 = vunpack.c.l.b16 %v1494
        %v1705 = vunpack.c.l.b16 %v1495
        %v1706 = vunpack.c.l.b16 %v1496
        %v1707 = vunpack.c.l.b16 %v1497
        %v1708 = vunpack.c.l.b16 %v1498
        %v1709 = vunpack.c.l.b16 %v1499
        %v1710 = vunpack.c.l.b16 %v1500
        %v1711 = vunpack.c.l.b16 %v1501
        %v1712 = vunpack.c.l.b16 %v1502
        %v1713 = vunpack.c.l.b16 %v1503
        %v1714 = vunpack.c.l.b16 %v1504
        %v1715 = vunpack.c.l.b16 %v1505
        %v1716 = vunpack.c.l.b16 %v1506
        %v1717 = vunpack.c.l.b16 %v1507
        %v1718 = vunpack.c.l.b16 %v1508
        %v1719 = vunpack.c.l.b16 %v1509
        %v1720 = vunpack.c.l.b16 %v1510
        %v1721 = vunpack.c.l.b16 %v1511
        %v1722 = vunpack.c.l.b16 %v1512
        %v1723 = vunpack.c.l.b16 %v1513
        %v1724 = vunpack.c.l.b16 %v1514
        %v1725 = vunpack.c.l.b16 %v1515
        %v1726 = vunpack.c.l.b16 %v1516
        %v1727 = vunpack.c.l.b16 %v1517
        %v1728 = vunpack.c.l.b16 %v1518
        %v1729 = vunpack.c.l.b16 %v1519
        %v1730 = vunpack.c.l.b16 %v1520
        %v1731 = vunpack.c.l.b16 %v1521
        %v1732 = vunpack.c.l.b16 %v1522
        %v1733 = vunpack.c.l.b16 %v1523
        %v1734 = vunpack.c.l.b16 %v1524
        %v1735 = vunpack.c.l.b16 %v1525
        %v1736 = vunpack.c.l.b16 %v1526
        %v1737 = vunpack.c.l.b16 %v1527
        %v1738 = vunpack.c.l.b16 %v1528
        %v1739 = vunpack.c.l.b16 %v1529
        %v1740 = vunpack.c.l.b16 %v1530
        %v1741 = vunpack.c.l.b16 %v1531
        %v1742 = vunpack.c.l.b16 %v1532
        %v1743 = vunpack.c.l.b16 %v1533
        %v1744 = vunpack.c.l.b16 %v1534
        %v1745 = vpack.c.b16 %v1641, %v1640
        %v1746 = vpack.c.b16 %v1643, %v1642
        %v1747 = vpack.c.b16 %v1645, %v1644
        %v1748 = vpack.c.b16 %v1647, %v1646
        %v1749 = vpack.c.b16 %v1649, %v1648
        %v1750 = vpack.c.b16 %v1651, %v1650
        %v1751 = vpack.c.b16 %v1653, %v1652
        %v1752 = vpack.c.b16 %v1655, %v1654
        %v1753 = vpack.c.b16 %v1657, %v1656
        %v1754 = vpack.c.b16 %v1659, %v1658
        %v1755 = vpack.c.b16 %v1661, %v1660
        %v1756 = vpack.c.b16 %v1663, %v1662
        %v1757 = vpack.c.b16 %v1665, %v1664
        %v1758 = vpack.c.b16 %v1667, %v1666
        %v1759 = vpack.c.b16 %v1669, %v1668
        %v1760 = vpack.c.b16 %v1671, %v1670
        %v1761 = vpack.c.b16 %v1673, %v1672
        %v1762 = vpack.c.b16 %v1675, %v1674
        %v1763 = vpack.c.b16 %v1677, %v1676
        %v1764 = vpack.c.b16 %v1679, %v1678
        %v1765 = vpack.c.b16 %v1681, %v1680
        %v1766 = vpack.c.b16 %v1683, %v1682
        %v1767 = vpack.c.b16 %v1685, %v1684
        %v1768 = vpack.c.b16 %v1687, %v1686
        %v1769 = vpack.c.b16 %v1689, %v1688
        %v1770 = vpack.c.b16 %v1691, %v1690
        %v1771 = vpack.c.b16 %v1693, %v1692
        %v1772 = vpack.c.b16 %v1695, %v1694
        %v1773 = vpack.c.b16 %v1697, %v1696
        %v1774 = vpack.c.b16 %v1699, %v1698
        %v1775 = vpack.c.b16 %v1701, %v1700
        %v1776 = vpack.c.b16 %v1703, %v1702
        %v1777 = vpack.c.b16 %v1705, %v1704
        %v1778 = vpack.c.b16 %v1707, %v1706
        %v1779 = vpack.c.b16 %v1709, %v1708
        %v1780 = vpack.c.b16 %v1711, %v1710
        %v1781 = vpack.c.b16 %v1713, %v1712
        %v1782 = vpack.c.b16 %v1715, %v1714
        %v1783 = vpack.c.b16 %v1717, %v1716
        %v1784 = vpack.c.b16 %v1719, %v1718
        %v1785 = vpack.c.b16 %v1721, %v1720
        %v1786 = vpack.c.b16 %v1723, %v1722
        %v1787 = vpack.c.b16 %v1725, %v1724
        %v1788 = vpack.c.b16 %v1727, %v1726
        %v1789 = vpack.c.b16 %v1729, %v1728
        %v1790 = vpack.c.b16 %v1731, %v1730
        %v1791 = vpack.c.b16 %v1733, %v1732
        %v1792 = vpack.c.b16 %v1735, %v1734
        %v1793 = vpack.c.b16 %v1737, %v1736
        %v1794 = vpack.c.b16 %v1739, %v1738
        %v1795 = vpack.c.b16 %v1741, %v1740
        %v1796 = vpack.c.b16 %v1743, %v1742
        %v1797 = vpack.c.b16 %v1744, %v1744
        %v1851 = vsel %vm1037, %v1427, 0
        %v1854 = vsel %vm1041, %v1797, 0
        %1856 = vmatprep.subr.bf16.mxu0 0
        %1857 = vmatpush1.bf16.msra.mxu0 %v1745
        %1858 = vmatprep.subr.bf16.mxu0 0
        %1859 = vmatpush1.bf16.msra.mxu0 %v1746
        %1860 = vmatprep.subr.bf16.mxu0 0
        %1861 = vmatpush1.bf16.msra.mxu0 %v1747
        %1862 = vmatprep.subr.bf16.mxu0 0
        %1863 = vmatpush1.bf16.msra.mxu0 %v1748
        %1864 = vmatprep.subr.bf16.mxu0 0
        %1865 = vmatpush1.bf16.msra.mxu0 %v1749
        %1866 = vmatprep.subr.bf16.mxu0 0
        %1867 = vmatpush1.bf16.msra.mxu0 %v1750
        %1868 = vmatprep.subr.bf16.mxu0 0
        %1869 = vmatpush1.bf16.msra.mxu0 %v1751
        %1870 = vmatprep.subr.bf16.mxu0 0
        %1871 = vmatpush1.bf16.msra.mxu0 %v1752
        %1872 = vmatprep.subr.bf16.mxu0 0
        %1873 = vmatpush1.bf16.msra.mxu0 %v1753
        %1874 = vmatprep.subr.bf16.mxu0 0
        %1875 = vmatpush1.bf16.msra.mxu0 %v1754
        %1876 = vmatprep.subr.bf16.mxu0 0
        %1877 = vmatpush1.bf16.msra.mxu0 %v1755
        %1878 = vmatprep.subr.bf16.mxu0 0
        %1879 = vmatpush1.bf16.msra.mxu0 %v1756
        %1880 = vmatprep.subr.bf16.mxu0 0
        %1881 = vmatpush1.bf16.msra.mxu0 %v1757
        %1882 = vmatprep.subr.bf16.mxu0 0
        %1883 = vmatpush1.bf16.msra.mxu0 %v1758
        %1884 = vmatprep.subr.bf16.mxu0 0
        %1885 = vmatpush1.bf16.msra.mxu0 %v1759
        %1886 = vmatprep.subr.bf16.mxu0 0
        %1887 = vmatpush1.bf16.msra.mxu0 %v1760
        %1888 = vmatprep.mubr.bf16.mxu0 %v1422
        %1889 = vmatmul.mubr.bf16.gmra.mrb[0].mxu0 %v1421
        %v1890 = vpop.f32.mrb[0].mxu0
        %v1891 = vadd.f32 0.0, %v1890
        %v1892 = vpop.f32.mrb[0].mxu0
        %v1893 = vpop.f32.mrb[0].mxu0
        %v1894 = vpop.f32.mrb[0].mxu0
        %1895 = vdwg.mxu0
        %1896 = vmatprep.subr.bf16.mxu0 0
        %1897 = vmatpush1.bf16.msra.mxu0 %v1761
        %1898 = vmatprep.subr.bf16.mxu0 0
        %1899 = vmatpush1.bf16.msra.mxu0 %v1762
        %1900 = vmatprep.subr.bf16.mxu0 0
        %1901 = vmatpush1.bf16.msra.mxu0 %v1763
        %1902 = vmatprep.subr.bf16.mxu0 0
        %1903 = vmatpush1.bf16.msra.mxu0 %v1764
        %1904 = vmatprep.subr.bf16.mxu0 0
        %1905 = vmatpush1.bf16.msra.mxu0 %v1765
        %1906 = vmatprep.subr.bf16.mxu0 0
        %1907 = vmatpush1.bf16.msra.mxu0 %v1766
        %1908 = vmatprep.subr.bf16.mxu0 0
        %1909 = vmatpush1.bf16.msra.mxu0 %v1767
        %1910 = vmatprep.subr.bf16.mxu0 0
        %1911 = vmatpush1.bf16.msra.mxu0 %v1768
        %1912 = vmatprep.subr.bf16.mxu0 0
        %1913 = vmatpush1.bf16.msra.mxu0 %v1769
        %1914 = vmatprep.subr.bf16.mxu0 0
        %1915 = vmatpush1.bf16.msra.mxu0 %v1770
        %1916 = vmatprep.subr.bf16.mxu0 0
        %1917 = vmatpush1.bf16.msra.mxu0 %v1771
        %1918 = vmatprep.subr.bf16.mxu0 0
        %1919 = vmatpush1.bf16.msra.mxu0 %v1772
        %1920 = vmatprep.subr.bf16.mxu0 0
        %1921 = vmatpush1.bf16.msra.mxu0 %v1773
        %1922 = vmatprep.subr.bf16.mxu0 0
        %1923 = vmatpush1.bf16.msra.mxu0 %v1774
        %1924 = vmatprep.subr.bf16.mxu0 0
        %1925 = vmatpush1.bf16.msra.mxu0 %v1775
        %1926 = vmatprep.subr.bf16.mxu0 0
        %1927 = vmatpush1.bf16.msra.mxu0 %v1776
        %1928 = vmatprep.mubr.bf16.mxu0 %v1424
        %1929 = vmatmul.mubr.bf16.gmra.mrb[0].mxu0 %v1423
        %v1930 = vpop.f32.mrb[0].mxu0
        %v1931 = vadd.f32 %v1891, %v1930
        %v1932 = vpop.f32.mrb[0].mxu0
        %v1933 = vpop.f32.mrb[0].mxu0
        %v1934 = vpop.f32.mrb[0].mxu0
        %1935 = vdwg.mxu0
        %1936 = vmatprep.subr.bf16.mxu0 0
        %1937 = vmatpush1.bf16.msra.mxu0 %v1777
        %1938 = vmatprep.subr.bf16.mxu0 0
        %1939 = vmatpush1.bf16.msra.mxu0 %v1778
        %1940 = vmatprep.subr.bf16.mxu0 0
        %1941 = vmatpush1.bf16.msra.mxu0 %v1779
        %1942 = vmatprep.subr.bf16.mxu0 0
        %1943 = vmatpush1.bf16.msra.mxu0 %v1780
        %1944 = vmatprep.subr.bf16.mxu0 0
        %1945 = vmatpush1.bf16.msra.mxu0 %v1781
        %1946 = vmatprep.subr.bf16.mxu0 0
        %1947 = vmatpush1.bf16.msra.mxu0 %v1782
        %1948 = vmatprep.subr.bf16.mxu0 0
        %1949 = vmatpush1.bf16.msra.mxu0 %v1783
        %1950 = vmatprep.subr.bf16.mxu0 0
        %1951 = vmatpush1.bf16.msra.mxu0 %v1784
        %1952 = vmatprep.subr.bf16.mxu0 0
        %1953 = vmatpush1.bf16.msra.mxu0 %v1785
        %1954 = vmatprep.subr.bf16.mxu0 0
        %1955 = vmatpush1.bf16.msra.mxu0 %v1786
        %1956 = vmatprep.subr.bf16.mxu0 0
        %1957 = vmatpush1.bf16.msra.mxu0 %v1787
        %1958 = vmatprep.subr.bf16.mxu0 0
        %1959 = vmatpush1.bf16.msra.mxu0 %v1788
        %1960 = vmatprep.subr.bf16.mxu0 0
        %1961 = vmatpush1.bf16.msra.mxu0 %v1789
        %1962 = vmatprep.subr.bf16.mxu0 0
        %1963 = vmatpush1.bf16.msra.mxu0 %v1790
        %1964 = vmatprep.subr.bf16.mxu0 0
        %1965 = vmatpush1.bf16.msra.mxu0 %v1791
        %1966 = vmatprep.subr.bf16.mxu0 0
        %1967 = vmatpush1.bf16.msra.mxu0 %v1792
        %1968 = vmatprep.mubr.bf16.mxu0 %v1426
        %1969 = vmatmul.mubr.bf16.gmra.mrb[0].mxu0 %v1425
        %v1970 = vpop.f32.mrb[0].mxu0
        %v1971 = vadd.f32 %v1931, %v1970
        %v1972 = vpop.f32.mrb[0].mxu0
        %v1973 = vpop.f32.mrb[0].mxu0
        %v1974 = vpop.f32.mrb[0].mxu0
        %1975 = vdwg.mxu0
        %1976 = vmatprep.subr.bf16.mxu0 0
        %1977 = vmatpush1.bf16.msra.mxu0 %v1793
        %1978 = vmatprep.subr.bf16.mxu0 0
        %1979 = vmatpush1.bf16.msra.mxu0 %v1794
        %1980 = vmatprep.subr.bf16.mxu0 0
        %1981 = vmatpush1.bf16.msra.mxu0 %v1795
        %1982 = vmatprep.subr.bf16.mxu0 0
        %1983 = vmatpush1.bf16.msra.mxu0 %v1796
        %1984 = vmatprep.subr.bf16.mxu0 0
        %1985 = vmatpush1.bf16.msra.mxu0 %v1854
        %1986 = vmatprep.subr.bf16.mxu0 0
        %1987 = vmatpush1.bf16.msra.mxu0 0
        %1988 = vmatprep.subr.bf16.mxu0 0
        %1989 = vmatpush1.bf16.msra.mxu0 0
        %1990 = vmatprep.subr.bf16.mxu0 0
        %1991 = vmatpush1.bf16.msra.mxu0 0
        %1992 = vmatprep.subr.bf16.mxu0 0
        %1993 = vmatpush1.bf16.msra.mxu0 0
        %1994 = vmatprep.subr.bf16.mxu0 0
        %1995 = vmatpush1.bf16.msra.mxu0 0
        %1996 = vmatprep.subr.bf16.mxu0 0
        %1997 = vmatpush1.bf16.msra.mxu0 0
        %1998 = vmatprep.subr.bf16.mxu0 0
        %1999 = vmatpush1.bf16.msra.mxu0 0
        %2000 = vmatprep.subr.bf16.mxu0 0
        %2001 = vmatpush1.bf16.msra.mxu0 0
        %2002 = vmatprep.subr.bf16.mxu0 0
        %2003 = vmatpush1.bf16.msra.mxu0 0
        %2004 = vmatprep.subr.bf16.mxu0 0
        %2005 = vmatpush1.bf16.msra.mxu0 0
        %2006 = vmatprep.subr.bf16.mxu0 0
        %2007 = vmatpush1.bf16.msra.mxu0 0
        %2008 = vmatprep.mubr.bf16.mxu0 0
        %2009 = vmatmul.mubr.bf16.gmra.mrb[0].mxu0 %v1851
        %v2010 = vpop.f32.mrb[0].mxu0
        %v2011 = vadd.f32 %v1971, %v2010
        %v2012 = vpop.f32.mrb[0].mxu0
        %v2013 = vpop.f32.mrb[0].mxu0
        %v2014 = vpop.f32.mrb[0].mxu0
        %2015 = vdwg.mxu0
        %v2016 = vadd.f32 %v1428, %v2011
        %2017 = vst [vmem:[#allocation2] sm:$0x3] %v2016
        %s2018 = sadd.s32 %s386, 2
        %s2019 = sld [smem:[#allocation8 + %s2018]]
        %v2020 = vstv %s2019
        %s2021 = smul.u32 %s2018, 128
        %s2022 = sld [smem:[#allocation7 + %s2021]]
        %v2023 = vstv %s2022
        %v2024 = vmul.f32 %v384, %v2023
        %v2025 = vmul.f32 %v385, %v2023
        %v2026 = vadd.f32 %v2020, %v2024
        %v2027 = vadd.f32 %v2020, %v2025
        %s2028 = sadd.s32 %s2021, 1
        %s2029 = sld [smem:[#allocation7 + %s2028]]
        %v2030 = vstv %s2029
        %v2031 = vmul.f32 %v384, %v2030
        %v2032 = vmul.f32 %v385, %v2030
        %2035 = vrot.lane.b32.xlu0 %v2031, 127
        %v2036 = vpop.permute.xlu0 %2035
        %2037 = vrot.lane.b32.xlu0 %v2032, 127
        %v2038 = vpop.permute.xlu0 %2037
        %v2039 = vrot.slane %v2036, 2
        %v2040 = vrot.slane %v2038, 2
        %v2041 = vsel %vm409, %v2039, %v2040
        %v2042 = vsel %vm411, %v2036, %v2041
        %v2043 = vsel %vm411, %v2038, %v2040
        %v2046 = vadd.f32 %v2026, %v2042
        %v2047 = vadd.f32 %v2027, %v2043
        %s2048 = sadd.s32 %s2021, 2
        %s2049 = sld [smem:[#allocation7 + %s2048]]
        %v2050 = vstv %s2049
        %v2051 = vmul.f32 %v384, %v2050
        %v2052 = vmul.f32 %v385, %v2050
        %2055 = vrot.lane.b32.xlu0 %v2051, 126
        %v2056 = vpop.permute.xlu0 %2055
        %2057 = vrot.lane.b32.xlu0 %v2052, 126
        %v2058 = vpop.permute.xlu0 %2057
        %v2059 = vrot.slane %v2056, 2
        %v2060 = vrot.slane %v2058, 2
        %v2061 = vsel %vm409, %v2059, %v2060
        %v2062 = vsel %vm432, %v2056, %v2061
        %v2063 = vsel %vm432, %v2058, %v2060
        %v2066 = vadd.f32 %v2046, %v2062
        %v2067 = vadd.f32 %v2047, %v2063
        %s2068 = sadd.s32 %s2021, 3
        %s2069 = sld [smem:[#allocation7 + %s2068]]
        %v2070 = vstv %s2069
        %v2071 = vmul.f32 %v384, %v2070
        %v2072 = vmul.f32 %v385, %v2070
        %2075 = vrot.lane.b32.xlu0 %v2071, 98
        %v2076 = vpop.permute.xlu0 %2075
        %2077 = vrot.lane.b32.xlu0 %v2072, 98
        %v2078 = vpop.permute.xlu0 %2077
        %v2079 = vrot.slane %v2076, 2
        %v2080 = vrot.slane %v2078, 2
        %v2081 = vsel %vm409, %v2079, %v2080
        %v2082 = vsel %vm453, %v2076, %v2081
        %v2083 = vsel %vm453, %v2078, %v2080
        %v2086 = vadd.f32 %v2066, %v2082
        %v2087 = vadd.f32 %v2067, %v2083
        %s2088 = sadd.s32 %s2021, 4
        %s2089 = sld [smem:[#allocation7 + %s2088]]
        %v2090 = vstv %s2089
        %v2091 = vmul.f32 %v384, %v2090
        %v2092 = vmul.f32 %v385, %v2090
        %2095 = vrot.lane.b32.xlu0 %v2091, 97
        %v2096 = vpop.permute.xlu0 %2095
        %2097 = vrot.lane.b32.xlu0 %v2092, 97
        %v2098 = vpop.permute.xlu0 %2097
        %v2099 = vrot.slane %v2096, 2
        %v2100 = vrot.slane %v2098, 2
        %v2101 = vsel %vm409, %v2099, %v2100
        %v2102 = vsel %vm474, %v2096, %v2101
        %v2103 = vsel %vm474, %v2098, %v2100
        %v2106 = vadd.f32 %v2086, %v2102
        %v2107 = vadd.f32 %v2087, %v2103
        %s2108 = sadd.s32 %s2021, 5
        %s2109 = sld [smem:[#allocation7 + %s2108]]
        %v2110 = vstv %s2109
        %v2111 = vmul.f32 %v384, %v2110
        %v2112 = vmul.f32 %v385, %v2110
        %2115 = vrot.lane.b32.xlu0 %v2111, 96
        %v2116 = vpop.permute.xlu0 %2115
        %2117 = vrot.lane.b32.xlu0 %v2112, 96
        %v2118 = vpop.permute.xlu0 %2117
        %v2119 = vrot.slane %v2116, 2
        %v2120 = vrot.slane %v2118, 2
        %v2121 = vsel %vm409, %v2119, %v2120
        %v2122 = vsel %vm495, %v2116, %v2121
        %v2123 = vsel %vm495, %v2118, %v2120
        %v2126 = vadd.f32 %v2106, %v2122
        %v2127 = vadd.f32 %v2107, %v2123
        %s2128 = sadd.s32 %s2021, 6
        %s2129 = sld [smem:[#allocation7 + %s2128]]
        %v2130 = vstv %s2129
        %v2131 = vmul.f32 %v384, %v2130
        %v2132 = vmul.f32 %v385, %v2130
        %2135 = vrot.lane.b32.xlu0 %v2131, 68
        %v2136 = vpop.permute.xlu0 %2135
        %2137 = vrot.lane.b32.xlu0 %v2132, 68
        %v2138 = vpop.permute.xlu0 %2137
        %v2139 = vrot.slane %v2136, 2
        %v2140 = vrot.slane %v2138, 2
        %v2141 = vsel %vm409, %v2139, %v2140
        %v2142 = vsel %vm516, %v2136, %v2141
        %v2143 = vsel %vm516, %v2138, %v2140
        %v2146 = vadd.f32 %v2126, %v2142
        %v2147 = vadd.f32 %v2127, %v2143
        %s2148 = sadd.s32 %s2021, 7
        %s2149 = sld [smem:[#allocation7 + %s2148]]
        %v2150 = vstv %s2149
        %v2151 = vmul.f32 %v384, %v2150
        %v2152 = vmul.f32 %v385, %v2150
        %2155 = vrot.lane.b32.xlu0 %v2151, 67
        %v2156 = vpop.permute.xlu0 %2155
        %2157 = vrot.lane.b32.xlu0 %v2152, 67
        %v2158 = vpop.permute.xlu0 %2157
        %v2159 = vrot.slane %v2156, 2
        %v2160 = vrot.slane %v2158, 2
        %v2161 = vsel %vm409, %v2159, %v2160
        %v2162 = vsel %vm537, %v2156, %v2161
        %v2163 = vsel %vm537, %v2158, %v2160
        %v2166 = vadd.f32 %v2146, %v2162
        %v2167 = vadd.f32 %v2147, %v2163
        %s2168 = sadd.s32 %s2021, 8
        %s2169 = sld [smem:[#allocation7 + %s2168]]
        %v2170 = vstv %s2169
        %v2171 = vmul.f32 %v384, %v2170
        %v2172 = vmul.f32 %v385, %v2170
        %2175 = vrot.lane.b32.xlu0 %v2171, 66
        %v2176 = vpop.permute.xlu0 %2175
        %2177 = vrot.lane.b32.xlu0 %v2172, 66
        %v2178 = vpop.permute.xlu0 %2177
        %v2179 = vrot.slane %v2176, 2
        %v2180 = vrot.slane %v2178, 2
        %v2181 = vsel %vm409, %v2179, %v2180
        %v2182 = vsel %vm558, %v2176, %v2181
        %v2183 = vsel %vm558, %v2178, %v2180
        %v2186 = vadd.f32 %v2166, %v2182
        %v2187 = vadd.f32 %v2167, %v2183
        %v2188 = vmax.f32 %v2186, 0.0
        %v2189 = vmax.f32 %v2187, 0.0
        %v2192 = vcombine.high %v2188, %v2188
        %v2194 = vunpack.c.l.s4 1983009808
        %v2195 = vunpack.c.0.s8 %v2194
        %v2196 = vlaneseq
        %v2197 = vshrl.u32 %v2196, 7
        %v2198 = vsub.s32 %v2195, %v2197
        %v2199 = vrot.slane %v2188, %v2198
        %v2201 = vunpack.c.l.s4 1983009808
        %v2202 = vunpack.c.0.s8 %v2201
        %v2203 = vlaneseq
        %v2204 = vshrl.u32 %v2203, 7
        %v2205 = vsub.s32 %v2202, %v2204
        %v2206 = vrot.slane %v2192, %v2205
        %v2207 = vcombine.high %v2199, %v2199
        %v2208 = vcombine.high %v2206, %v2206
        %v2209 = vcombine.high %v2189, %v2189
        %v2211 = vunpack.c.l.s4 1983009808
        %v2212 = vunpack.c.0.s8 %v2211
        %v2213 = vlaneseq
        %v2214 = vshrl.u32 %v2213, 7
        %v2215 = vsub.s32 %v2212, %v2214
        %v2216 = vrot.slane %v2189, %v2215
        %v2218 = vunpack.c.l.s4 1983009808
        %v2219 = vunpack.c.0.s8 %v2218
        %v2220 = vlaneseq
        %v2221 = vshrl.u32 %v2220, 7
        %v2222 = vsub.s32 %v2219, %v2221
        %v2223 = vrot.slane %v2209, %v2222
        %v2224 = vcombine.high %v2216, %v2216
        %v2232 = vpack.c.bf16 %v2199, %v2199
        %v2233 = vpack.c.bf16 %v2207, %v2207
        %v2234 = vpack.c.bf16 %v2206, %v2206
        %v2235 = vpack.c.bf16 %v2208, %v2208
        %v2236 = vpack.c.bf16 %v2216, %v2216
        %v2237 = vpack.c.bf16 %v2224, %v2224
        %v2238 = vpack.c.bf16 %v2223, %v2223
        %v2239 = vld [vmem:[#allocation2] sm:$0x3]
        %s2240 = scalar_lea.vmem %s324, 840 [#allocation10]
        %v2241 = vld [vmem:[%s2240] sm:$0xf]
        %v2242 = vld [vmem:[%s2240 + $0x4] sm:$0xf]
        %v2243 = vld [vmem:[%s2240 + $0x8] sm:$0xf]
        %v2244 = vld [vmem:[%s2240 + $0xc] sm:$0xf]
        %v2245 = vld [vmem:[%s2240 + $0x10] sm:$0xf]
        %v2246 = vld [vmem:[%s2240 + $0x14] sm:$0xf]
        %v2247 = vld [vmem:[%s2240 + $0x18] sm:$0xf]
        %v2248 = vld [vmem:[%s2240 + $0x1c] sm:$0xf]
        %v2249 = vld [vmem:[%s2240 + $0x20] sm:$0xf]
        %v2250 = vld [vmem:[%s2240 + $0x24] sm:$0xf]
        %v2251 = vld [vmem:[%s2240 + $0x28] sm:$0xf]
        %v2252 = vld [vmem:[%s2240 + $0x2c] sm:$0xf]
        %v2253 = vld [vmem:[%s2240 + $0x30] sm:$0xf]
        %v2254 = vld [vmem:[%s2240 + $0x34] sm:$0xf]
        %v2255 = vld [vmem:[%s2240 + $0x38] sm:$0xf]
        %v2256 = vld [vmem:[%s2240 + $0x3c] sm:$0xf]
        %v2257 = vld [vmem:[%s2240 + $0x40] sm:$0xf]
        %v2258 = vld [vmem:[%s2240 + $0x44] sm:$0xf]
        %v2259 = vld [vmem:[%s2240 + $0x48] sm:$0xf]
        %v2260 = vld [vmem:[%s2240 + $0x4c] sm:$0xf]
        %v2261 = vld [vmem:[%s2240 + $0x50] sm:$0xf]
        %v2262 = vld [vmem:[%s2240 + $0x54] sm:$0xf]
        %v2263 = vld [vmem:[%s2240 + $0x58] sm:$0xf]
        %v2264 = vld [vmem:[%s2240 + $0x5c] sm:$0xf]
        %v2265 = vld [vmem:[%s2240 + $0x60] sm:$0xf]
        %v2266 = vld [vmem:[%s2240 + $0x64] sm:$0xf]
        %v2267 = vld [vmem:[%s2240 + $0x68] sm:$0xf]
        %v2268 = vld [vmem:[%s2240 + $0x6c] sm:$0xf]
        %v2269 = vld [vmem:[%s2240 + $0x70] sm:$0xf]
        %v2270 = vld [vmem:[%s2240 + $0x74] sm:$0xf]
        %v2271 = vld [vmem:[%s2240 + $0x78] sm:$0xf]
        %v2272 = vld [vmem:[%s2240 + $0x7c] sm:$0xf]
        %v2273 = vld [vmem:[%s2240 + $0x80] sm:$0xf]
        %v2274 = vld [vmem:[%s2240 + $0x84] sm:$0xf]
        %v2275 = vld [vmem:[%s2240 + $0x88] sm:$0xf]
        %v2276 = vld [vmem:[%s2240 + $0x8c] sm:$0xf]
        %v2277 = vld [vmem:[%s2240 + $0x90] sm:$0xf]
        %v2278 = vld [vmem:[%s2240 + $0x94] sm:$0xf]
        %v2279 = vld [vmem:[%s2240 + $0x98] sm:$0xf]
        %v2280 = vld [vmem:[%s2240 + $0x9c] sm:$0xf]
        %v2281 = vld [vmem:[%s2240 + $0xa0] sm:$0xf]
        %v2282 = vld [vmem:[%s2240 + $0xa4] sm:$0xf]
        %v2283 = vld [vmem:[%s2240 + $0xa8] sm:$0xf]
        %v2284 = vld [vmem:[%s2240 + $0xac] sm:$0xf]
        %v2285 = vld [vmem:[%s2240 + $0xb0] sm:$0xf]
        %v2286 = vld [vmem:[%s2240 + $0xb4] sm:$0xf]
        %v2287 = vld [vmem:[%s2240 + $0xb8] sm:$0xf]
        %v2288 = vld [vmem:[%s2240 + $0xbc] sm:$0xf]
        %v2289 = vld [vmem:[%s2240 + $0xc0] sm:$0xf]
        %v2290 = vld [vmem:[%s2240 + $0xc4] sm:$0xf]
        %v2291 = vld [vmem:[%s2240 + $0xc8] sm:$0xf]
        %v2292 = vld [vmem:[%s2240 + $0xcc] sm:$0xf]
        %v2293 = vld [vmem:[%s2240 + $0xd0] sm:$0xf]
        %v2294 = vld [vmem:[%s2240 + $0xd4] sm:$0xf]
        %v2295 = vld [vmem:[%s2240 + $0xd8] sm:$0xf]
        %v2296 = vld [vmem:[%s2240 + $0xdc] sm:$0xf]
        %v2297 = vld [vmem:[%s2240 + $0xe0] sm:$0xf]
        %v2298 = vld [vmem:[%s2240 + $0xe4] sm:$0xf]
        %v2299 = vld [vmem:[%s2240 + $0xe8] sm:$0xf]
        %v2300 = vld [vmem:[%s2240 + $0xec] sm:$0xf]
        %v2301 = vld [vmem:[%s2240 + $0xf0] sm:$0xf]
        %v2302 = vld [vmem:[%s2240 + $0xf4] sm:$0xf]
        %v2303 = vld [vmem:[%s2240 + $0xf8] sm:$0xf]
        %v2304 = vld [vmem:[%s2240 + $0xfc] sm:$0xf]
        %v2305 = vld [vmem:[%s2240 + $0x100] sm:$0xf]
        %v2306 = vld [vmem:[%s2240 + $0x104] sm:$0xf]
        %v2307 = vld [vmem:[%s2240 + $0x108] sm:$0xf]
        %v2308 = vld [vmem:[%s2240 + $0x10c] sm:$0xf]
        %v2309 = vld [vmem:[%s2240 + $0x110] sm:$0xf]
        %v2310 = vld [vmem:[%s2240 + $0x114] sm:$0xf]
        %v2311 = vld [vmem:[%s2240 + $0x118] sm:$0xf]
        %v2312 = vld [vmem:[%s2240 + $0x11c] sm:$0xf]
        %v2313 = vld [vmem:[%s2240 + $0x120] sm:$0xf]
        %v2314 = vld [vmem:[%s2240 + $0x124] sm:$0xf]
        %v2315 = vld [vmem:[%s2240 + $0x128] sm:$0xf]
        %v2316 = vld [vmem:[%s2240 + $0x12c] sm:$0xf]
        %v2317 = vld [vmem:[%s2240 + $0x130] sm:$0xf]
        %v2318 = vld [vmem:[%s2240 + $0x134] sm:$0xf]
        %v2319 = vld [vmem:[%s2240 + $0x138] sm:$0xf]
        %v2320 = vld [vmem:[%s2240 + $0x13c] sm:$0xf]
        %v2321 = vld [vmem:[%s2240 + $0x140] sm:$0xf]
        %v2322 = vld [vmem:[%s2240 + $0x144] sm:$0xf]
        %v2323 = vld [vmem:[%s2240 + $0x148] sm:$0xf]
        %v2324 = vld [vmem:[%s2240 + $0x14c] sm:$0xf]
        %v2325 = vld [vmem:[%s2240 + $0x150] sm:$0xf]
        %v2326 = vld [vmem:[%s2240 + $0x154] sm:$0xf]
        %v2327 = vld [vmem:[%s2240 + $0x158] sm:$0xf]
        %v2328 = vld [vmem:[%s2240 + $0x15c] sm:$0xf]
        %v2329 = vld [vmem:[%s2240 + $0x160] sm:$0xf]
        %v2330 = vld [vmem:[%s2240 + $0x164] sm:$0xf]
        %v2331 = vld [vmem:[%s2240 + $0x168] sm:$0xf]
        %v2332 = vld [vmem:[%s2240 + $0x16c] sm:$0xf]
        %v2333 = vld [vmem:[%s2240 + $0x170] sm:$0xf]
        %v2334 = vld [vmem:[%s2240 + $0x174] sm:$0xf]
        %v2335 = vld [vmem:[%s2240 + $0x178] sm:$0xf]
        %v2336 = vld [vmem:[%s2240 + $0x17c] sm:$0xf]
        %v2337 = vld [vmem:[%s2240 + $0x180] sm:$0xf]
        %v2338 = vld [vmem:[%s2240 + $0x184] sm:$0xf]
        %v2339 = vld [vmem:[%s2240 + $0x188] sm:$0xf]
        %v2340 = vld [vmem:[%s2240 + $0x18c] sm:$0xf]
        %v2341 = vld [vmem:[%s2240 + $0x190] sm:$0xf]
        %v2342 = vld [vmem:[%s2240 + $0x194] sm:$0xf]
        %v2343 = vld [vmem:[%s2240 + $0x198] sm:$0xf]
        %v2344 = vld [vmem:[%s2240 + $0x19c] sm:$0xf]
        %v2345 = vld [vmem:[%s2240 + $0x1a0] sm:$0xf]
        %v2451 = vunpack.c.l.b16 %v2241
        %v2452 = vunpack.c.l.b16 %v2242
        %v2453 = vunpack.c.l.b16 %v2243
        %v2454 = vunpack.c.l.b16 %v2244
        %v2455 = vunpack.c.l.b16 %v2245
        %v2456 = vunpack.c.l.b16 %v2246
        %v2457 = vunpack.c.l.b16 %v2247
        %v2458 = vunpack.c.l.b16 %v2248
        %v2459 = vunpack.c.l.b16 %v2249
        %v2460 = vunpack.c.l.b16 %v2250
        %v2461 = vunpack.c.l.b16 %v2251
        %v2462 = vunpack.c.l.b16 %v2252
        %v2463 = vunpack.c.l.b16 %v2253
        %v2464 = vunpack.c.l.b16 %v2254
        %v2465 = vunpack.c.l.b16 %v2255
        %v2466 = vunpack.c.l.b16 %v2256
        %v2467 = vunpack.c.l.b16 %v2257
        %v2468 = vunpack.c.l.b16 %v2258
        %v2469 = vunpack.c.l.b16 %v2259
        %v2470 = vunpack.c.l.b16 %v2260
        %v2471 = vunpack.c.l.b16 %v2261
        %v2472 = vunpack.c.l.b16 %v2262
        %v2473 = vunpack.c.l.b16 %v2263
        %v2474 = vunpack.c.l.b16 %v2264
        %v2475 = vunpack.c.l.b16 %v2265
        %v2476 = vunpack.c.l.b16 %v2266
        %v2477 = vunpack.c.l.b16 %v2267
        %v2478 = vunpack.c.l.b16 %v2268
        %v2479 = vunpack.c.l.b16 %v2269
        %v2480 = vunpack.c.l.b16 %v2270
        %v2481 = vunpack.c.l.b16 %v2271
        %v2482 = vunpack.c.l.b16 %v2272
        %v2483 = vunpack.c.l.b16 %v2273
        %v2484 = vunpack.c.l.b16 %v2274
        %v2485 = vunpack.c.l.b16 %v2275
        %v2486 = vunpack.c.l.b16 %v2276
        %v2487 = vunpack.c.l.b16 %v2277
        %v2488 = vunpack.c.l.b16 %v2278
        %v2489 = vunpack.c.l.b16 %v2279
        %v2490 = vunpack.c.l.b16 %v2280
        %v2491 = vunpack.c.l.b16 %v2281
        %v2492 = vunpack.c.l.b16 %v2282
        %v2493 = vunpack.c.l.b16 %v2283
        %v2494 = vunpack.c.l.b16 %v2284
        %v2495 = vunpack.c.l.b16 %v2285
        %v2496 = vunpack.c.l.b16 %v2286
        %v2497 = vunpack.c.l.b16 %v2287
        %v2498 = vunpack.c.l.b16 %v2288
        %v2499 = vunpack.c.l.b16 %v2289
        %v2500 = vunpack.c.l.b16 %v2290
        %v2501 = vunpack.c.l.b16 %v2291
        %v2502 = vunpack.c.l.b16 %v2292
        %v2503 = vunpack.c.l.b16 %v2293
        %v2504 = vunpack.c.l.b16 %v2294
        %v2505 = vunpack.c.l.b16 %v2295
        %v2506 = vunpack.c.l.b16 %v2296
        %v2507 = vunpack.c.l.b16 %v2297
        %v2508 = vunpack.c.l.b16 %v2298
        %v2509 = vunpack.c.l.b16 %v2299
        %v2510 = vunpack.c.l.b16 %v2300
        %v2511 = vunpack.c.l.b16 %v2301
        %v2512 = vunpack.c.l.b16 %v2302
        %v2513 = vunpack.c.l.b16 %v2303
        %v2514 = vunpack.c.l.b16 %v2304
        %v2515 = vunpack.c.l.b16 %v2305
        %v2516 = vunpack.c.l.b16 %v2306
        %v2517 = vunpack.c.l.b16 %v2307
        %v2518 = vunpack.c.l.b16 %v2308
        %v2519 = vunpack.c.l.b16 %v2309
        %v2520 = vunpack.c.l.b16 %v2310
        %v2521 = vunpack.c.l.b16 %v2311
        %v2522 = vunpack.c.l.b16 %v2312
        %v2523 = vunpack.c.l.b16 %v2313
        %v2524 = vunpack.c.l.b16 %v2314
        %v2525 = vunpack.c.l.b16 %v2315
        %v2526 = vunpack.c.l.b16 %v2316
        %v2527 = vunpack.c.l.b16 %v2317
        %v2528 = vunpack.c.l.b16 %v2318
        %v2529 = vunpack.c.l.b16 %v2319
        %v2530 = vunpack.c.l.b16 %v2320
        %v2531 = vunpack.c.l.b16 %v2321
        %v2532 = vunpack.c.l.b16 %v2322
        %v2533 = vunpack.c.l.b16 %v2323
        %v2534 = vunpack.c.l.b16 %v2324
        %v2535 = vunpack.c.l.b16 %v2325
        %v2536 = vunpack.c.l.b16 %v2326
        %v2537 = vunpack.c.l.b16 %v2327
        %v2538 = vunpack.c.l.b16 %v2328
        %v2539 = vunpack.c.l.b16 %v2329
        %v2540 = vunpack.c.l.b16 %v2330
        %v2541 = vunpack.c.l.b16 %v2331
        %v2542 = vunpack.c.l.b16 %v2332
        %v2543 = vunpack.c.l.b16 %v2333
        %v2544 = vunpack.c.l.b16 %v2334
        %v2545 = vunpack.c.l.b16 %v2335
        %v2546 = vunpack.c.l.b16 %v2336
        %v2547 = vunpack.c.l.b16 %v2337
        %v2548 = vunpack.c.l.b16 %v2338
        %v2549 = vunpack.c.l.b16 %v2339
        %v2550 = vunpack.c.l.b16 %v2340
        %v2551 = vunpack.c.l.b16 %v2341
        %v2552 = vunpack.c.l.b16 %v2342
        %v2553 = vunpack.c.l.b16 %v2343
        %v2554 = vunpack.c.l.b16 %v2344
        %v2555 = vunpack.c.l.b16 %v2345
        %v2556 = vpack.c.b16 %v2452, %v2451
        %v2557 = vpack.c.b16 %v2454, %v2453
        %v2558 = vpack.c.b16 %v2456, %v2455
        %v2559 = vpack.c.b16 %v2458, %v2457
        %v2560 = vpack.c.b16 %v2460, %v2459
        %v2561 = vpack.c.b16 %v2462, %v2461
        %v2562 = vpack.c.b16 %v2464, %v2463
        %v2563 = vpack.c.b16 %v2466, %v2465
        %v2564 = vpack.c.b16 %v2468, %v2467
        %v2565 = vpack.c.b16 %v2470, %v2469
        %v2566 = vpack.c.b16 %v2472, %v2471
        %v2567 = vpack.c.b16 %v2474, %v2473
        %v2568 = vpack.c.b16 %v2476, %v2475
        %v2569 = vpack.c.b16 %v2478, %v2477
        %v2570 = vpack.c.b16 %v2480, %v2479
        %v2571 = vpack.c.b16 %v2482, %v2481
        %v2572 = vpack.c.b16 %v2484, %v2483
        %v2573 = vpack.c.b16 %v2486, %v2485
        %v2574 = vpack.c.b16 %v2488, %v2487
        %v2575 = vpack.c.b16 %v2490, %v2489
        %v2576 = vpack.c.b16 %v2492, %v2491
        %v2577 = vpack.c.b16 %v2494, %v2493
        %v2578 = vpack.c.b16 %v2496, %v2495
        %v2579 = vpack.c.b16 %v2498, %v2497
        %v2580 = vpack.c.b16 %v2500, %v2499
        %v2581 = vpack.c.b16 %v2502, %v2501
        %v2582 = vpack.c.b16 %v2504, %v2503
        %v2583 = vpack.c.b16 %v2506, %v2505
        %v2584 = vpack.c.b16 %v2508, %v2507
        %v2585 = vpack.c.b16 %v2510, %v2509
        %v2586 = vpack.c.b16 %v2512, %v2511
        %v2587 = vpack.c.b16 %v2514, %v2513
        %v2588 = vpack.c.b16 %v2516, %v2515
        %v2589 = vpack.c.b16 %v2518, %v2517
        %v2590 = vpack.c.b16 %v2520, %v2519
        %v2591 = vpack.c.b16 %v2522, %v2521
        %v2592 = vpack.c.b16 %v2524, %v2523
        %v2593 = vpack.c.b16 %v2526, %v2525
        %v2594 = vpack.c.b16 %v2528, %v2527
        %v2595 = vpack.c.b16 %v2530, %v2529
        %v2596 = vpack.c.b16 %v2532, %v2531
        %v2597 = vpack.c.b16 %v2534, %v2533
        %v2598 = vpack.c.b16 %v2536, %v2535
        %v2599 = vpack.c.b16 %v2538, %v2537
        %v2600 = vpack.c.b16 %v2540, %v2539
        %v2601 = vpack.c.b16 %v2542, %v2541
        %v2602 = vpack.c.b16 %v2544, %v2543
        %v2603 = vpack.c.b16 %v2546, %v2545
        %v2604 = vpack.c.b16 %v2548, %v2547
        %v2605 = vpack.c.b16 %v2550, %v2549
        %v2606 = vpack.c.b16 %v2552, %v2551
        %v2607 = vpack.c.b16 %v2554, %v2553
        %v2608 = vpack.c.b16 %v2555, %v2555
        %v2662 = vsel %vm1037, %v2238, 0
        %v2665 = vsel %vm1041, %v2608, 0
        %2667 = vmatprep.subr.bf16.mxu0 0
        %2668 = vmatpush1.bf16.msra.mxu0 %v2556
        %2669 = vmatprep.subr.bf16.mxu0 0
        %2670 = vmatpush1.bf16.msra.mxu0 %v2557
        %2671 = vmatprep.subr.bf16.mxu0 0
        %2672 = vmatpush1.bf16.msra.mxu0 %v2558
        %2673 = vmatprep.subr.bf16.mxu0 0
        %2674 = vmatpush1.bf16.msra.mxu0 %v2559
        %2675 = vmatprep.subr.bf16.mxu0 0
        %2676 = vmatpush1.bf16.msra.mxu0 %v2560
        %2677 = vmatprep.subr.bf16.mxu0 0
        %2678 = vmatpush1.bf16.msra.mxu0 %v2561
        %2679 = vmatprep.subr.bf16.mxu0 0
        %2680 = vmatpush1.bf16.msra.mxu0 %v2562
        %2681 = vmatprep.subr.bf16.mxu0 0
        %2682 = vmatpush1.bf16.msra.mxu0 %v2563
        %2683 = vmatprep.subr.bf16.mxu0 0
        %2684 = vmatpush1.bf16.msra.mxu0 %v2564
        %2685 = vmatprep.subr.bf16.mxu0 0
        %2686 = vmatpush1.bf16.msra.mxu0 %v2565
        %2687 = vmatprep.subr.bf16.mxu0 0
        %2688 = vmatpush1.bf16.msra.mxu0 %v2566
        %2689 = vmatprep.subr.bf16.mxu0 0
        %2690 = vmatpush1.bf16.msra.mxu0 %v2567
        %2691 = vmatprep.subr.bf16.mxu0 0
        %2692 = vmatpush1.bf16.msra.mxu0 %v2568
        %2693 = vmatprep.subr.bf16.mxu0 0
        %2694 = vmatpush1.bf16.msra.mxu0 %v2569
        %2695 = vmatprep.subr.bf16.mxu0 0
        %2696 = vmatpush1.bf16.msra.mxu0 %v2570
        %2697 = vmatprep.subr.bf16.mxu0 0
        %2698 = vmatpush1.bf16.msra.mxu0 %v2571
        %2699 = vmatprep.mubr.bf16.mxu0 %v2233
        %2700 = vmatmul.mubr.bf16.gmra.mrb[0].mxu0 %v2232
        %v2701 = vpop.f32.mrb[0].mxu0
        %v2702 = vadd.f32 0.0, %v2701
        %v2703 = vpop.f32.mrb[0].mxu0
        %v2704 = vpop.f32.mrb[0].mxu0
        %v2705 = vpop.f32.mrb[0].mxu0
        %2706 = vdwg.mxu0
        %2707 = vmatprep.subr.bf16.mxu0 0
        %2708 = vmatpush1.bf16.msra.mxu0 %v2572
        %2709 = vmatprep.subr.bf16.mxu0 0
        %2710 = vmatpush1.bf16.msra.mxu0 %v2573
        %2711 = vmatprep.subr.bf16.mxu0 0
        %2712 = vmatpush1.bf16.msra.mxu0 %v2574
        %2713 = vmatprep.subr.bf16.mxu0 0
        %2714 = vmatpush1.bf16.msra.mxu0 %v2575
        %2715 = vmatprep.subr.bf16.mxu0 0
        %2716 = vmatpush1.bf16.msra.mxu0 %v2576
        %2717 = vmatprep.subr.bf16.mxu0 0
        %2718 = vmatpush1.bf16.msra.mxu0 %v2577
        %2719 = vmatprep.subr.bf16.mxu0 0
        %2720 = vmatpush1.bf16.msra.mxu0 %v2578
        %2721 = vmatprep.subr.bf16.mxu0 0
        %2722 = vmatpush1.bf16.msra.mxu0 %v2579
        %2723 = vmatprep.subr.bf16.mxu0 0
        %2724 = vmatpush1.bf16.msra.mxu0 %v2580
        %2725 = vmatprep.subr.bf16.mxu0 0
        %2726 = vmatpush1.bf16.msra.mxu0 %v2581
        %2727 = vmatprep.subr.bf16.mxu0 0
        %2728 = vmatpush1.bf16.msra.mxu0 %v2582
        %2729 = vmatprep.subr.bf16.mxu0 0
        %2730 = vmatpush1.bf16.msra.mxu0 %v2583
        %2731 = vmatprep.subr.bf16.mxu0 0
        %2732 = vmatpush1.bf16.msra.mxu0 %v2584
        %2733 = vmatprep.subr.bf16.mxu0 0
        %2734 = vmatpush1.bf16.msra.mxu0 %v2585
        %2735 = vmatprep.subr.bf16.mxu0 0
        %2736 = vmatpush1.bf16.msra.mxu0 %v2586
        %2737 = vmatprep.subr.bf16.mxu0 0
        %2738 = vmatpush1.bf16.msra.mxu0 %v2587
        %2739 = vmatprep.mubr.bf16.mxu0 %v2235
        %2740 = vmatmul.mubr.bf16.gmra.mrb[0].mxu0 %v2234
        %v2741 = vpop.f32.mrb[0].mxu0
        %v2742 = vadd.f32 %v2702, %v2741
        %v2743 = vpop.f32.mrb[0].mxu0
        %v2744 = vpop.f32.mrb[0].mxu0
        %v2745 = vpop.f32.mrb[0].mxu0
        %2746 = vdwg.mxu0
        %2747 = vmatprep.subr.bf16.mxu0 0
        %2748 = vmatpush1.bf16.msra.mxu0 %v2588
        %2749 = vmatprep.subr.bf16.mxu0 0
        %2750 = vmatpush1.bf16.msra.mxu0 %v2589
        %2751 = vmatprep.subr.bf16.mxu0 0
        %2752 = vmatpush1.bf16.msra.mxu0 %v2590
        %2753 = vmatprep.subr.bf16.mxu0 0
        %2754 = vmatpush1.bf16.msra.mxu0 %v2591
        %2755 = vmatprep.subr.bf16.mxu0 0
        %2756 = vmatpush1.bf16.msra.mxu0 %v2592
        %2757 = vmatprep.subr.bf16.mxu0 0
        %2758 = vmatpush1.bf16.msra.mxu0 %v2593
        %2759 = vmatprep.subr.bf16.mxu0 0
        %2760 = vmatpush1.bf16.msra.mxu0 %v2594
        %2761 = vmatprep.subr.bf16.mxu0 0
        %2762 = vmatpush1.bf16.msra.mxu0 %v2595
        %2763 = vmatprep.subr.bf16.mxu0 0
        %2764 = vmatpush1.bf16.msra.mxu0 %v2596
        %2765 = vmatprep.subr.bf16.mxu0 0
        %2766 = vmatpush1.bf16.msra.mxu0 %v2597
        %2767 = vmatprep.subr.bf16.mxu0 0
        %2768 = vmatpush1.bf16.msra.mxu0 %v2598
        %2769 = vmatprep.subr.bf16.mxu0 0
        %2770 = vmatpush1.bf16.msra.mxu0 %v2599
        %2771 = vmatprep.subr.bf16.mxu0 0
        %2772 = vmatpush1.bf16.msra.mxu0 %v2600
        %2773 = vmatprep.subr.bf16.mxu0 0
        %2774 = vmatpush1.bf16.msra.mxu0 %v2601
        %2775 = vmatprep.subr.bf16.mxu0 0
        %2776 = vmatpush1.bf16.msra.mxu0 %v2602
        %2777 = vmatprep.subr.bf16.mxu0 0
        %2778 = vmatpush1.bf16.msra.mxu0 %v2603
        %2779 = vmatprep.mubr.bf16.mxu0 %v2237
        %2780 = vmatmul.mubr.bf16.gmra.mrb[0].mxu0 %v2236
        %v2781 = vpop.f32.mrb[0].mxu0
        %v2782 = vadd.f32 %v2742, %v2781
        %v2783 = vpop.f32.mrb[0].mxu0
        %v2784 = vpop.f32.mrb[0].mxu0
        %v2785 = vpop.f32.mrb[0].mxu0
        %2786 = vdwg.mxu0
        %2787 = vmatprep.subr.bf16.mxu0 0
        %2788 = vmatpush1.bf16.msra.mxu0 %v2604
        %2789 = vmatprep.subr.bf16.mxu0 0
        %2790 = vmatpush1.bf16.msra.mxu0 %v2605
        %2791 = vmatprep.subr.bf16.mxu0 0
        %2792 = vmatpush1.bf16.msra.mxu0 %v2606
        %2793 = vmatprep.subr.bf16.mxu0 0
        %2794 = vmatpush1.bf16.msra.mxu0 %v2607
        %2795 = vmatprep.subr.bf16.mxu0 0
        %2796 = vmatpush1.bf16.msra.mxu0 %v2665
        %2797 = vmatprep.subr.bf16.mxu0 0
        %2798 = vmatpush1.bf16.msra.mxu0 0
        %2799 = vmatprep.subr.bf16.mxu0 0
        %2800 = vmatpush1.bf16.msra.mxu0 0
        %2801 = vmatprep.subr.bf16.mxu0 0
        %2802 = vmatpush1.bf16.msra.mxu0 0
        %2803 = vmatprep.subr.bf16.mxu0 0
        %2804 = vmatpush1.bf16.msra.mxu0 0
        %2805 = vmatprep.subr.bf16.mxu0 0
        %2806 = vmatpush1.bf16.msra.mxu0 0
        %2807 = vmatprep.subr.bf16.mxu0 0
        %2808 = vmatpush1.bf16.msra.mxu0 0
        %2809 = vmatprep.subr.bf16.mxu0 0
        %2810 = vmatpush1.bf16.msra.mxu0 0
        %2811 = vmatprep.subr.bf16.mxu0 0
        %2812 = vmatpush1.bf16.msra.mxu0 0
        %2813 = vmatprep.subr.bf16.mxu0 0
        %2814 = vmatpush1.bf16.msra.mxu0 0
        %2815 = vmatprep.subr.bf16.mxu0 0
        %2816 = vmatpush1.bf16.msra.mxu0 0
        %2817 = vmatprep.subr.bf16.mxu0 0
        %2818 = vmatpush1.bf16.msra.mxu0 0
        %2819 = vmatprep.mubr.bf16.mxu0 0
        %2820 = vmatmul.mubr.bf16.gmra.mrb[0].mxu0 %v2662
        %v2821 = vpop.f32.mrb[0].mxu0
        %v2822 = vadd.f32 %v2782, %v2821
        %v2823 = vpop.f32.mrb[0].mxu0
        %v2824 = vpop.f32.mrb[0].mxu0
        %v2825 = vpop.f32.mrb[0].mxu0
        %2826 = vdwg.mxu0
        %v2827 = vadd.f32 %v2239, %v2822
        %2828 = vst [vmem:[#allocation2] sm:$0x3] %v2827
        %s2829 = sadd.s32 %s386, 3
        %s2830 = sld [smem:[#allocation8 + %s2829]]
        %v2831 = vstv %s2830
        %s2832 = smul.u32 %s2829, 128
        %s2833 = sld [smem:[#allocation7 + %s2832]]
        %v2834 = vstv %s2833
        %v2835 = vmul.f32 %v384, %v2834
        %v2836 = vmul.f32 %v385, %v2834
        %v2837 = vadd.f32 %v2831, %v2835
        %v2838 = vadd.f32 %v2831, %v2836
        %s2839 = sadd.s32 %s2832, 1
        %s2840 = sld [smem:[#allocation7 + %s2839]]
        %v2841 = vstv %s2840
        %v2842 = vmul.f32 %v384, %v2841
        %v2843 = vmul.f32 %v385, %v2841
        %2846 = vrot.lane.b32.xlu0 %v2842, 127
        %v2847 = vpop.permute.xlu0 %2846
        %2848 = vrot.lane.b32.xlu0 %v2843, 127
        %v2849 = vpop.permute.xlu0 %2848
        %v2850 = vrot.slane %v2847, 2
        %v2851 = vrot.slane %v2849, 2
        %v2852 = vsel %vm409, %v2850, %v2851
        %v2853 = vsel %vm411, %v2847, %v2852
        %v2854 = vsel %vm411, %v2849, %v2851
        %v2857 = vadd.f32 %v2837, %v2853
        %v2858 = vadd.f32 %v2838, %v2854
        %s2859 = sadd.s32 %s2832, 2
        %s2860 = sld [smem:[#allocation7 + %s2859]]
        %v2861 = vstv %s2860
        %v2862 = vmul.f32 %v384, %v2861
        %v2863 = vmul.f32 %v385, %v2861
        %2866 = vrot.lane.b32.xlu0 %v2862, 126
        %v2867 = vpop.permute.xlu0 %2866
        %2868 = vrot.lane.b32.xlu0 %v2863, 126
        %v2869 = vpop.permute.xlu0 %2868
        %v2870 = vrot.slane %v2867, 2
        %v2871 = vrot.slane %v2869, 2
        %v2872 = vsel %vm409, %v2870, %v2871
        %v2873 = vsel %vm432, %v2867, %v2872
        %v2874 = vsel %vm432, %v2869, %v2871
        %v2877 = vadd.f32 %v2857, %v2873
        %v2878 = vadd.f32 %v2858, %v2874
        %s2879 = sadd.s32 %s2832, 3
        %s2880 = sld [smem:[#allocation7 + %s2879]]
        %v2881 = vstv %s2880
        %v2882 = vmul.f32 %v384, %v2881
        %v2883 = vmul.f32 %v385, %v2881
        %2886 = vrot.lane.b32.xlu0 %v2882, 98
        %v2887 = vpop.permute.xlu0 %2886
        %2888 = vrot.lane.b32.xlu0 %v2883, 98
        %v2889 = vpop.permute.xlu0 %2888
        %v2890 = vrot.slane %v2887, 2
        %v2891 = vrot.slane %v2889, 2
        %v2892 = vsel %vm409, %v2890, %v2891
        %v2893 = vsel %vm453, %v2887, %v2892
        %v2894 = vsel %vm453, %v2889, %v2891
        %v2897 = vadd.f32 %v2877, %v2893
        %v2898 = vadd.f32 %v2878, %v2894
        %s2899 = sadd.s32 %s2832, 4
        %s2900 = sld [smem:[#allocation7 + %s2899]]
        %v2901 = vstv %s2900
        %v2902 = vmul.f32 %v384, %v2901
        %v2903 = vmul.f32 %v385, %v2901
        %2906 = vrot.lane.b32.xlu0 %v2902, 97
        %v2907 = vpop.permute.xlu0 %2906
        %2908 = vrot.lane.b32.xlu0 %v2903, 97
        %v2909 = vpop.permute.xlu0 %2908
        %v2910 = vrot.slane %v2907, 2
        %v2911 = vrot.slane %v2909, 2
        %v2912 = vsel %vm409, %v2910, %v2911
        %v2913 = vsel %vm474, %v2907, %v2912
        %v2914 = vsel %vm474, %v2909, %v2911
        %v2917 = vadd.f32 %v2897, %v2913
        %v2918 = vadd.f32 %v2898, %v2914
        %s2919 = sadd.s32 %s2832, 5
        %s2920 = sld [smem:[#allocation7 + %s2919]]
        %v2921 = vstv %s2920
        %v2922 = vmul.f32 %v384, %v2921
        %v2923 = vmul.f32 %v385, %v2921
        %2926 = vrot.lane.b32.xlu0 %v2922, 96
        %v2927 = vpop.permute.xlu0 %2926
        %2928 = vrot.lane.b32.xlu0 %v2923, 96
        %v2929 = vpop.permute.xlu0 %2928
        %v2930 = vrot.slane %v2927, 2
        %v2931 = vrot.slane %v2929, 2
        %v2932 = vsel %vm409, %v2930, %v2931
        %v2933 = vsel %vm495, %v2927, %v2932
        %v2934 = vsel %vm495, %v2929, %v2931
        %v2937 = vadd.f32 %v2917, %v2933
        %v2938 = vadd.f32 %v2918, %v2934
        %s2939 = sadd.s32 %s2832, 6
        %s2940 = sld [smem:[#allocation7 + %s2939]]
        %v2941 = vstv %s2940
        %v2942 = vmul.f32 %v384, %v2941
        %v2943 = vmul.f32 %v385, %v2941
        %2946 = vrot.lane.b32.xlu0 %v2942, 68
        %v2947 = vpop.permute.xlu0 %2946
        %2948 = vrot.lane.b32.xlu0 %v2943, 68
        %v2949 = vpop.permute.xlu0 %2948
        %v2950 = vrot.slane %v2947, 2
        %v2951 = vrot.slane %v2949, 2
        %v2952 = vsel %vm409, %v2950, %v2951
        %v2953 = vsel %vm516, %v2947, %v2952
        %v2954 = vsel %vm516, %v2949, %v2951
        %v2957 = vadd.f32 %v2937, %v2953
        %v2958 = vadd.f32 %v2938, %v2954
        %s2959 = sadd.s32 %s2832, 7
        %s2960 = sld [smem:[#allocation7 + %s2959]]
        %v2961 = vstv %s2960
        %v2962 = vmul.f32 %v384, %v2961
        %v2963 = vmul.f32 %v385, %v2961
        %2966 = vrot.lane.b32.xlu0 %v2962, 67
        %v2967 = vpop.permute.xlu0 %2966
        %2968 = vrot.lane.b32.xlu0 %v2963, 67
        %v2969 = vpop.permute.xlu0 %2968
        %v2970 = vrot.slane %v2967, 2
        %v2971 = vrot.slane %v2969, 2
        %v2972 = vsel %vm409, %v2970, %v2971
        %v2973 = vsel %vm537, %v2967, %v2972
        %v2974 = vsel %vm537, %v2969, %v2971
        %v2977 = vadd.f32 %v2957, %v2973
        %v2978 = vadd.f32 %v2958, %v2974
        %s2979 = sadd.s32 %s2832, 8
        %s2980 = sld [smem:[#allocation7 + %s2979]]
        %v2981 = vstv %s2980
        %v2982 = vmul.f32 %v384, %v2981
        %v2983 = vmul.f32 %v385, %v2981
        %2986 = vrot.lane.b32.xlu0 %v2982, 66
        %v2987 = vpop.permute.xlu0 %2986
        %2988 = vrot.lane.b32.xlu0 %v2983, 66
        %v2989 = vpop.permute.xlu0 %2988
        %v2990 = vrot.slane %v2987, 2
        %v2991 = vrot.slane %v2989, 2
        %v2992 = vsel %vm409, %v2990, %v2991
        %v2993 = vsel %vm558, %v2987, %v2992
        %v2994 = vsel %vm558, %v2989, %v2991
        %v2997 = vadd.f32 %v2977, %v2993
        %v2998 = vadd.f32 %v2978, %v2994
        %v2999 = vmax.f32 %v2997, 0.0
        %v3000 = vmax.f32 %v2998, 0.0
        %v3003 = vcombine.high %v2999, %v2999
        %v3005 = vunpack.c.l.s4 1983009808
        %v3006 = vunpack.c.0.s8 %v3005
        %v3007 = vlaneseq
        %v3008 = vshrl.u32 %v3007, 7
        %v3009 = vsub.s32 %v3006, %v3008
        %v3010 = vrot.slane %v2999, %v3009
        %v3012 = vunpack.c.l.s4 1983009808
        %v3013 = vunpack.c.0.s8 %v3012
        %v3014 = vlaneseq
        %v3015 = vshrl.u32 %v3014, 7
        %v3016 = vsub.s32 %v3013, %v3015
        %v3017 = vrot.slane %v3003, %v3016
        %v3018 = vcombine.high %v3010, %v3010
        %v3019 = vcombine.high %v3017, %v3017
        %v3020 = vcombine.high %v3000, %v3000
        %v3022 = vunpack.c.l.s4 1983009808
        %v3023 = vunpack.c.0.s8 %v3022
        %v3024 = vlaneseq
        %v3025 = vshrl.u32 %v3024, 7
        %v3026 = vsub.s32 %v3023, %v3025
        %v3027 = vrot.slane %v3000, %v3026
        %v3029 = vunpack.c.l.s4 1983009808
        %v3030 = vunpack.c.0.s8 %v3029
        %v3031 = vlaneseq
        %v3032 = vshrl.u32 %v3031, 7
        %v3033 = vsub.s32 %v3030, %v3032
        %v3034 = vrot.slane %v3020, %v3033
        %v3035 = vcombine.high %v3027, %v3027
        %v3043 = vpack.c.bf16 %v3010, %v3010
        %v3044 = vpack.c.bf16 %v3018, %v3018
        %v3045 = vpack.c.bf16 %v3017, %v3017
        %v3046 = vpack.c.bf16 %v3019, %v3019
        %v3047 = vpack.c.bf16 %v3027, %v3027
        %v3048 = vpack.c.bf16 %v3035, %v3035
        %v3049 = vpack.c.bf16 %v3034, %v3034
        %v3050 = vld [vmem:[#allocation2] sm:$0x3]
        %s3051 = scalar_lea.vmem %s324, 1260 [#allocation10]
        %v3052 = vld [vmem:[%s3051] sm:$0xf]
        %v3053 = vld [vmem:[%s3051 + $0x4] sm:$0xf]
        %v3054 = vld [vmem:[%s3051 + $0x8] sm:$0xf]
        %v3055 = vld [vmem:[%s3051 + $0xc] sm:$0xf]
        %v3056 = vld [vmem:[%s3051 + $0x10] sm:$0xf]
        %v3057 = vld [vmem:[%s3051 + $0x14] sm:$0xf]
        %v3058 = vld [vmem:[%s3051 + $0x18] sm:$0xf]
        %v3059 = vld [vmem:[%s3051 + $0x1c] sm:$0xf]
        %v3060 = vld [vmem:[%s3051 + $0x20] sm:$0xf]
        %v3061 = vld [vmem:[%s3051 + $0x24] sm:$0xf]
        %v3062 = vld [vmem:[%s3051 + $0x28] sm:$0xf]
        %v3063 = vld [vmem:[%s3051 + $0x2c] sm:$0xf]
        %v3064 = vld [vmem:[%s3051 + $0x30] sm:$0xf]
        %v3065 = vld [vmem:[%s3051 + $0x34] sm:$0xf]
        %v3066 = vld [vmem:[%s3051 + $0x38] sm:$0xf]
        %v3067 = vld [vmem:[%s3051 + $0x3c] sm:$0xf]
        %v3068 = vld [vmem:[%s3051 + $0x40] sm:$0xf]
        %v3069 = vld [vmem:[%s3051 + $0x44] sm:$0xf]
        %v3070 = vld [vmem:[%s3051 + $0x48] sm:$0xf]
        %v3071 = vld [vmem:[%s3051 + $0x4c] sm:$0xf]
        %v3072 = vld [vmem:[%s3051 + $0x50] sm:$0xf]
        %v3073 = vld [vmem:[%s3051 + $0x54] sm:$0xf]
        %v3074 = vld [vmem:[%s3051 + $0x58] sm:$0xf]
        %v3075 = vld [vmem:[%s3051 + $0x5c] sm:$0xf]
        %v3076 = vld [vmem:[%s3051 + $0x60] sm:$0xf]
        %v3077 = vld [vmem:[%s3051 + $0x64] sm:$0xf]
        %v3078 = vld [vmem:[%s3051 + $0x68] sm:$0xf]
        %v3079 = vld [vmem:[%s3051 + $0x6c] sm:$0xf]
        %v3080 = vld [vmem:[%s3051 + $0x70] sm:$0xf]
        %v3081 = vld [vmem:[%s3051 + $0x74] sm:$0xf]
        %v3082 = vld [vmem:[%s3051 + $0x78] sm:$0xf]
        %v3083 = vld [vmem:[%s3051 + $0x7c] sm:$0xf]
        %v3084 = vld [vmem:[%s3051 + $0x80] sm:$0xf]
        %v3085 = vld [vmem:[%s3051 + $0x84] sm:$0xf]
        %v3086 = vld [vmem:[%s3051 + $0x88] sm:$0xf]
        %v3087 = vld [vmem:[%s3051 + $0x8c] sm:$0xf]
        %v3088 = vld [vmem:[%s3051 + $0x90] sm:$0xf]
        %v3089 = vld [vmem:[%s3051 + $0x94] sm:$0xf]
        %v3090 = vld [vmem:[%s3051 + $0x98] sm:$0xf]
        %v3091 = vld [vmem:[%s3051 + $0x9c] sm:$0xf]
        %v3092 = vld [vmem:[%s3051 + $0xa0] sm:$0xf]
        %v3093 = vld [vmem:[%s3051 + $0xa4] sm:$0xf]
        %v3094 = vld [vmem:[%s3051 + $0xa8] sm:$0xf]
        %v3095 = vld [vmem:[%s3051 + $0xac] sm:$0xf]
        %v3096 = vld [vmem:[%s3051 + $0xb0] sm:$0xf]
        %v3097 = vld [vmem:[%s3051 + $0xb4] sm:$0xf]
        %v3098 = vld [vmem:[%s3051 + $0xb8] sm:$0xf]
        %v3099 = vld [vmem:[%s3051 + $0xbc] sm:$0xf]
        %v3100 = vld [vmem:[%s3051 + $0xc0] sm:$0xf]
        %v3101 = vld [vmem:[%s3051 + $0xc4] sm:$0xf]
        %v3102 = vld [vmem:[%s3051 + $0xc8] sm:$0xf]
        %v3103 = vld [vmem:[%s3051 + $0xcc] sm:$0xf]
        %v3104 = vld [vmem:[%s3051 + $0xd0] sm:$0xf]
        %v3105 = vld [vmem:[%s3051 + $0xd4] sm:$0xf]
        %v3106 = vld [vmem:[%s3051 + $0xd8] sm:$0xf]
        %v3107 = vld [vmem:[%s3051 + $0xdc] sm:$0xf]
        %v3108 = vld [vmem:[%s3051 + $0xe0] sm:$0xf]
        %v3109 = vld [vmem:[%s3051 + $0xe4] sm:$0xf]
        %v3110 = vld [vmem:[%s3051 + $0xe8] sm:$0xf]
        %v3111 = vld [vmem:[%s3051 + $0xec] sm:$0xf]
        %v3112 = vld [vmem:[%s3051 + $0xf0] sm:$0xf]
        %v3113 = vld [vmem:[%s3051 + $0xf4] sm:$0xf]
        %v3114 = vld [vmem:[%s3051 + $0xf8] sm:$0xf]
        %v3115 = vld [vmem:[%s3051 + $0xfc] sm:$0xf]
        %v3116 = vld [vmem:[%s3051 + $0x100] sm:$0xf]
        %v3117 = vld [vmem:[%s3051 + $0x104] sm:$0xf]
        %v3118 = vld [vmem:[%s3051 + $0x108] sm:$0xf]
        %v3119 = vld [vmem:[%s3051 + $0x10c] sm:$0xf]
        %v3120 = vld [vmem:[%s3051 + $0x110] sm:$0xf]
        %v3121 = vld [vmem:[%s3051 + $0x114] sm:$0xf]
        %v3122 = vld [vmem:[%s3051 + $0x118] sm:$0xf]
        %v3123 = vld [vmem:[%s3051 + $0x11c] sm:$0xf]
        %v3124 = vld [vmem:[%s3051 + $0x120] sm:$0xf]
        %v3125 = vld [vmem:[%s3051 + $0x124] sm:$0xf]
        %v3126 = vld [vmem:[%s3051 + $0x128] sm:$0xf]
        %v3127 = vld [vmem:[%s3051 + $0x12c] sm:$0xf]
        %v3128 = vld [vmem:[%s3051 + $0x130] sm:$0xf]
        %v3129 = vld [vmem:[%s3051 + $0x134] sm:$0xf]
        %v3130 = vld [vmem:[%s3051 + $0x138] sm:$0xf]
        %v3131 = vld [vmem:[%s3051 + $0x13c] sm:$0xf]
        %v3132 = vld [vmem:[%s3051 + $0x140] sm:$0xf]
        %v3133 = vld [vmem:[%s3051 + $0x144] sm:$0xf]
        %v3134 = vld [vmem:[%s3051 + $0x148] sm:$0xf]
        %v3135 = vld [vmem:[%s3051 + $0x14c] sm:$0xf]
        %v3136 = vld [vmem:[%s3051 + $0x150] sm:$0xf]
        %v3137 = vld [vmem:[%s3051 + $0x154] sm:$0xf]
        %v3138 = vld [vmem:[%s3051 + $0x158] sm:$0xf]
        %v3139 = vld [vmem:[%s3051 + $0x15c] sm:$0xf]
        %v3140 = vld [vmem:[%s3051 + $0x160] sm:$0xf]
        %v3141 = vld [vmem:[%s3051 + $0x164] sm:$0xf]
        %v3142 = vld [vmem:[%s3051 + $0x168] sm:$0xf]
        %v3143 = vld [vmem:[%s3051 + $0x16c] sm:$0xf]
        %v3144 = vld [vmem:[%s3051 + $0x170] sm:$0xf]
        %v3145 = vld [vmem:[%s3051 + $0x174] sm:$0xf]
        %v3146 = vld [vmem:[%s3051 + $0x178] sm:$0xf]
        %v3147 = vld [vmem:[%s3051 + $0x17c] sm:$0xf]
        %v3148 = vld [vmem:[%s3051 + $0x180] sm:$0xf]
        %v3149 = vld [vmem:[%s3051 + $0x184] sm:$0xf]
        %v3150 = vld [vmem:[%s3051 + $0x188] sm:$0xf]
        %v3151 = vld [vmem:[%s3051 + $0x18c] sm:$0xf]
        %v3152 = vld [vmem:[%s3051 + $0x190] sm:$0xf]
        %v3153 = vld [vmem:[%s3051 + $0x194] sm:$0xf]
        %v3154 = vld [vmem:[%s3051 + $0x198] sm:$0xf]
        %v3155 = vld [vmem:[%s3051 + $0x19c] sm:$0xf]
        %v3156 = vld [vmem:[%s3051 + $0x1a0] sm:$0xf]
        %v3262 = vunpack.c.l.b16 %v3052
        %v3263 = vunpack.c.l.b16 %v3053
        %v3264 = vunpack.c.l.b16 %v3054
        %v3265 = vunpack.c.l.b16 %v3055
        %v3266 = vunpack.c.l.b16 %v3056
        %v3267 = vunpack.c.l.b16 %v3057
        %v3268 = vunpack.c.l.b16 %v3058
        %v3269 = vunpack.c.l.b16 %v3059
        %v3270 = vunpack.c.l.b16 %v3060
        %v3271 = vunpack.c.l.b16 %v3061
        %v3272 = vunpack.c.l.b16 %v3062
        %v3273 = vunpack.c.l.b16 %v3063
        %v3274 = vunpack.c.l.b16 %v3064
        %v3275 = vunpack.c.l.b16 %v3065
        %v3276 = vunpack.c.l.b16 %v3066
        %v3277 = vunpack.c.l.b16 %v3067
        %v3278 = vunpack.c.l.b16 %v3068
        %v3279 = vunpack.c.l.b16 %v3069
        %v3280 = vunpack.c.l.b16 %v3070
        %v3281 = vunpack.c.l.b16 %v3071
        %v3282 = vunpack.c.l.b16 %v3072
        %v3283 = vunpack.c.l.b16 %v3073
        %v3284 = vunpack.c.l.b16 %v3074
        %v3285 = vunpack.c.l.b16 %v3075
        %v3286 = vunpack.c.l.b16 %v3076
        %v3287 = vunpack.c.l.b16 %v3077
        %v3288 = vunpack.c.l.b16 %v3078
        %v3289 = vunpack.c.l.b16 %v3079
        %v3290 = vunpack.c.l.b16 %v3080
        %v3291 = vunpack.c.l.b16 %v3081
        %v3292 = vunpack.c.l.b16 %v3082
        %v3293 = vunpack.c.l.b16 %v3083
        %v3294 = vunpack.c.l.b16 %v3084
        %v3295 = vunpack.c.l.b16 %v3085
        %v3296 = vunpack.c.l.b16 %v3086
        %v3297 = vunpack.c.l.b16 %v3087
        %v3298 = vunpack.c.l.b16 %v3088
        %v3299 = vunpack.c.l.b16 %v3089
        %v3300 = vunpack.c.l.b16 %v3090
        %v3301 = vunpack.c.l.b16 %v3091
        %v3302 = vunpack.c.l.b16 %v3092
        %v3303 = vunpack.c.l.b16 %v3093
        %v3304 = vunpack.c.l.b16 %v3094
        %v3305 = vunpack.c.l.b16 %v3095
        %v3306 = vunpack.c.l.b16 %v3096
        %v3307 = vunpack.c.l.b16 %v3097
        %v3308 = vunpack.c.l.b16 %v3098
        %v3309 = vunpack.c.l.b16 %v3099
        %v3310 = vunpack.c.l.b16 %v3100
        %v3311 = vunpack.c.l.b16 %v3101
        %v3312 = vunpack.c.l.b16 %v3102
        %v3313 = vunpack.c.l.b16 %v3103
        %v3314 = vunpack.c.l.b16 %v3104
        %v3315 = vunpack.c.l.b16 %v3105
        %v3316 = vunpack.c.l.b16 %v3106
        %v3317 = vunpack.c.l.b16 %v3107
        %v3318 = vunpack.c.l.b16 %v3108
        %v3319 = vunpack.c.l.b16 %v3109
        %v3320 = vunpack.c.l.b16 %v3110
        %v3321 = vunpack.c.l.b16 %v3111
        %v3322 = vunpack.c.l.b16 %v3112
        %v3323 = vunpack.c.l.b16 %v3113
        %v3324 = vunpack.c.l.b16 %v3114
        %v3325 = vunpack.c.l.b16 %v3115
        %v3326 = vunpack.c.l.b16 %v3116
        %v3327 = vunpack.c.l.b16 %v3117
        %v3328 = vunpack.c.l.b16 %v3118
        %v3329 = vunpack.c.l.b16 %v3119
        %v3330 = vunpack.c.l.b16 %v3120
        %v3331 = vunpack.c.l.b16 %v3121
        %v3332 = vunpack.c.l.b16 %v3122
        %v3333 = vunpack.c.l.b16 %v3123
        %v3334 = vunpack.c.l.b16 %v3124
        %v3335 = vunpack.c.l.b16 %v3125
        %v3336 = vunpack.c.l.b16 %v3126
        %v3337 = vunpack.c.l.b16 %v3127
        %v3338 = vunpack.c.l.b16 %v3128
        %v3339 = vunpack.c.l.b16 %v3129
        %v3340 = vunpack.c.l.b16 %v3130
        %v3341 = vunpack.c.l.b16 %v3131
        %v3342 = vunpack.c.l.b16 %v3132
        %v3343 = vunpack.c.l.b16 %v3133
        %v3344 = vunpack.c.l.b16 %v3134
        %v3345 = vunpack.c.l.b16 %v3135
        %v3346 = vunpack.c.l.b16 %v3136
        %v3347 = vunpack.c.l.b16 %v3137
        %v3348 = vunpack.c.l.b16 %v3138
        %v3349 = vunpack.c.l.b16 %v3139
        %v3350 = vunpack.c.l.b16 %v3140
        %v3351 = vunpack.c.l.b16 %v3141
        %v3352 = vunpack.c.l.b16 %v3142
        %v3353 = vunpack.c.l.b16 %v3143
        %v3354 = vunpack.c.l.b16 %v3144
        %v3355 = vunpack.c.l.b16 %v3145
        %v3356 = vunpack.c.l.b16 %v3146
        %v3357 = vunpack.c.l.b16 %v3147
        %v3358 = vunpack.c.l.b16 %v3148
        %v3359 = vunpack.c.l.b16 %v3149
        %v3360 = vunpack.c.l.b16 %v3150
        %v3361 = vunpack.c.l.b16 %v3151
        %v3362 = vunpack.c.l.b16 %v3152
        %v3363 = vunpack.c.l.b16 %v3153
        %v3364 = vunpack.c.l.b16 %v3154
        %v3365 = vunpack.c.l.b16 %v3155
        %v3366 = vunpack.c.l.b16 %v3156
        %v3367 = vpack.c.b16 %v3263, %v3262
        %v3368 = vpack.c.b16 %v3265, %v3264
        %v3369 = vpack.c.b16 %v3267, %v3266
        %v3370 = vpack.c.b16 %v3269, %v3268
        %v3371 = vpack.c.b16 %v3271, %v3270
        %v3372 = vpack.c.b16 %v3273, %v3272
        %v3373 = vpack.c.b16 %v3275, %v3274
        %v3374 = vpack.c.b16 %v3277, %v3276
        %v3375 = vpack.c.b16 %v3279, %v3278
        %v3376 = vpack.c.b16 %v3281, %v3280
        %v3377 = vpack.c.b16 %v3283, %v3282
        %v3378 = vpack.c.b16 %v3285, %v3284
        %v3379 = vpack.c.b16 %v3287, %v3286
        %v3380 = vpack.c.b16 %v3289, %v3288
        %v3381 = vpack.c.b16 %v3291, %v3290
        %v3382 = vpack.c.b16 %v3293, %v3292
        %v3383 = vpack.c.b16 %v3295, %v3294
        %v3384 = vpack.c.b16 %v3297, %v3296
        %v3385 = vpack.c.b16 %v3299, %v3298
        %v3386 = vpack.c.b16 %v3301, %v3300
        %v3387 = vpack.c.b16 %v3303, %v3302
        %v3388 = vpack.c.b16 %v3305, %v3304
        %v3389 = vpack.c.b16 %v3307, %v3306
        %v3390 = vpack.c.b16 %v3309, %v3308
        %v3391 = vpack.c.b16 %v3311, %v3310
        %v3392 = vpack.c.b16 %v3313, %v3312
        %v3393 = vpack.c.b16 %v3315, %v3314
        %v3394 = vpack.c.b16 %v3317, %v3316
        %v3395 = vpack.c.b16 %v3319, %v3318
        %v3396 = vpack.c.b16 %v3321, %v3320
        %v3397 = vpack.c.b16 %v3323, %v3322
        %v3398 = vpack.c.b16 %v3325, %v3324
        %v3399 = vpack.c.b16 %v3327, %v3326
        %v3400 = vpack.c.b16 %v3329, %v3328
        %v3401 = vpack.c.b16 %v3331, %v3330
        %v3402 = vpack.c.b16 %v3333, %v3332
        %v3403 = vpack.c.b16 %v3335, %v3334
        %v3404 = vpack.c.b16 %v3337, %v3336
        %v3405 = vpack.c.b16 %v3339, %v3338
        %v3406 = vpack.c.b16 %v3341, %v3340
        %v3407 = vpack.c.b16 %v3343, %v3342
        %v3408 = vpack.c.b16 %v3345, %v3344
        %v3409 = vpack.c.b16 %v3347, %v3346
        %v3410 = vpack.c.b16 %v3349, %v3348
        %v3411 = vpack.c.b16 %v3351, %v3350
        %v3412 = vpack.c.b16 %v3353, %v3352
        %v3413 = vpack.c.b16 %v3355, %v3354
        %v3414 = vpack.c.b16 %v3357, %v3356
        %v3415 = vpack.c.b16 %v3359, %v3358
        %v3416 = vpack.c.b16 %v3361, %v3360
        %v3417 = vpack.c.b16 %v3363, %v3362
        %v3418 = vpack.c.b16 %v3365, %v3364
        %v3419 = vpack.c.b16 %v3366, %v3366
        %v3473 = vsel %vm1037, %v3049, 0
        %v3476 = vsel %vm1041, %v3419, 0
        %3478 = vmatprep.subr.bf16.mxu0 0
        %3479 = vmatpush1.bf16.msra.mxu0 %v3367
        %3480 = vmatprep.subr.bf16.mxu0 0
        %3481 = vmatpush1.bf16.msra.mxu0 %v3368
        %3482 = vmatprep.subr.bf16.mxu0 0
        %3483 = vmatpush1.bf16.msra.mxu0 %v3369
        %3484 = vmatprep.subr.bf16.mxu0 0
        %3485 = vmatpush1.bf16.msra.mxu0 %v3370
        %3486 = vmatprep.subr.bf16.mxu0 0
        %3487 = vmatpush1.bf16.msra.mxu0 %v3371
        %3488 = vmatprep.subr.bf16.mxu0 0
        %3489 = vmatpush1.bf16.msra.mxu0 %v3372
        %3490 = vmatprep.subr.bf16.mxu0 0
        %3491 = vmatpush1.bf16.msra.mxu0 %v3373
        %3492 = vmatprep.subr.bf16.mxu0 0
        %3493 = vmatpush1.bf16.msra.mxu0 %v3374
        %3494 = vmatprep.subr.bf16.mxu0 0
        %3495 = vmatpush1.bf16.msra.mxu0 %v3375
        %3496 = vmatprep.subr.bf16.mxu0 0
        %3497 = vmatpush1.bf16.msra.mxu0 %v3376
        %3498 = vmatprep.subr.bf16.mxu0 0
        %3499 = vmatpush1.bf16.msra.mxu0 %v3377
        %3500 = vmatprep.subr.bf16.mxu0 0
        %3501 = vmatpush1.bf16.msra.mxu0 %v3378
        %3502 = vmatprep.subr.bf16.mxu0 0
        %3503 = vmatpush1.bf16.msra.mxu0 %v3379
        %3504 = vmatprep.subr.bf16.mxu0 0
        %3505 = vmatpush1.bf16.msra.mxu0 %v3380
        %3506 = vmatprep.subr.bf16.mxu0 0
        %3507 = vmatpush1.bf16.msra.mxu0 %v3381
        %3508 = vmatprep.subr.bf16.mxu0 0
        %3509 = vmatpush1.bf16.msra.mxu0 %v3382
        %3510 = vmatprep.mubr.bf16.mxu0 %v3044
        %3511 = vmatmul.mubr.bf16.gmra.mrb[0].mxu0 %v3043
        %v3512 = vpop.f32.mrb[0].mxu0
        %v3513 = vadd.f32 0.0, %v3512
        %v3514 = vpop.f32.mrb[0].mxu0
        %v3515 = vpop.f32.mrb[0].mxu0
        %v3516 = vpop.f32.mrb[0].mxu0
        %3517 = vdwg.mxu0
        %3518 = vmatprep.subr.bf16.mxu0 0
        %3519 = vmatpush1.bf16.msra.mxu0 %v3383
        %3520 = vmatprep.subr.bf16.mxu0 0
        %3521 = vmatpush1.bf16.msra.mxu0 %v3384
        %3522 = vmatprep.subr.bf16.mxu0 0
        %3523 = vmatpush1.bf16.msra.mxu0 %v3385
        %3524 = vmatprep.subr.bf16.mxu0 0
        %3525 = vmatpush1.bf16.msra.mxu0 %v3386
        %3526 = vmatprep.subr.bf16.mxu0 0
        %3527 = vmatpush1.bf16.msra.mxu0 %v3387
        %3528 = vmatprep.subr.bf16.mxu0 0
        %3529 = vmatpush1.bf16.msra.mxu0 %v3388
        %3530 = vmatprep.subr.bf16.mxu0 0
        %3531 = vmatpush1.bf16.msra.mxu0 %v3389
        %3532 = vmatprep.subr.bf16.mxu0 0
        %3533 = vmatpush1.bf16.msra.mxu0 %v3390
        %3534 = vmatprep.subr.bf16.mxu0 0
        %3535 = vmatpush1.bf16.msra.mxu0 %v3391
        %3536 = vmatprep.subr.bf16.mxu0 0
        %3537 = vmatpush1.bf16.msra.mxu0 %v3392
        %3538 = vmatprep.subr.bf16.mxu0 0
        %3539 = vmatpush1.bf16.msra.mxu0 %v3393
        %3540 = vmatprep.subr.bf16.mxu0 0
        %3541 = vmatpush1.bf16.msra.mxu0 %v3394
        %3542 = vmatprep.subr.bf16.mxu0 0
        %3543 = vmatpush1.bf16.msra.mxu0 %v3395
        %3544 = vmatprep.subr.bf16.mxu0 0
        %3545 = vmatpush1.bf16.msra.mxu0 %v3396
        %3546 = vmatprep.subr.bf16.mxu0 0
        %3547 = vmatpush1.bf16.msra.mxu0 %v3397
        %3548 = vmatprep.subr.bf16.mxu0 0
        %3549 = vmatpush1.bf16.msra.mxu0 %v3398
        %3550 = vmatprep.mubr.bf16.mxu0 %v3046
        %3551 = vmatmul.mubr.bf16.gmra.mrb[0].mxu0 %v3045
        %v3552 = vpop.f32.mrb[0].mxu0
        %v3553 = vadd.f32 %v3513, %v3552
        %v3554 = vpop.f32.mrb[0].mxu0
        %v3555 = vpop.f32.mrb[0].mxu0
        %v3556 = vpop.f32.mrb[0].mxu0
        %3557 = vdwg.mxu0
        %3558 = vmatprep.subr.bf16.mxu0 0
        %3559 = vmatpush1.bf16.msra.mxu0 %v3399
        %3560 = vmatprep.subr.bf16.mxu0 0
        %3561 = vmatpush1.bf16.msra.mxu0 %v3400
        %3562 = vmatprep.subr.bf16.mxu0 0
        %3563 = vmatpush1.bf16.msra.mxu0 %v3401
        %3564 = vmatprep.subr.bf16.mxu0 0
        %3565 = vmatpush1.bf16.msra.mxu0 %v3402
        %3566 = vmatprep.subr.bf16.mxu0 0
        %3567 = vmatpush1.bf16.msra.mxu0 %v3403
        %3568 = vmatprep.subr.bf16.mxu0 0
        %3569 = vmatpush1.bf16.msra.mxu0 %v3404
        %3570 = vmatprep.subr.bf16.mxu0 0
        %3571 = vmatpush1.bf16.msra.mxu0 %v3405
        %3572 = vmatprep.subr.bf16.mxu0 0
        %3573 = vmatpush1.bf16.msra.mxu0 %v3406
        %3574 = vmatprep.subr.bf16.mxu0 0
        %3575 = vmatpush1.bf16.msra.mxu0 %v3407
        %3576 = vmatprep.subr.bf16.mxu0 0
        %3577 = vmatpush1.bf16.msra.mxu0 %v3408
        %3578 = vmatprep.subr.bf16.mxu0 0
        %3579 = vmatpush1.bf16.msra.mxu0 %v3409
        %3580 = vmatprep.subr.bf16.mxu0 0
        %3581 = vmatpush1.bf16.msra.mxu0 %v3410
        %3582 = vmatprep.subr.bf16.mxu0 0
        %3583 = vmatpush1.bf16.msra.mxu0 %v3411
        %3584 = vmatprep.subr.bf16.mxu0 0
        %3585 = vmatpush1.bf16.msra.mxu0 %v3412
        %3586 = vmatprep.subr.bf16.mxu0 0
        %3587 = vmatpush1.bf16.msra.mxu0 %v3413
        %3588 = vmatprep.subr.bf16.mxu0 0
        %3589 = vmatpush1.bf16.msra.mxu0 %v3414
        %3590 = vmatprep.mubr.bf16.mxu0 %v3048
        %3591 = vmatmul.mubr.bf16.gmra.mrb[0].mxu0 %v3047
        %v3592 = vpop.f32.mrb[0].mxu0
        %v3593 = vadd.f32 %v3553, %v3592
        %v3594 = vpop.f32.mrb[0].mxu0
        %v3595 = vpop.f32.mrb[0].mxu0
        %v3596 = vpop.f32.mrb[0].mxu0
        %3597 = vdwg.mxu0
        %3598 = vmatprep.subr.bf16.mxu0 0
        %3599 = vmatpush1.bf16.msra.mxu0 %v3415
        %3600 = vmatprep.subr.bf16.mxu0 0
        %3601 = vmatpush1.bf16.msra.mxu0 %v3416
        %3602 = vmatprep.subr.bf16.mxu0 0
        %3603 = vmatpush1.bf16.msra.mxu0 %v3417
        %3604 = vmatprep.subr.bf16.mxu0 0
        %3605 = vmatpush1.bf16.msra.mxu0 %v3418
        %3606 = vmatprep.subr.bf16.mxu0 0
        %3607 = vmatpush1.bf16.msra.mxu0 %v3476
        %3608 = vmatprep.subr.bf16.mxu0 0
        %3609 = vmatpush1.bf16.msra.mxu0 0
        %3610 = vmatprep.subr.bf16.mxu0 0
        %3611 = vmatpush1.bf16.msra.mxu0 0
        %3612 = vmatprep.subr.bf16.mxu0 0
        %3613 = vmatpush1.bf16.msra.mxu0 0
        %3614 = vmatprep.subr.bf16.mxu0 0
        %3615 = vmatpush1.bf16.msra.mxu0 0
        %3616 = vmatprep.subr.bf16.mxu0 0
        %3617 = vmatpush1.bf16.msra.mxu0 0
        %3618 = vmatprep.subr.bf16.mxu0 0
        %3619 = vmatpush1.bf16.msra.mxu0 0
        %3620 = vmatprep.subr.bf16.mxu0 0
        %3621 = vmatpush1.bf16.msra.mxu0 0
        %3622 = vmatprep.subr.bf16.mxu0 0
        %3623 = vmatpush1.bf16.msra.mxu0 0
        %3624 = vmatprep.subr.bf16.mxu0 0
        %3625 = vmatpush1.bf16.msra.mxu0 0
        %3626 = vmatprep.subr.bf16.mxu0 0
        %3627 = vmatpush1.bf16.msra.mxu0 0
        %3628 = vmatprep.subr.bf16.mxu0 0
        %3629 = vmatpush1.bf16.msra.mxu0 0
        %3630 = vmatprep.mubr.bf16.mxu0 0
        %3631 = vmatmul.mubr.bf16.gmra.mrb[0].mxu0 %v3473
        %v3632 = vpop.f32.mrb[0].mxu0
        %v3633 = vadd.f32 %v3593, %v3632
        %v3634 = vpop.f32.mrb[0].mxu0
        %v3635 = vpop.f32.mrb[0].mxu0
        %v3636 = vpop.f32.mrb[0].mxu0
        %3637 = vdwg.mxu0
        %v3638 = vadd.f32 %v3050, %v3633
        %3639 = vst [vmem:[#allocation2] sm:$0x3] %v3638
        %p3640 = scmp.eq.s32.totalorder %s31, 3
        // Predicated region
        $region69: #{tpu_custom_call.1} parent=43 // pred_check
          %p3641 = pneg %p3640
        $region70: #{tpu_custom_call.1} parent=43 // pred_check_branch
          %3643 = sbr.rel (%p3641) target = $region72
        $region71: #{tpu_custom_call.1} parent=43 // pred_region
          %v3644 = vld [vmem:[#allocation2] sm:$0x3]
          %v3645 = vld [vmem:[%s332] sm:$0x1]
          %v3647 = vlaneseq
          %v3648 = vshrl.u32 %v3647, 7
          %v3649 = vsub.s32 0, %v3648
          %v3650 = vrot.slane %v3645, %v3649
          %v3652 = vadd.f32 %v3644, %v3650
          %v3653 = vmax.f32 %v3652, 0.0
          %v3654 = vld [vmem:[%s376] sm:$0xff]
          %v3655 = vld [vmem:[%s376 + $0x8] sm:$0xff]
          %v3656 = vld [vmem:[%s376 + $0x10] sm:$0xff]
          %v3657 = vld [vmem:[%s376 + $0x18] sm:$0xff]
          %v3658 = vld [vmem:[%s376 + $0x20] sm:$0xff]
          %v3659 = vld [vmem:[%s376 + $0x28] sm:$0xff]
          %v3660 = vld [vmem:[%s376 + $0x30] sm:$0xff]
          %v3661 = vld [vmem:[%s376 + $0x38] sm:$0xff]
          %v3662 = vld [vmem:[%s376 + $0x40] sm:$0xff]
          %v3663 = vld [vmem:[%s376 + $0x48] sm:$0xff]
          %v3664 = vld [vmem:[%s376 + $0x50] sm:$0xff]
          %v3665 = vld [vmem:[%s376 + $0x58] sm:$0xff]
          %v3666 = vld [vmem:[%s376 + $0x60] sm:$0xff]
          %v3667 = vld [vmem:[%s376 + $0x68] sm:$0xff]
          %v3668 = vld [vmem:[%s376 + $0x70] sm:$0xff]
          %v3669 = vld [vmem:[%s376 + $0x78] sm:$0xff]
          %3670 = vmatprep.subr.mxu0 0.0
          %3671 = vmatpush1.msra.mxu0 %v3654
          %3672 = vmatprep.subr.mxu0 0.0
          %3673 = vmatpush1.msra.mxu0 %v3655
          %3674 = vmatprep.subr.mxu0 0.0
          %3675 = vmatpush1.msra.mxu0 %v3656
          %3676 = vmatprep.subr.mxu0 0.0
          %3677 = vmatpush1.msra.mxu0 %v3657
          %3678 = vmatprep.subr.mxu0 0.0
          %3679 = vmatpush1.msra.mxu0 %v3658
          %3680 = vmatprep.subr.mxu0 0.0
          %3681 = vmatpush1.msra.mxu0 %v3659
          %3682 = vmatprep.subr.mxu0 0.0
          %3683 = vmatpush1.msra.mxu0 %v3660
          %3684 = vmatprep.subr.mxu0 0.0
          %3685 = vmatpush1.msra.mxu0 %v3661
          %3686 = vmatprep.subr.mxu0 0.0
          %3687 = vmatpush1.msra.mxu0 %v3662
          %3688 = vmatprep.subr.mxu0 0.0
          %3689 = vmatpush1.msra.mxu0 %v3663
          %3690 = vmatprep.subr.mxu0 0.0
          %3691 = vmatpush1.msra.mxu0 %v3664
          %3692 = vmatprep.subr.mxu0 0.0
          %3693 = vmatpush1.msra.mxu0 %v3665
          %3694 = vmatprep.subr.mxu0 0.0
          %3695 = vmatpush1.msra.mxu0 %v3666
          %3696 = vmatprep.subr.mxu0 0.0
          %3697 = vmatpush1.msra.mxu0 %v3667
          %3698 = vmatprep.subr.mxu0 0.0
          %3699 = vmatpush1.msra.mxu0 %v3668
          %3700 = vmatprep.subr.mxu0 0.0
          %3701 = vmatpush1.msra.mxu0 %v3669
          %3702 = vmatprep.subr.mxu0 0.0
          %3703 = vmatpush1.msra.mxu0 0.0
          %3704 = vmatprep.subr.mxu0 0.0
          %3705 = vmatpush1.msra.mxu0 0.0
          %3706 = vmatprep.subr.mxu0 0.0
          %3707 = vmatpush1.msra.mxu0 0.0
          %3708 = vmatprep.subr.mxu0 0.0
          %3709 = vmatpush1.msra.mxu0 0.0
          %3710 = vmatprep.subr.mxu0 0.0
          %3711 = vmatpush1.msra.mxu0 0.0
          %3712 = vmatprep.subr.mxu0 0.0
          %3713 = vmatpush1.msra.mxu0 0.0
          %3714 = vmatprep.subr.mxu0 0.0
          %3715 = vmatpush1.msra.mxu0 0.0
          %3716 = vmatprep.subr.mxu0 0.0
          %3717 = vmatpush1.msra.mxu0 0.0
          %3718 = vmatprep.subr.mxu0 0.0
          %3719 = vmatpush1.msra.mxu0 0.0
          %3720 = vmatprep.subr.mxu0 0.0
          %3721 = vmatpush1.msra.mxu0 0.0
          %3722 = vmatprep.subr.mxu0 0.0
          %3723 = vmatpush1.msra.mxu0 0.0
          %3724 = vmatprep.subr.mxu0 0.0
          %3725 = vmatpush1.msra.mxu0 0.0
          %3726 = vmatprep.subr.mxu0 0.0
          %3727 = vmatpush1.msra.mxu0 0.0
          %3728 = vmatprep.subr.mxu0 0.0
          %3729 = vmatpush1.msra.mxu0 0.0
          %3730 = vmatprep.subr.mxu0 0.0
          %3731 = vmatpush1.msra.mxu0 0.0
          %3732 = vmatprep.subr.mxu0 0.0
          %3733 = vmatpush1.msra.mxu0 0.0
          %3734 = vmatprep.mubr.f32.mxu0 0.0
          %3735 = vmatmul.mubr.f32.gmra.mrb[0].mxu0 %v3653
          %v3736 = vpop.f32.mrb[0].mxu0
          %v3737 = vadd.f32 0.0, %v3736
          %v3738 = vpop.f32.mrb[0].mxu0
          %3739 = vdwg.mxu0
          %vm3740 = vcmask 74752
          %3741 = vst.msk [vmem:[%s370] sm:$0x3] %vm3740, %v3737
        $region72: #{tpu_custom_call.1} parent=43 // pred_fallthru
          _
        %s3742 = sand.u32 %s189, 1
        %s3743 = scalar_lea.sflag [#allocation5], %s3742
        %s3744 = sand.u32 %s189, 1
        %s3745 = smul.addr %s3744, 2
        %s3746 = scalar_lea.vmem [#allocation13], %s3745
        // Predicated region
        $region73: #{tpu_custom_call.1} parent=43 // pred_check
          %p3747 = pneg %p199
        $region74: #{tpu_custom_call.1} parent=43 // pred_check_branch
          %3749 = sbr.rel (%p3747) target = $region76
        $region75: #{tpu_custom_call.1} parent=43 // pred_region
          %s3751 = ssub.s32 32, 32
          %3752 = vsyncadd %s3743, %s3751
          %s3753 = smul.addr %s30, 32
          %s3754 = scalar_lea.hbm %s6, %s3753
          %s3756 = sshll.u32 %s3746, 4
          %s3757 = int_to_ptr.vmem [resolvable:$true] %s3756
          %3759 = dma.vmem_to_hbm [thread:$0]  %s3757, 32, %s3754, %s3743
        $region76: #{tpu_custom_call.1} parent=43 // pred_fallthru
          _
      $region44: #{tpu_custom_call.1} parent=5 // pred_fallthru
        _
      %p3760 = scmp.le.s32.totalorder 2, %s21
      // Predicated region
      $region77: #{tpu_custom_call.1} parent=5 // pred_check
        %p3761 = pneg %p3760
      $region78: #{tpu_custom_call.1} parent=5 // pred_check_branch
        %3763 = sbr.rel (%p3761) target = $region80
      $region79: #{tpu_custom_call.1} parent=5 // pred_region
        %s3764 = ssub.s32 %s21, 2
        // Predicated region
        $region81: #{tpu_custom_call.1} parent=79 // pred_check
          %p3765 = pneg %p205
        $region82: #{tpu_custom_call.1} parent=79 // pred_check_branch
          %3767 = sbr.rel (%p3765) target = $region84
        $region83: #{tpu_custom_call.1} parent=79 // pred_region
          %s3768 = sand.u32 %s190, 1
          %s3769 = scalar_lea.sflag [#allocation5], %s3768
          %s3770 = sand.u32 %s190, 1
          %s3771 = smul.addr %s3770, 2
          %s3772 = scalar_lea.vmem [#allocation13], %s3771
          %3773 = dma.done %s3769, 32
        $region84: #{tpu_custom_call.1} parent=79 // pred_fallthru
          _
      $region80: #{tpu_custom_call.1} parent=5 // pred_fallthru
        _
    $region6: #{tpu_custom_call.1} parent=1 // loop_footer
      %s25 = sadd.s32 1, %s21
    $region7: #{tpu_custom_call.1} parent=1 // loop_footer_branch
      %20 = sbr.rel target = $region3
    $region8: #{tpu_custom_call.1} parent=1 // loop_exit
      _
    %3774 = vsyncpa [#allocation4], 1
    %s3775 = scalar_lea.sflag [#allocation4], 1
    %3776 = vsyncpa %s3775, 1
    %3777 = vsyncpa [#allocation11], 1
    %s3778 = scalar_lea.sflag [#allocation11], 1
    %3779 = vsyncpa %s3778, 1
    %3780 = vsyncpa [#allocation5], 1
    %s3781 = scalar_lea.sflag [#allocation5], 1
    %3782 = vsyncpa %s3781, 1
    %3783 = vsyncpa [#allocation6], 1
    %s3784 = scalar_lea.sflag [#allocation6], 1
    %3785 = vsyncpa %s3784, 1
    %3786 = vsyncpa [#allocation9], 1

</llo_original>
